<compile_context>
chip_gen: v7x
topology: tpu7x:2x2x1
jax: 0.10.0
libtpu: 0.0.40
codegen_flags: <defaults>
</compile_context>

<pallas_src>
import functools

import jax
import jax.numpy as jnp
from jax.experimental import pallas as pl
from jax.experimental.pallas import tpu as pltpu


# ----------------------------------------------------------------------------
# In-kernel helper: fully unrolled LSTM recurrence (PyTorch gate order [i, f, g, o]).
# The x2 scaling of the g-gate columns is already folded into the weights/biases
# (prepare_params), so tanh(x_g) is recovered in-kernel as 2*sigmoid(z_g) - 1.
# ----------------------------------------------------------------------------
def _unrolled_lstm(xw_steps, w_hh, masks=None):
    """xw_steps: list (length T) of (B, 4H) pre-activations (x_t @ W_ih + b), g-cols pre-scaled x2.
    w_hh     : (H, 4H) recurrent weights, g-cols pre-scaled x2.
    masks    : optional list (length T) of (B, 1) bool; False => carry previous state (padding).
    Returns (list of h_t, final c)."""
    T = len(xw_steps)
    B = xw_steps[0].shape[0]
    H = w_hh.shape[0]

    # hoisted per-lane constants: act = sigmoid(z) * mul - sub  gives tanh on the g lanes
    lane = jax.lax.broadcasted_iota(jnp.int32, (1, 4 * H), 1)
    is_g = jnp.logical_and(lane >= 2 * H, lane < 3 * H)                    # (1, 4H) bool
    mul_vec = jnp.where(is_g, jnp.float32(2.0), jnp.float32(1.0))          # (1, 4H)
    sub_vec = jnp.where(is_g, jnp.float32(1.0), jnp.float32(0.0))          # (1, 4H)

    h = jnp.zeros((B, H), jnp.float32)
    c = jnp.zeros((B, H), jnp.float32)
    hs = []
    for t in range(T):  # static trip count -> fully unrolled
        z = jnp.dot(h, w_hh, preferred_element_type=jnp.float32) + xw_steps[t]   # (B, 4H)
        s = jax.nn.sigmoid(z)                       # one EUP pass over the full gate tile
        act = s * mul_vec - sub_vec                 # tanh on the g lanes, sigmoid elsewhere
        i_g = act[:, 0 * H:1 * H]
        f_g = act[:, 1 * H:2 * H]
        g_g = act[:, 2 * H:3 * H]
        o_g = act[:, 3 * H:4 * H]
        c_new = f_g * c + i_g * g_g
        h_new = o_g * jnp.tanh(c_new)
        if masks is not None:
            m = masks[t]                            # (B, 1) bool
            h = jnp.where(m, h_new, h)
            c = jnp.where(m, c_new, c)
        else:
            h, c = h_new, c_new
        hs.append(h)
    return hs, c


# ----------------------------------------------------------------------------
# Fused tagger kernel
# ----------------------------------------------------------------------------
def tagger_kernel(word_idx_ref, char_idx_ref, char_lens_ref,
                  char_proj_ref, char_w_hh_ref, char_b_ref,
                  word_proj_ref, word_w_ih_c_ref, word_w_hh_ref, word_b_ref,
                  lin_w_ref, lin_b_ref,
                  out_ref):
    """
    word_idx_ref  : (W, 1)        i32   word indices of the sentence
    char_idx_ref  : (Tc*W, 1)     i32   padded char indices, time-major flattened (row = t*W + w)
    char_lens_ref : (W, 1)        i32   valid #chars per word
    char_proj_ref : (n_char, 4Hc) f32   char_emb @ char_W_ih  (g-cols x2)
    char_w_hh_ref : (Hc, 4Hc)     f32   (g-cols x2)
    char_b_ref    : (1, 4Hc)      f32   (g-cols x2)
    word_proj_ref : (n_word, 4Hw) f32   word_emb @ word_W_ih[:word_dim]  (g-cols x2)
    word_w_ih_c_ref:(Hc, 4Hw)     f32   word_W_ih[word_dim:]  (g-cols x2)
    word_w_hh_ref : (Hw, 4Hw)     f32   (g-cols x2)
    word_b_ref    : (1, 4Hw)      f32   (g-cols x2)
    lin_w_ref     : (Hw, L)       f32   linear weights, zero-padded to L (multiple of 128) lanes
    lin_b_ref     : (1, L)        f32   linear bias, -1e30 on padded lanes
    out_ref       : (W, L)        f32   log-probabilities (lane-dense; wrapper slices to n_tag)
    """
    W = char_lens_ref.shape[0]
    TcW = char_idx_ref.shape[0]
    Tc = TcW // W
    n_char = char_proj_ref.shape[0]
    n_word = word_proj_ref.shape[0]
    HIGH = jax.lax.Precision.HIGHEST

    # --- hoist all ref loads out of the recurrences ---
    word_idx = word_idx_ref[...]            # (W, 1)
    char_idx_flat = char_idx_ref[...]       # (Tc*W, 1)
    char_lens = char_lens_ref[...]          # (W, 1)
    char_proj = char_proj_ref[...]
    char_w_hh = char_w_hh_ref[...]
    char_b = char_b_ref[...]
    word_proj = word_proj_ref[...]
    word_w_ih_c = word_w_ih_c_ref[...]
    word_w_hh = word_w_hh_ref[...]
    word_b = word_b_ref[...]
    lin_w = lin_w_ref[...]
    lin_b = lin_b_ref[...]

    # ---------------- char path ----------------
    # ONE batched one-hot gather+projection for all Tc timesteps of all W words.
    char_iota = jax.lax.broadcasted_iota(jnp.int32, (TcW, n_char), 1)      # (Tc*W, n_char)
    oh_c = (char_idx_flat == char_iota).astype(jnp.float32)                # (Tc*W, n_char)
    xw_flat = jnp.dot(oh_c, char_proj, precision=HIGH,
                      preferred_element_type=jnp.float32) + char_b         # (Tc*W, 4*Hc)
    xw_char = [xw_flat[t * W:(t + 1) * W, :] for t in range(Tc)]           # static slices, (W, 4*Hc)
    char_masks = [t < char_lens for t in range(Tc)]                        # (W, 1) bool
    _, char_feat = _unrolled_lstm(xw_char, char_w_hh, char_masks)          # (W, Hc) final cell state

    # ---------------- word path ----------------
    # concat(word_emb, char_feat) @ W_ih == one_hot @ (word_emb @ W_ih[:D]) + char_feat @ W_ih[D:]
    word_iota = jax.lax.broadcasted_iota(jnp.int32, (W, n_word), 1)        # (W, n_word)
    oh_w = (word_idx == word_iota).astype(jnp.float32)                     # (W, n_word)
    xw_word_all = (jnp.dot(oh_w, word_proj, precision=HIGH,
                           preferred_element_type=jnp.float32)
                   + jnp.dot(char_feat, word_w_ih_c,
                             preferred_element_type=jnp.float32)
                   + word_b)                                               # (W, 4*Hw)
    xw_word = [xw_word_all[t:t + 1, :] for t in range(W)]                  # each (1, 4*Hw), batch = 1
    h_list, _ = _unrolled_lstm(xw_word, word_w_hh, None)

    # hidden states stay in registers; no VMEM scratch round-trip
    hseq = jnp.concatenate(h_list, axis=0)                                 # (W, Hw)

    # ---------------- linear + log_softmax (lane-dense, padded lanes carry -1e30 bias) ------------
    z = jnp.dot(hseq, lin_w, preferred_element_type=jnp.float32) + lin_b   # (W, L)
    m = jnp.max(z, axis=-1, keepdims=True)
    lse = m + jnp.log(jnp.sum(jnp.exp(z - m), axis=-1, keepdims=True))
    out_ref[...] = z - lse


# ----------------------------------------------------------------------------
# Parameter prep (done ONCE, off the per-call critical path)
# ----------------------------------------------------------------------------
def _scale_g_cols(a, H):
    """Scale the g-gate columns [2H:3H) of a (..., 4H) gate-space array by 2."""
    lane = jnp.arange(a.shape[-1])
    is_g = jnp.logical_and(lane >= 2 * H, lane < 3 * H)
    return a * jnp.where(is_g, 2.0, 1.0).astype(a.dtype)


def prepare_params(params, n_tag):
    """Pre-fold embedding projections, the g-gate x2 scale, and the lane-dense linear head."""
    Hc = params["char_w_hh"].shape[0]
    Hw = params["word_w_hh"].shape[0]
    word_dim = params["word_emb"].shape[1]
    w_ih = params["word_w_ih"]

    out_lanes = max(128, ((n_tag + 127) // 128) * 128)
    lin_w_pad = jnp.zeros((Hw, out_lanes), jnp.float32).at[:, :n_tag].set(params["lin_w"])
    lin_b_pad = jnp.full((1, out_lanes), -1e30, jnp.float32).at[:, :n_tag].set(params["lin_b"])

    return {
        "char_proj": _scale_g_cols(params["char_emb"] @ params["char_w_ih"], Hc),
        "char_w_hh": _scale_g_cols(params["char_w_hh"], Hc),
        "char_b": _scale_g_cols(params["char_b"], Hc),
        "word_proj": _scale_g_cols(params["word_emb"] @ w_ih[:word_dim, :], Hw),
        "word_w_ih_c": _scale_g_cols(w_ih[word_dim:, :], Hw),
        "word_w_hh": _scale_g_cols(params["word_w_hh"], Hw),
        "word_b": _scale_g_cols(params["word_b"], Hw),
        "lin_w_pad": lin_w_pad,
        "lin_b_pad": lin_b_pad,
    }


# ----------------------------------------------------------------------------
# Wrapper
# ----------------------------------------------------------------------------
_VMEM = pl.BlockSpec(memory_space=pltpu.MemorySpace.VMEM)


@functools.partial(jax.jit, static_argnames=("n_tag",))
def lstm_tagger_forward(kp, word_idx, char_idx, char_lens, *, n_tag):
    """
    kp       : prepared params (prepare_params)
    word_idx : (W,)        int32
    char_idx : (W, Tc)     int32  (padded)
    char_lens: (W, 1)      int32
    returns  : (W, n_tag)  f32   log-probabilities
    """
    W = word_idx.shape[0]
    Tc = char_idx.shape[1]
    out_lanes = kp["lin_w_pad"].shape[1]

    word_idx2d = word_idx.reshape(W, 1).astype(jnp.int32)
    # time-major flatten so per-step slices inside the kernel are contiguous sublane blocks
    char_idx_t = char_idx.astype(jnp.int32).T.reshape(Tc * W, 1)

    out = pl.pallas_call(
        tagger_kernel,
        out_shape=jax.ShapeDtypeStruct((W, out_lanes), jnp.float32),
        in_specs=[_VMEM] * 12,
        out_specs=_VMEM,
    )(word_idx2d, char_idx_t, char_lens.astype(jnp.int32),
      kp["char_proj"], kp["char_w_hh"], kp["char_b"],
      kp["word_proj"], kp["word_w_ih_c"], kp["word_w_hh"], kp["word_b"],
      kp["lin_w_pad"], kp["lin_b_pad"])
    return out[:, :n_tag]


def init_params(key, n_word, n_char, word_dim, char_dim, word_hidden, char_hidden, n_tag):
    ks = jax.random.split(key, 12)
    s = 0.1
    return {
        # embeddings
        "word_emb": jax.random.normal(ks[0], (n_word, word_dim), jnp.float32),
        "char_emb": jax.random.normal(ks[1], (n_char, char_dim), jnp.float32),
        # char LSTM  (pre-transposed: (D, 4H), (H, 4H)); gate order [i, f, g, o]
        "char_w_ih": s * jax.random.normal(ks[2], (char_dim, 4 * char_hidden), jnp.float32),
        "char_w_hh": s * jax.random.normal(ks[3], (char_hidden, 4 * char_hidden), jnp.float32),
        "char_b": s * jax.random.normal(ks[4], (1, 4 * char_hidden), jnp.float32),
        # word LSTM
        "word_w_ih": s * jax.random.normal(
            ks[5], (word_dim + char_hidden, 4 * word_hidden), jnp.float32),
        "word_w_hh": s * jax.random.normal(ks[6], (word_hidden, 4 * word_hidden), jnp.float32),
        "word_b": s * jax.random.normal(ks[7], (1, 4 * word_hidden), jnp.float32),
        # linear1
        "lin_w": s * jax.random.normal(ks[8], (word_hidden, n_tag), jnp.float32),
        "lin_b": s * jax.random.normal(ks[9], (1, n_tag), jnp.float32),
    }


# ----------------------------------------------------------------------------
# Pure-JAX reference (standard LSTM equations + gather) for correctness checking.
# ----------------------------------------------------------------------------
def tagger_reference(params, word_idx, char_idx, char_lens):
    W, Tc = char_idx.shape
    Hc = params["char_w_hh"].shape[0]
    Hw = params["word_w_hh"].shape[0]

    def gates_split(g, H):
        return (jax.nn.sigmoid(g[:, 0 * H:1 * H]), jax.nn.sigmoid(g[:, 1 * H:2 * H]),
                jnp.tanh(g[:, 2 * H:3 * H]), jax.nn.sigmoid(g[:, 3 * H:4 * H]))

    # char LSTM (batched over words, length-masked)
    x = jnp.take(params["char_emb"], char_idx, axis=0)                    # (W, Tc, char_dim)
    h = jnp.zeros((W, Hc), jnp.float32)
    c = jnp.zeros((W, Hc), jnp.float32)
    for t in range(Tc):
        g = x[:, t, :] @ params["char_w_ih"] + h @ params["char_w_hh"] + params["char_b"]
        i_g, f_g, g_g, o_g = gates_split(g, Hc)
        c_new = f_g * c + i_g * g_g
        h_new = o_g * jnp.tanh(c_new)
        m = t < char_lens
        h = jnp.where(m, h_new, h)
        c = jnp.where(m, c_new, c)
    char_feat = c

    # word LSTM (batch = 1)
    we = jnp.take(params["word_emb"], word_idx, axis=0)                   # (W, word_dim)
    xcat = jnp.concatenate([we, char_feat], axis=1)
    h = jnp.zeros((1, Hw), jnp.float32)
    c = jnp.zeros((1, Hw), jnp.float32)
    hs = []
    for t in range(W):
        g = xcat[t:t + 1] @ params["word_w_ih"] + h @ params["word_w_hh"] + params["word_b"]
        i_g, f_g, g_g, o_g = gates_split(g, Hw)
        c = f_g * c + i_g * g_g
        h = o_g * jnp.tanh(c)
        hs.append(h)
    hseq = jnp.concatenate(hs, axis=0)
    z = hseq @ params["lin_w"] + params["lin_b"]
    return jax.nn.log_softmax(z, axis=-1)


if __name__ == "__main__":
    # Small, deterministic config.
    n_word, n_char = 20, 30
    word_dim, char_dim = 16, 8
    word_hidden, char_hidden = 32, 16
    n_tag = 10
    seq_len, max_char_len = 6, 8

    key = jax.random.PRNGKey(0)
    k_param, k_word, k_char, k_len = jax.random.split(key, 4)

    params = init_params(k_param, n_word, n_char, word_dim, char_dim,
                         word_hidden, char_hidden, n_tag)
    kparams = jax.tree_util.tree_map(jax.block_until_ready,
                                     prepare_params(params, n_tag))   # one-time weight prep

    word_idx = jax.random.randint(k_word, (seq_len,), 0, n_word, dtype=jnp.int32)
    char_idx = jax.random.randint(k_char, (seq_len, max_char_len), 0, n_char, dtype=jnp.int32)
    char_lens = jax.random.randint(k_len, (seq_len, 1), 2, max_char_len + 1, dtype=jnp.int32)

    y = lstm_tagger_forward(kparams, word_idx, char_idx, char_lens, n_tag=n_tag)
    y = jax.block_until_ready(y)

    assert y.shape == (seq_len, n_tag)
    # log_softmax rows must sum to ~1 in prob space
    assert jnp.allclose(jnp.sum(jnp.exp(y), axis=-1), 1.0, atol=1e-4)
    # match the pure-JAX reference (loose tol: MXU f32 matmul precision differs from XLA default)
    y_ref = tagger_reference(params, word_idx, char_idx, char_lens)
    assert jnp.allclose(y, y_ref, atol=2e-2, rtol=2e-2), float(jnp.max(jnp.abs(y - y_ref)))
    print("KERNEL_OK")
</pallas_src>

<mosaic_0001>
module attributes {stable_mosaic.version = 11 : i64} {
  func.func @tagger_kernel(%arg0: memref<6x1xi32, #tpu.memory_space<vmem>>, %arg1: memref<48x1xi32, #tpu.memory_space<vmem>>, %arg2: memref<6x1xi32, #tpu.memory_space<vmem>>, %arg3: memref<30x64xf32, #tpu.memory_space<vmem>>, %arg4: memref<16x64xf32, #tpu.memory_space<vmem>>, %arg5: memref<1x64xf32, #tpu.memory_space<vmem>>, %arg6: memref<20x128xf32, #tpu.memory_space<vmem>>, %arg7: memref<16x128xf32, #tpu.memory_space<vmem>>, %arg8: memref<32x128xf32, #tpu.memory_space<vmem>>, %arg9: memref<1x128xf32, #tpu.memory_space<vmem>>, %arg10: memref<32x128xf32, #tpu.memory_space<vmem>>, %arg11: memref<1x128xf32, #tpu.memory_space<vmem>>, %arg12: memref<6x128xf32, #tpu.memory_space<vmem>>) attributes {dimension_semantics = [], scalar_prefetch = 0 : i64, scratch_operands = 0 : i64, tpu.core_type = #tpu.core_type<tc>} {
    %c0 = arith.constant 0 : index
    %c0_0 = arith.constant 0 : index
    %0 = vector.load %arg0[%c0, %c0_0] : memref<6x1xi32, #tpu.memory_space<vmem>>, vector<6x1xi32>
    %c0_1 = arith.constant 0 : index
    %c0_2 = arith.constant 0 : index
    %1 = vector.load %arg1[%c0_1, %c0_2] : memref<48x1xi32, #tpu.memory_space<vmem>>, vector<48x1xi32>
    %c0_3 = arith.constant 0 : index
    %c0_4 = arith.constant 0 : index
    %2 = vector.load %arg2[%c0_3, %c0_4] : memref<6x1xi32, #tpu.memory_space<vmem>>, vector<6x1xi32>
    %c0_5 = arith.constant 0 : index
    %c0_6 = arith.constant 0 : index
    %3 = vector.load %arg3[%c0_5, %c0_6] : memref<30x64xf32, #tpu.memory_space<vmem>>, vector<30x64xf32>
    %c0_7 = arith.constant 0 : index
    %c0_8 = arith.constant 0 : index
    %4 = vector.load %arg4[%c0_7, %c0_8] : memref<16x64xf32, #tpu.memory_space<vmem>>, vector<16x64xf32>
    %c0_9 = arith.constant 0 : index
    %c0_10 = arith.constant 0 : index
    %5 = vector.load %arg5[%c0_9, %c0_10] : memref<1x64xf32, #tpu.memory_space<vmem>>, vector<1x64xf32>
    %c0_11 = arith.constant 0 : index
    %c0_12 = arith.constant 0 : index
    %6 = vector.load %arg6[%c0_11, %c0_12] : memref<20x128xf32, #tpu.memory_space<vmem>>, vector<20x128xf32>
    %c0_13 = arith.constant 0 : index
    %c0_14 = arith.constant 0 : index
    %7 = vector.load %arg7[%c0_13, %c0_14] : memref<16x128xf32, #tpu.memory_space<vmem>>, vector<16x128xf32>
    %c0_15 = arith.constant 0 : index
    %c0_16 = arith.constant 0 : index
    %8 = vector.load %arg8[%c0_15, %c0_16] : memref<32x128xf32, #tpu.memory_space<vmem>>, vector<32x128xf32>
    %c0_17 = arith.constant 0 : index
    %c0_18 = arith.constant 0 : index
    %9 = vector.load %arg9[%c0_17, %c0_18] : memref<1x128xf32, #tpu.memory_space<vmem>>, vector<1x128xf32>
    %c0_19 = arith.constant 0 : index
    %c0_20 = arith.constant 0 : index
    %10 = vector.load %arg10[%c0_19, %c0_20] : memref<32x128xf32, #tpu.memory_space<vmem>>, vector<32x128xf32>
    %c0_21 = arith.constant 0 : index
    %c0_22 = arith.constant 0 : index
    %11 = vector.load %arg11[%c0_21, %c0_22] : memref<1x128xf32, #tpu.memory_space<vmem>>, vector<1x128xf32>
    %12 = tpu.iota {dimensions = array<i32: 1>} : vector<48x30xi32>
    %13 = vector.broadcast %1 : vector<48x1xi32> to vector<48x30xi32>
    %14 = arith.cmpi eq, %13, %12 : vector<48x30xi32>
    %15 = arith.extui %14 : vector<48x30xi1> to vector<48x30xi32>
    %16 = arith.sitofp %15 : vector<48x30xi32> to vector<48x30xf32>
    %cst = arith.constant dense<0.000000e+00> : vector<48x64xf32>
    %17 = tpu.matmul %16, %3, %cst {dimension_numbers = #tpu.dot_dimension_numbers<[1], [0], [0], [1], [0, 0, 1, 1], [], []>, precision = #tpu.contract_precision<fp32>} : vector<48x30xf32>, vector<30x64xf32>, vector<48x64xf32> -> vector<48x64xf32>
    %18 = vector.broadcast %5 : vector<1x64xf32> to vector<48x64xf32>
    %19 = arith.addf %17, %18 : vector<48x64xf32>
    %20 = vector.extract_strided_slice %19 {offsets = [0, 0], sizes = [6, 64], strides = [1, 1]} : vector<48x64xf32> to vector<6x64xf32>
    %21 = vector.extract_strided_slice %19 {offsets = [6, 0], sizes = [6, 64], strides = [1, 1]} : vector<48x64xf32> to vector<6x64xf32>
    %22 = vector.extract_strided_slice %19 {offsets = [12, 0], sizes = [6, 64], strides = [1, 1]} : vector<48x64xf32> to vector<6x64xf32>
    %23 = vector.extract_strided_slice %19 {offsets = [18, 0], sizes = [6, 64], strides = [1, 1]} : vector<48x64xf32> to vector<6x64xf32>
    %24 = vector.extract_strided_slice %19 {offsets = [24, 0], sizes = [6, 64], strides = [1, 1]} : vector<48x64xf32> to vector<6x64xf32>
    %25 = vector.extract_strided_slice %19 {offsets = [30, 0], sizes = [6, 64], strides = [1, 1]} : vector<48x64xf32> to vector<6x64xf32>
    %26 = vector.extract_strided_slice %19 {offsets = [36, 0], sizes = [6, 64], strides = [1, 1]} : vector<48x64xf32> to vector<6x64xf32>
    %27 = vector.extract_strided_slice %19 {offsets = [42, 0], sizes = [6, 64], strides = [1, 1]} : vector<48x64xf32> to vector<6x64xf32>
    %c0_i32 = arith.constant 0 : i32
    %28 = vector.broadcast %c0_i32 : i32 to vector<6x1xi32>
    %29 = arith.cmpi sgt, %2, %28 : vector<6x1xi32>
    %c1_i32 = arith.constant 1 : i32
    %30 = vector.broadcast %c1_i32 : i32 to vector<6x1xi32>
    %31 = arith.cmpi sgt, %2, %30 : vector<6x1xi32>
    %c2_i32 = arith.constant 2 : i32
    %32 = vector.broadcast %c2_i32 : i32 to vector<6x1xi32>
    %33 = arith.cmpi sgt, %2, %32 : vector<6x1xi32>
    %c3_i32 = arith.constant 3 : i32
    %34 = vector.broadcast %c3_i32 : i32 to vector<6x1xi32>
    %35 = arith.cmpi sgt, %2, %34 : vector<6x1xi32>
    %c4_i32 = arith.constant 4 : i32
    %36 = vector.broadcast %c4_i32 : i32 to vector<6x1xi32>
    %37 = arith.cmpi sgt, %2, %36 : vector<6x1xi32>
    %c5_i32 = arith.constant 5 : i32
    %38 = vector.broadcast %c5_i32 : i32 to vector<6x1xi32>
    %39 = arith.cmpi sgt, %2, %38 : vector<6x1xi32>
    %c6_i32 = arith.constant 6 : i32
    %40 = vector.broadcast %c6_i32 : i32 to vector<6x1xi32>
    %41 = arith.cmpi sgt, %2, %40 : vector<6x1xi32>
    %c7_i32 = arith.constant 7 : i32
    %42 = vector.broadcast %c7_i32 : i32 to vector<6x1xi32>
    %43 = arith.cmpi sgt, %2, %42 : vector<6x1xi32>
    %44 = tpu.iota {dimensions = array<i32: 1>} : vector<1x64xi32>
    %c32_i32 = arith.constant 32 : i32
    %45 = vector.broadcast %c32_i32 : i32 to vector<1x64xi32>
    %46 = arith.cmpi sge, %44, %45 : vector<1x64xi32>
    %c48_i32 = arith.constant 48 : i32
    %47 = vector.broadcast %c48_i32 : i32 to vector<1x64xi32>
    %48 = arith.cmpi slt, %44, %47 : vector<1x64xi32>
    %49 = arith.andi %46, %48 : vector<1x64xi1>
    %cst_23 = arith.constant 2.000000e+00 : f32
    %cst_24 = arith.constant 1.000000e+00 : f32
    %50 = vector.broadcast %cst_23 : f32 to vector<1x64xf32>
    %51 = vector.broadcast %cst_24 : f32 to vector<1x64xf32>
    %52 = arith.select %49, %50, %51 : vector<1x64xi1>, vector<1x64xf32>
    %cst_25 = arith.constant 1.000000e+00 : f32
    %cst_26 = arith.constant 0.000000e+00 : f32
    %53 = vector.broadcast %cst_25 : f32 to vector<1x64xf32>
    %54 = vector.broadcast %cst_26 : f32 to vector<1x64xf32>
    %55 = arith.select %49, %53, %54 : vector<1x64xi1>, vector<1x64xf32>
    %cst_27 = arith.constant 0.000000e+00 : f32
    %56 = vector.broadcast %cst_27 : f32 to vector<6x16xf32>
    %cst_28 = arith.constant 0.000000e+00 : f32
    %57 = vector.broadcast %cst_28 : f32 to vector<6x16xf32>
    %cst_29 = arith.constant dense<0.000000e+00> : vector<6x64xf32>
    %58 = tpu.matmul %56, %4, %cst_29 {dimension_numbers = #tpu.dot_dimension_numbers<[1], [0], [0], [1], [0, 0, 1, 1], [], []>} : vector<6x16xf32>, vector<16x64xf32>, vector<6x64xf32> -> vector<6x64xf32>
    %59 = arith.addf %58, %20 : vector<6x64xf32>
    %60 = arith.negf %59 : vector<6x64xf32>
    %61 = math.exp %60 : vector<6x64xf32>
    %cst_30 = arith.constant 1.000000e+00 : f32
    %62 = vector.broadcast %cst_30 : f32 to vector<6x64xf32>
    %63 = arith.addf %62, %61 : vector<6x64xf32>
    %64 = arith.divf %62, %63 : vector<6x64xf32>
    %65 = vector.broadcast %52 : vector<1x64xf32> to vector<6x64xf32>
    %66 = arith.mulf %64, %65 : vector<6x64xf32>
    %67 = vector.broadcast %55 : vector<1x64xf32> to vector<6x64xf32>
    %68 = arith.subf %66, %67 : vector<6x64xf32>
    %69 = vector.extract_strided_slice %68 {offsets = [0, 0], sizes = [6, 16], strides = [1, 1]} : vector<6x64xf32> to vector<6x16xf32>
    %70 = vector.extract_strided_slice %68 {offsets = [0, 16], sizes = [6, 16], strides = [1, 1]} : vector<6x64xf32> to vector<6x16xf32>
    %71 = vector.extract_strided_slice %68 {offsets = [0, 32], sizes = [6, 16], strides = [1, 1]} : vector<6x64xf32> to vector<6x16xf32>
    %72 = vector.extract_strided_slice %68 {offsets = [0, 48], sizes = [6, 16], strides = [1, 1]} : vector<6x64xf32> to vector<6x16xf32>
    %73 = arith.mulf %70, %57 : vector<6x16xf32>
    %74 = arith.mulf %69, %71 : vector<6x16xf32>
    %75 = arith.addf %73, %74 : vector<6x16xf32>
    %76 = math.tanh %75 : vector<6x16xf32>
    %77 = arith.mulf %72, %76 : vector<6x16xf32>
    %78 = vector.shape_cast %29 : vector<6x1xi1> to vector<6x1xi1>
    %79 = vector.broadcast %78 : vector<6x1xi1> to vector<6x16xi1>
    %80 = arith.select %79, %77, %56 : vector<6x16xi1>, vector<6x16xf32>
    %81 = vector.shape_cast %29 : vector<6x1xi1> to vector<6x1xi1>
    %82 = vector.broadcast %81 : vector<6x1xi1> to vector<6x16xi1>
    %83 = arith.select %82, %75, %57 : vector<6x16xi1>, vector<6x16xf32>
    %cst_31 = arith.constant dense<0.000000e+00> : vector<6x64xf32>
    %84 = tpu.matmul %80, %4, %cst_31 {dimension_numbers = #tpu.dot_dimension_numbers<[1], [0], [0], [1], [0, 0, 1, 1], [], []>} : vector<6x16xf32>, vector<16x64xf32>, vector<6x64xf32> -> vector<6x64xf32>
    %85 = arith.addf %84, %21 : vector<6x64xf32>
    %86 = arith.negf %85 : vector<6x64xf32>
    %87 = math.exp %86 : vector<6x64xf32>
    %cst_32 = arith.constant 1.000000e+00 : f32
    %88 = vector.broadcast %cst_32 : f32 to vector<6x64xf32>
    %89 = arith.addf %88, %87 : vector<6x64xf32>
    %90 = arith.divf %88, %89 : vector<6x64xf32>
    %91 = vector.broadcast %52 : vector<1x64xf32> to vector<6x64xf32>
    %92 = arith.mulf %90, %91 : vector<6x64xf32>
    %93 = vector.broadcast %55 : vector<1x64xf32> to vector<6x64xf32>
    %94 = arith.subf %92, %93 : vector<6x64xf32>
    %95 = vector.extract_strided_slice %94 {offsets = [0, 0], sizes = [6, 16], strides = [1, 1]} : vector<6x64xf32> to vector<6x16xf32>
    %96 = vector.extract_strided_slice %94 {offsets = [0, 16], sizes = [6, 16], strides = [1, 1]} : vector<6x64xf32> to vector<6x16xf32>
    %97 = vector.extract_strided_slice %94 {offsets = [0, 32], sizes = [6, 16], strides = [1, 1]} : vector<6x64xf32> to vector<6x16xf32>
    %98 = vector.extract_strided_slice %94 {offsets = [0, 48], sizes = [6, 16], strides = [1, 1]} : vector<6x64xf32> to vector<6x16xf32>
    %99 = arith.mulf %96, %83 : vector<6x16xf32>
    %100 = arith.mulf %95, %97 : vector<6x16xf32>
    %101 = arith.addf %99, %100 : vector<6x16xf32>
    %102 = math.tanh %101 : vector<6x16xf32>
    %103 = arith.mulf %98, %102 : vector<6x16xf32>
    %104 = vector.shape_cast %31 : vector<6x1xi1> to vector<6x1xi1>
    %105 = vector.broadcast %104 : vector<6x1xi1> to vector<6x16xi1>
    %106 = arith.select %105, %103, %80 : vector<6x16xi1>, vector<6x16xf32>
    %107 = vector.shape_cast %31 : vector<6x1xi1> to vector<6x1xi1>
    %108 = vector.broadcast %107 : vector<6x1xi1> to vector<6x16xi1>
    %109 = arith.select %108, %101, %83 : vector<6x16xi1>, vector<6x16xf32>
    %cst_33 = arith.constant dense<0.000000e+00> : vector<6x64xf32>
    %110 = tpu.matmul %106, %4, %cst_33 {dimension_numbers = #tpu.dot_dimension_numbers<[1], [0], [0], [1], [0, 0, 1, 1], [], []>} : vector<6x16xf32>, vector<16x64xf32>, vector<6x64xf32> -> vector<6x64xf32>
    %111 = arith.addf %110, %22 : vector<6x64xf32>
    %112 = arith.negf %111 : vector<6x64xf32>
    %113 = math.exp %112 : vector<6x64xf32>
    %cst_34 = arith.constant 1.000000e+00 : f32
    %114 = vector.broadcast %cst_34 : f32 to vector<6x64xf32>
    %115 = arith.addf %114, %113 : vector<6x64xf32>
    %116 = arith.divf %114, %115 : vector<6x64xf32>
    %117 = vector.broadcast %52 : vector<1x64xf32> to vector<6x64xf32>
    %118 = arith.mulf %116, %117 : vector<6x64xf32>
    %119 = vector.broadcast %55 : vector<1x64xf32> to vector<6x64xf32>
    %120 = arith.subf %118, %119 : vector<6x64xf32>
    %121 = vector.extract_strided_slice %120 {offsets = [0, 0], sizes = [6, 16], strides = [1, 1]} : vector<6x64xf32> to vector<6x16xf32>
    %122 = vector.extract_strided_slice %120 {offsets = [0, 16], sizes = [6, 16], strides = [1, 1]} : vector<6x64xf32> to vector<6x16xf32>
    %123 = vector.extract_strided_slice %120 {offsets = [0, 32], sizes = [6, 16], strides = [1, 1]} : vector<6x64xf32> to vector<6x16xf32>
    %124 = vector.extract_strided_slice %120 {offsets = [0, 48], sizes = [6, 16], strides = [1, 1]} : vector<6x64xf32> to vector<6x16xf32>
    %125 = arith.mulf %122, %109 : vector<6x16xf32>
    %126 = arith.mulf %121, %123 : vector<6x16xf32>
    %127 = arith.addf %125, %126 : vector<6x16xf32>
    %128 = math.tanh %127 : vector<6x16xf32>
    %129 = arith.mulf %124, %128 : vector<6x16xf32>
    %130 = vector.shape_cast %33 : vector<6x1xi1> to vector<6x1xi1>
    %131 = vector.broadcast %130 : vector<6x1xi1> to vector<6x16xi1>
    %132 = arith.select %131, %129, %106 : vector<6x16xi1>, vector<6x16xf32>
    %133 = vector.shape_cast %33 : vector<6x1xi1> to vector<6x1xi1>
    %134 = vector.broadcast %133 : vector<6x1xi1> to vector<6x16xi1>
    %135 = arith.select %134, %127, %109 : vector<6x16xi1>, vector<6x16xf32>
    %cst_35 = arith.constant dense<0.000000e+00> : vector<6x64xf32>
    %136 = tpu.matmul %132, %4, %cst_35 {dimension_numbers = #tpu.dot_dimension_numbers<[1], [0], [0], [1], [0, 0, 1, 1], [], []>} : vector<6x16xf32>, vector<16x64xf32>, vector<6x64xf32> -> vector<6x64xf32>
    %137 = arith.addf %136, %23 : vector<6x64xf32>
    %138 = arith.negf %137 : vector<6x64xf32>
    %139 = math.exp %138 : vector<6x64xf32>
    %cst_36 = arith.constant 1.000000e+00 : f32
    %140 = vector.broadcast %cst_36 : f32 to vector<6x64xf32>
    %141 = arith.addf %140, %139 : vector<6x64xf32>
    %142 = arith.divf %140, %141 : vector<6x64xf32>
    %143 = vector.broadcast %52 : vector<1x64xf32> to vector<6x64xf32>
    %144 = arith.mulf %142, %143 : vector<6x64xf32>
    %145 = vector.broadcast %55 : vector<1x64xf32> to vector<6x64xf32>
    %146 = arith.subf %144, %145 : vector<6x64xf32>
    %147 = vector.extract_strided_slice %146 {offsets = [0, 0], sizes = [6, 16], strides = [1, 1]} : vector<6x64xf32> to vector<6x16xf32>
    %148 = vector.extract_strided_slice %146 {offsets = [0, 16], sizes = [6, 16], strides = [1, 1]} : vector<6x64xf32> to vector<6x16xf32>
    %149 = vector.extract_strided_slice %146 {offsets = [0, 32], sizes = [6, 16], strides = [1, 1]} : vector<6x64xf32> to vector<6x16xf32>
    %150 = vector.extract_strided_slice %146 {offsets = [0, 48], sizes = [6, 16], strides = [1, 1]} : vector<6x64xf32> to vector<6x16xf32>
    %151 = arith.mulf %148, %135 : vector<6x16xf32>
    %152 = arith.mulf %147, %149 : vector<6x16xf32>
    %153 = arith.addf %151, %152 : vector<6x16xf32>
    %154 = math.tanh %153 : vector<6x16xf32>
    %155 = arith.mulf %150, %154 : vector<6x16xf32>
    %156 = vector.shape_cast %35 : vector<6x1xi1> to vector<6x1xi1>
    %157 = vector.broadcast %156 : vector<6x1xi1> to vector<6x16xi1>
    %158 = arith.select %157, %155, %132 : vector<6x16xi1>, vector<6x16xf32>
    %159 = vector.shape_cast %35 : vector<6x1xi1> to vector<6x1xi1>
    %160 = vector.broadcast %159 : vector<6x1xi1> to vector<6x16xi1>
    %161 = arith.select %160, %153, %135 : vector<6x16xi1>, vector<6x16xf32>
    %cst_37 = arith.constant dense<0.000000e+00> : vector<6x64xf32>
    %162 = tpu.matmul %158, %4, %cst_37 {dimension_numbers = #tpu.dot_dimension_numbers<[1], [0], [0], [1], [0, 0, 1, 1], [], []>} : vector<6x16xf32>, vector<16x64xf32>, vector<6x64xf32> -> vector<6x64xf32>
    %163 = arith.addf %162, %24 : vector<6x64xf32>
    %164 = arith.negf %163 : vector<6x64xf32>
    %165 = math.exp %164 : vector<6x64xf32>
    %cst_38 = arith.constant 1.000000e+00 : f32
    %166 = vector.broadcast %cst_38 : f32 to vector<6x64xf32>
    %167 = arith.addf %166, %165 : vector<6x64xf32>
    %168 = arith.divf %166, %167 : vector<6x64xf32>
    %169 = vector.broadcast %52 : vector<1x64xf32> to vector<6x64xf32>
    %170 = arith.mulf %168, %169 : vector<6x64xf32>
    %171 = vector.broadcast %55 : vector<1x64xf32> to vector<6x64xf32>
    %172 = arith.subf %170, %171 : vector<6x64xf32>
    %173 = vector.extract_strided_slice %172 {offsets = [0, 0], sizes = [6, 16], strides = [1, 1]} : vector<6x64xf32> to vector<6x16xf32>
    %174 = vector.extract_strided_slice %172 {offsets = [0, 16], sizes = [6, 16], strides = [1, 1]} : vector<6x64xf32> to vector<6x16xf32>
    %175 = vector.extract_strided_slice %172 {offsets = [0, 32], sizes = [6, 16], strides = [1, 1]} : vector<6x64xf32> to vector<6x16xf32>
    %176 = vector.extract_strided_slice %172 {offsets = [0, 48], sizes = [6, 16], strides = [1, 1]} : vector<6x64xf32> to vector<6x16xf32>
    %177 = arith.mulf %174, %161 : vector<6x16xf32>
    %178 = arith.mulf %173, %175 : vector<6x16xf32>
    %179 = arith.addf %177, %178 : vector<6x16xf32>
    %180 = math.tanh %179 : vector<6x16xf32>
    %181 = arith.mulf %176, %180 : vector<6x16xf32>
    %182 = vector.shape_cast %37 : vector<6x1xi1> to vector<6x1xi1>
    %183 = vector.broadcast %182 : vector<6x1xi1> to vector<6x16xi1>
    %184 = arith.select %183, %181, %158 : vector<6x16xi1>, vector<6x16xf32>
    %185 = vector.shape_cast %37 : vector<6x1xi1> to vector<6x1xi1>
    %186 = vector.broadcast %185 : vector<6x1xi1> to vector<6x16xi1>
    %187 = arith.select %186, %179, %161 : vector<6x16xi1>, vector<6x16xf32>
    %cst_39 = arith.constant dense<0.000000e+00> : vector<6x64xf32>
    %188 = tpu.matmul %184, %4, %cst_39 {dimension_numbers = #tpu.dot_dimension_numbers<[1], [0], [0], [1], [0, 0, 1, 1], [], []>} : vector<6x16xf32>, vector<16x64xf32>, vector<6x64xf32> -> vector<6x64xf32>
    %189 = arith.addf %188, %25 : vector<6x64xf32>
    %190 = arith.negf %189 : vector<6x64xf32>
    %191 = math.exp %190 : vector<6x64xf32>
    %cst_40 = arith.constant 1.000000e+00 : f32
    %192 = vector.broadcast %cst_40 : f32 to vector<6x64xf32>
    %193 = arith.addf %192, %191 : vector<6x64xf32>
    %194 = arith.divf %192, %193 : vector<6x64xf32>
    %195 = vector.broadcast %52 : vector<1x64xf32> to vector<6x64xf32>
    %196 = arith.mulf %194, %195 : vector<6x64xf32>
    %197 = vector.broadcast %55 : vector<1x64xf32> to vector<6x64xf32>
    %198 = arith.subf %196, %197 : vector<6x64xf32>
    %199 = vector.extract_strided_slice %198 {offsets = [0, 0], sizes = [6, 16], strides = [1, 1]} : vector<6x64xf32> to vector<6x16xf32>
    %200 = vector.extract_strided_slice %198 {offsets = [0, 16], sizes = [6, 16], strides = [1, 1]} : vector<6x64xf32> to vector<6x16xf32>
    %201 = vector.extract_strided_slice %198 {offsets = [0, 32], sizes = [6, 16], strides = [1, 1]} : vector<6x64xf32> to vector<6x16xf32>
    %202 = vector.extract_strided_slice %198 {offsets = [0, 48], sizes = [6, 16], strides = [1, 1]} : vector<6x64xf32> to vector<6x16xf32>
    %203 = arith.mulf %200, %187 : vector<6x16xf32>
    %204 = arith.mulf %199, %201 : vector<6x16xf32>
    %205 = arith.addf %203, %204 : vector<6x16xf32>
    %206 = math.tanh %205 : vector<6x16xf32>
    %207 = arith.mulf %202, %206 : vector<6x16xf32>
    %208 = vector.shape_cast %39 : vector<6x1xi1> to vector<6x1xi1>
    %209 = vector.broadcast %208 : vector<6x1xi1> to vector<6x16xi1>
    %210 = arith.select %209, %207, %184 : vector<6x16xi1>, vector<6x16xf32>
    %211 = vector.shape_cast %39 : vector<6x1xi1> to vector<6x1xi1>
    %212 = vector.broadcast %211 : vector<6x1xi1> to vector<6x16xi1>
    %213 = arith.select %212, %205, %187 : vector<6x16xi1>, vector<6x16xf32>
    %cst_41 = arith.constant dense<0.000000e+00> : vector<6x64xf32>
    %214 = tpu.matmul %210, %4, %cst_41 {dimension_numbers = #tpu.dot_dimension_numbers<[1], [0], [0], [1], [0, 0, 1, 1], [], []>} : vector<6x16xf32>, vector<16x64xf32>, vector<6x64xf32> -> vector<6x64xf32>
    %215 = arith.addf %214, %26 : vector<6x64xf32>
    %216 = arith.negf %215 : vector<6x64xf32>
    %217 = math.exp %216 : vector<6x64xf32>
    %cst_42 = arith.constant 1.000000e+00 : f32
    %218 = vector.broadcast %cst_42 : f32 to vector<6x64xf32>
    %219 = arith.addf %218, %217 : vector<6x64xf32>
    %220 = arith.divf %218, %219 : vector<6x64xf32>
    %221 = vector.broadcast %52 : vector<1x64xf32> to vector<6x64xf32>
    %222 = arith.mulf %220, %221 : vector<6x64xf32>
    %223 = vector.broadcast %55 : vector<1x64xf32> to vector<6x64xf32>
    %224 = arith.subf %222, %223 : vector<6x64xf32>
    %225 = vector.extract_strided_slice %224 {offsets = [0, 0], sizes = [6, 16], strides = [1, 1]} : vector<6x64xf32> to vector<6x16xf32>
    %226 = vector.extract_strided_slice %224 {offsets = [0, 16], sizes = [6, 16], strides = [1, 1]} : vector<6x64xf32> to vector<6x16xf32>
    %227 = vector.extract_strided_slice %224 {offsets = [0, 32], sizes = [6, 16], strides = [1, 1]} : vector<6x64xf32> to vector<6x16xf32>
    %228 = vector.extract_strided_slice %224 {offsets = [0, 48], sizes = [6, 16], strides = [1, 1]} : vector<6x64xf32> to vector<6x16xf32>
    %229 = arith.mulf %226, %213 : vector<6x16xf32>
    %230 = arith.mulf %225, %227 : vector<6x16xf32>
    %231 = arith.addf %229, %230 : vector<6x16xf32>
    %232 = math.tanh %231 : vector<6x16xf32>
    %233 = arith.mulf %228, %232 : vector<6x16xf32>
    %234 = vector.shape_cast %41 : vector<6x1xi1> to vector<6x1xi1>
    %235 = vector.broadcast %234 : vector<6x1xi1> to vector<6x16xi1>
    %236 = arith.select %235, %233, %210 : vector<6x16xi1>, vector<6x16xf32>
    %237 = vector.shape_cast %41 : vector<6x1xi1> to vector<6x1xi1>
    %238 = vector.broadcast %237 : vector<6x1xi1> to vector<6x16xi1>
    %239 = arith.select %238, %231, %213 : vector<6x16xi1>, vector<6x16xf32>
    %cst_43 = arith.constant dense<0.000000e+00> : vector<6x64xf32>
    %240 = tpu.matmul %236, %4, %cst_43 {dimension_numbers = #tpu.dot_dimension_numbers<[1], [0], [0], [1], [0, 0, 1, 1], [], []>} : vector<6x16xf32>, vector<16x64xf32>, vector<6x64xf32> -> vector<6x64xf32>
    %241 = arith.addf %240, %27 : vector<6x64xf32>
    %242 = arith.negf %241 : vector<6x64xf32>
    %243 = math.exp %242 : vector<6x64xf32>
    %cst_44 = arith.constant 1.000000e+00 : f32
    %244 = vector.broadcast %cst_44 : f32 to vector<6x64xf32>
    %245 = arith.addf %244, %243 : vector<6x64xf32>
    %246 = arith.divf %244, %245 : vector<6x64xf32>
    %247 = vector.broadcast %52 : vector<1x64xf32> to vector<6x64xf32>
    %248 = arith.mulf %246, %247 : vector<6x64xf32>
    %249 = vector.broadcast %55 : vector<1x64xf32> to vector<6x64xf32>
    %250 = arith.subf %248, %249 : vector<6x64xf32>
    %251 = vector.extract_strided_slice %250 {offsets = [0, 0], sizes = [6, 16], strides = [1, 1]} : vector<6x64xf32> to vector<6x16xf32>
    %252 = vector.extract_strided_slice %250 {offsets = [0, 16], sizes = [6, 16], strides = [1, 1]} : vector<6x64xf32> to vector<6x16xf32>
    %253 = vector.extract_strided_slice %250 {offsets = [0, 32], sizes = [6, 16], strides = [1, 1]} : vector<6x64xf32> to vector<6x16xf32>
    %254 = arith.mulf %252, %239 : vector<6x16xf32>
    %255 = arith.mulf %251, %253 : vector<6x16xf32>
    %256 = arith.addf %254, %255 : vector<6x16xf32>
    %257 = vector.shape_cast %43 : vector<6x1xi1> to vector<6x1xi1>
    %258 = vector.broadcast %257 : vector<6x1xi1> to vector<6x16xi1>
    %259 = arith.select %258, %256, %239 : vector<6x16xi1>, vector<6x16xf32>
    %260 = tpu.iota {dimensions = array<i32: 1>} : vector<6x20xi32>
    %261 = vector.broadcast %0 : vector<6x1xi32> to vector<6x20xi32>
    %262 = arith.cmpi eq, %261, %260 : vector<6x20xi32>
    %263 = arith.extui %262 : vector<6x20xi1> to vector<6x20xi32>
    %264 = arith.sitofp %263 : vector<6x20xi32> to vector<6x20xf32>
    %cst_45 = arith.constant dense<0.000000e+00> : vector<6x128xf32>
    %265 = tpu.matmul %264, %6, %cst_45 {dimension_numbers = #tpu.dot_dimension_numbers<[1], [0], [0], [1], [0, 0, 1, 1], [], []>, precision = #tpu.contract_precision<fp32>} : vector<6x20xf32>, vector<20x128xf32>, vector<6x128xf32> -> vector<6x128xf32>
    %cst_46 = arith.constant dense<0.000000e+00> : vector<6x128xf32>
    %266 = tpu.matmul %259, %7, %cst_46 {dimension_numbers = #tpu.dot_dimension_numbers<[1], [0], [0], [1], [0, 0, 1, 1], [], []>} : vector<6x16xf32>, vector<16x128xf32>, vector<6x128xf32> -> vector<6x128xf32>
    %267 = arith.addf %265, %266 : vector<6x128xf32>
    %268 = vector.broadcast %9 : vector<1x128xf32> to vector<6x128xf32>
    %269 = arith.addf %267, %268 : vector<6x128xf32>
    %270 = vector.extract_strided_slice %269 {offsets = [0, 0], sizes = [1, 128], strides = [1, 1]} : vector<6x128xf32> to vector<1x128xf32>
    %271 = vector.extract_strided_slice %269 {offsets = [1, 0], sizes = [1, 128], strides = [1, 1]} : vector<6x128xf32> to vector<1x128xf32>
    %272 = vector.extract_strided_slice %269 {offsets = [2, 0], sizes = [1, 128], strides = [1, 1]} : vector<6x128xf32> to vector<1x128xf32>
    %273 = vector.extract_strided_slice %269 {offsets = [3, 0], sizes = [1, 128], strides = [1, 1]} : vector<6x128xf32> to vector<1x128xf32>
    %274 = vector.extract_strided_slice %269 {offsets = [4, 0], sizes = [1, 128], strides = [1, 1]} : vector<6x128xf32> to vector<1x128xf32>
    %275 = vector.extract_strided_slice %269 {offsets = [5, 0], sizes = [1, 128], strides = [1, 1]} : vector<6x128xf32> to vector<1x128xf32>
    %276 = tpu.iota {dimensions = array<i32: 1>} : vector<1x128xi32>
    %c64_i32 = arith.constant 64 : i32
    %277 = vector.broadcast %c64_i32 : i32 to vector<1x128xi32>
    %278 = arith.cmpi sge, %276, %277 : vector<1x128xi32>
    %c96_i32 = arith.constant 96 : i32
    %279 = vector.broadcast %c96_i32 : i32 to vector<1x128xi32>
    %280 = arith.cmpi slt, %276, %279 : vector<1x128xi32>
    %281 = arith.andi %278, %280 : vector<1x128xi1>
    %cst_47 = arith.constant 2.000000e+00 : f32
    %cst_48 = arith.constant 1.000000e+00 : f32
    %282 = vector.broadcast %cst_47 : f32 to vector<1x128xf32>
    %283 = vector.broadcast %cst_48 : f32 to vector<1x128xf32>
    %284 = arith.select %281, %282, %283 : vector<1x128xi1>, vector<1x128xf32>
    %cst_49 = arith.constant 1.000000e+00 : f32
    %cst_50 = arith.constant 0.000000e+00 : f32
    %285 = vector.broadcast %cst_49 : f32 to vector<1x128xf32>
    %286 = vector.broadcast %cst_50 : f32 to vector<1x128xf32>
    %287 = arith.select %281, %285, %286 : vector<1x128xi1>, vector<1x128xf32>
    %cst_51 = arith.constant 0.000000e+00 : f32
    %288 = vector.broadcast %cst_51 : f32 to vector<1x32xf32>
    %cst_52 = arith.constant 0.000000e+00 : f32
    %289 = vector.broadcast %cst_52 : f32 to vector<1x32xf32>
    %cst_53 = arith.constant dense<0.000000e+00> : vector<1x128xf32>
    %290 = tpu.matmul %288, %8, %cst_53 {dimension_numbers = #tpu.dot_dimension_numbers<[1], [0], [0], [1], [0, 0, 1, 1], [], []>} : vector<1x32xf32>, vector<32x128xf32>, vector<1x128xf32> -> vector<1x128xf32>
    %291 = arith.addf %290, %270 : vector<1x128xf32>
    %292 = arith.negf %291 : vector<1x128xf32>
    %293 = math.exp %292 : vector<1x128xf32>
    %cst_54 = arith.constant 1.000000e+00 : f32
    %294 = vector.broadcast %cst_54 : f32 to vector<1x128xf32>
    %295 = arith.addf %294, %293 : vector<1x128xf32>
    %296 = arith.divf %294, %295 : vector<1x128xf32>
    %297 = arith.mulf %296, %284 : vector<1x128xf32>
    %298 = arith.subf %297, %287 : vector<1x128xf32>
    %299 = vector.extract_strided_slice %298 {offsets = [0, 0], sizes = [1, 32], strides = [1, 1]} : vector<1x128xf32> to vector<1x32xf32>
    %300 = vector.extract_strided_slice %298 {offsets = [0, 32], sizes = [1, 32], strides = [1, 1]} : vector<1x128xf32> to vector<1x32xf32>
    %301 = vector.extract_strided_slice %298 {offsets = [0, 64], sizes = [1, 32], strides = [1, 1]} : vector<1x128xf32> to vector<1x32xf32>
    %302 = vector.extract_strided_slice %298 {offsets = [0, 96], sizes = [1, 32], strides = [1, 1]} : vector<1x128xf32> to vector<1x32xf32>
    %303 = arith.mulf %300, %289 : vector<1x32xf32>
    %304 = arith.mulf %299, %301 : vector<1x32xf32>
    %305 = arith.addf %303, %304 : vector<1x32xf32>
    %306 = math.tanh %305 : vector<1x32xf32>
    %307 = arith.mulf %302, %306 : vector<1x32xf32>
    %cst_55 = arith.constant dense<0.000000e+00> : vector<1x128xf32>
    %308 = tpu.matmul %307, %8, %cst_55 {dimension_numbers = #tpu.dot_dimension_numbers<[1], [0], [0], [1], [0, 0, 1, 1], [], []>} : vector<1x32xf32>, vector<32x128xf32>, vector<1x128xf32> -> vector<1x128xf32>
    %309 = arith.addf %308, %271 : vector<1x128xf32>
    %310 = arith.negf %309 : vector<1x128xf32>
    %311 = math.exp %310 : vector<1x128xf32>
    %cst_56 = arith.constant 1.000000e+00 : f32
    %312 = vector.broadcast %cst_56 : f32 to vector<1x128xf32>
    %313 = arith.addf %312, %311 : vector<1x128xf32>
    %314 = arith.divf %312, %313 : vector<1x128xf32>
    %315 = arith.mulf %314, %284 : vector<1x128xf32>
    %316 = arith.subf %315, %287 : vector<1x128xf32>
    %317 = vector.extract_strided_slice %316 {offsets = [0, 0], sizes = [1, 32], strides = [1, 1]} : vector<1x128xf32> to vector<1x32xf32>
    %318 = vector.extract_strided_slice %316 {offsets = [0, 32], sizes = [1, 32], strides = [1, 1]} : vector<1x128xf32> to vector<1x32xf32>
    %319 = vector.extract_strided_slice %316 {offsets = [0, 64], sizes = [1, 32], strides = [1, 1]} : vector<1x128xf32> to vector<1x32xf32>
    %320 = vector.extract_strided_slice %316 {offsets = [0, 96], sizes = [1, 32], strides = [1, 1]} : vector<1x128xf32> to vector<1x32xf32>
    %321 = arith.mulf %318, %305 : vector<1x32xf32>
    %322 = arith.mulf %317, %319 : vector<1x32xf32>
    %323 = arith.addf %321, %322 : vector<1x32xf32>
    %324 = math.tanh %323 : vector<1x32xf32>
    %325 = arith.mulf %320, %324 : vector<1x32xf32>
    %cst_57 = arith.constant dense<0.000000e+00> : vector<1x128xf32>
    %326 = tpu.matmul %325, %8, %cst_57 {dimension_numbers = #tpu.dot_dimension_numbers<[1], [0], [0], [1], [0, 0, 1, 1], [], []>} : vector<1x32xf32>, vector<32x128xf32>, vector<1x128xf32> -> vector<1x128xf32>
    %327 = arith.addf %326, %272 : vector<1x128xf32>
    %328 = arith.negf %327 : vector<1x128xf32>
    %329 = math.exp %328 : vector<1x128xf32>
    %cst_58 = arith.constant 1.000000e+00 : f32
    %330 = vector.broadcast %cst_58 : f32 to vector<1x128xf32>
    %331 = arith.addf %330, %329 : vector<1x128xf32>
    %332 = arith.divf %330, %331 : vector<1x128xf32>
    %333 = arith.mulf %332, %284 : vector<1x128xf32>
    %334 = arith.subf %333, %287 : vector<1x128xf32>
    %335 = vector.extract_strided_slice %334 {offsets = [0, 0], sizes = [1, 32], strides = [1, 1]} : vector<1x128xf32> to vector<1x32xf32>
    %336 = vector.extract_strided_slice %334 {offsets = [0, 32], sizes = [1, 32], strides = [1, 1]} : vector<1x128xf32> to vector<1x32xf32>
    %337 = vector.extract_strided_slice %334 {offsets = [0, 64], sizes = [1, 32], strides = [1, 1]} : vector<1x128xf32> to vector<1x32xf32>
    %338 = vector.extract_strided_slice %334 {offsets = [0, 96], sizes = [1, 32], strides = [1, 1]} : vector<1x128xf32> to vector<1x32xf32>
    %339 = arith.mulf %336, %323 : vector<1x32xf32>
    %340 = arith.mulf %335, %337 : vector<1x32xf32>
    %341 = arith.addf %339, %340 : vector<1x32xf32>
    %342 = math.tanh %341 : vector<1x32xf32>
    %343 = arith.mulf %338, %342 : vector<1x32xf32>
    %cst_59 = arith.constant dense<0.000000e+00> : vector<1x128xf32>
    %344 = tpu.matmul %343, %8, %cst_59 {dimension_numbers = #tpu.dot_dimension_numbers<[1], [0], [0], [1], [0, 0, 1, 1], [], []>} : vector<1x32xf32>, vector<32x128xf32>, vector<1x128xf32> -> vector<1x128xf32>
    %345 = arith.addf %344, %273 : vector<1x128xf32>
    %346 = arith.negf %345 : vector<1x128xf32>
    %347 = math.exp %346 : vector<1x128xf32>
    %cst_60 = arith.constant 1.000000e+00 : f32
    %348 = vector.broadcast %cst_60 : f32 to vector<1x128xf32>
    %349 = arith.addf %348, %347 : vector<1x128xf32>
    %350 = arith.divf %348, %349 : vector<1x128xf32>
    %351 = arith.mulf %350, %284 : vector<1x128xf32>
    %352 = arith.subf %351, %287 : vector<1x128xf32>
    %353 = vector.extract_strided_slice %352 {offsets = [0, 0], sizes = [1, 32], strides = [1, 1]} : vector<1x128xf32> to vector<1x32xf32>
    %354 = vector.extract_strided_slice %352 {offsets = [0, 32], sizes = [1, 32], strides = [1, 1]} : vector<1x128xf32> to vector<1x32xf32>
    %355 = vector.extract_strided_slice %352 {offsets = [0, 64], sizes = [1, 32], strides = [1, 1]} : vector<1x128xf32> to vector<1x32xf32>
    %356 = vector.extract_strided_slice %352 {offsets = [0, 96], sizes = [1, 32], strides = [1, 1]} : vector<1x128xf32> to vector<1x32xf32>
    %357 = arith.mulf %354, %341 : vector<1x32xf32>
    %358 = arith.mulf %353, %355 : vector<1x32xf32>
    %359 = arith.addf %357, %358 : vector<1x32xf32>
    %360 = math.tanh %359 : vector<1x32xf32>
    %361 = arith.mulf %356, %360 : vector<1x32xf32>
    %cst_61 = arith.constant dense<0.000000e+00> : vector<1x128xf32>
    %362 = tpu.matmul %361, %8, %cst_61 {dimension_numbers = #tpu.dot_dimension_numbers<[1], [0], [0], [1], [0, 0, 1, 1], [], []>} : vector<1x32xf32>, vector<32x128xf32>, vector<1x128xf32> -> vector<1x128xf32>
    %363 = arith.addf %362, %274 : vector<1x128xf32>
    %364 = arith.negf %363 : vector<1x128xf32>
    %365 = math.exp %364 : vector<1x128xf32>
    %cst_62 = arith.constant 1.000000e+00 : f32
    %366 = vector.broadcast %cst_62 : f32 to vector<1x128xf32>
    %367 = arith.addf %366, %365 : vector<1x128xf32>
    %368 = arith.divf %366, %367 : vector<1x128xf32>
    %369 = arith.mulf %368, %284 : vector<1x128xf32>
    %370 = arith.subf %369, %287 : vector<1x128xf32>
    %371 = vector.extract_strided_slice %370 {offsets = [0, 0], sizes = [1, 32], strides = [1, 1]} : vector<1x128xf32> to vector<1x32xf32>
    %372 = vector.extract_strided_slice %370 {offsets = [0, 32], sizes = [1, 32], strides = [1, 1]} : vector<1x128xf32> to vector<1x32xf32>
    %373 = vector.extract_strided_slice %370 {offsets = [0, 64], sizes = [1, 32], strides = [1, 1]} : vector<1x128xf32> to vector<1x32xf32>
    %374 = vector.extract_strided_slice %370 {offsets = [0, 96], sizes = [1, 32], strides = [1, 1]} : vector<1x128xf32> to vector<1x32xf32>
    %375 = arith.mulf %372, %359 : vector<1x32xf32>
    %376 = arith.mulf %371, %373 : vector<1x32xf32>
    %377 = arith.addf %375, %376 : vector<1x32xf32>
    %378 = math.tanh %377 : vector<1x32xf32>
    %379 = arith.mulf %374, %378 : vector<1x32xf32>
    %cst_63 = arith.constant dense<0.000000e+00> : vector<1x128xf32>
    %380 = tpu.matmul %379, %8, %cst_63 {dimension_numbers = #tpu.dot_dimension_numbers<[1], [0], [0], [1], [0, 0, 1, 1], [], []>} : vector<1x32xf32>, vector<32x128xf32>, vector<1x128xf32> -> vector<1x128xf32>
    %381 = arith.addf %380, %275 : vector<1x128xf32>
    %382 = arith.negf %381 : vector<1x128xf32>
    %383 = math.exp %382 : vector<1x128xf32>
    %cst_64 = arith.constant 1.000000e+00 : f32
    %384 = vector.broadcast %cst_64 : f32 to vector<1x128xf32>
    %385 = arith.addf %384, %383 : vector<1x128xf32>
    %386 = arith.divf %384, %385 : vector<1x128xf32>
    %387 = arith.mulf %386, %284 : vector<1x128xf32>
    %388 = arith.subf %387, %287 : vector<1x128xf32>
    %389 = vector.extract_strided_slice %388 {offsets = [0, 0], sizes = [1, 32], strides = [1, 1]} : vector<1x128xf32> to vector<1x32xf32>
    %390 = vector.extract_strided_slice %388 {offsets = [0, 32], sizes = [1, 32], strides = [1, 1]} : vector<1x128xf32> to vector<1x32xf32>
    %391 = vector.extract_strided_slice %388 {offsets = [0, 64], sizes = [1, 32], strides = [1, 1]} : vector<1x128xf32> to vector<1x32xf32>
    %392 = vector.extract_strided_slice %388 {offsets = [0, 96], sizes = [1, 32], strides = [1, 1]} : vector<1x128xf32> to vector<1x32xf32>
    %393 = arith.mulf %390, %377 : vector<1x32xf32>
    %394 = arith.mulf %389, %391 : vector<1x32xf32>
    %395 = arith.addf %393, %394 : vector<1x32xf32>
    %396 = math.tanh %395 : vector<1x32xf32>
    %397 = arith.mulf %392, %396 : vector<1x32xf32>
    %398 = tpu.concatenate %307, %325, %343, %361, %379, %397 in 0 : vector<1x32xf32>, vector<1x32xf32>, vector<1x32xf32>, vector<1x32xf32>, vector<1x32xf32>, vector<1x32xf32> -> vector<6x32xf32>
    %cst_65 = arith.constant dense<0.000000e+00> : vector<6x128xf32>
    %399 = tpu.matmul %398, %10, %cst_65 {dimension_numbers = #tpu.dot_dimension_numbers<[1], [0], [0], [1], [0, 0, 1, 1], [], []>} : vector<6x32xf32>, vector<32x128xf32>, vector<6x128xf32> -> vector<6x128xf32>
    %400 = vector.broadcast %11 : vector<1x128xf32> to vector<6x128xf32>
    %401 = arith.addf %399, %400 : vector<6x128xf32>
    %cst_66 = arith.constant dense<0xFF800000> : vector<6xf32>
    %402 = vector.multi_reduction <maximumf>, %401, %cst_66 [1] : vector<6x128xf32> to vector<6xf32>
    %403 = vector.shape_cast %402 : vector<6xf32> to vector<6x1xf32>
    %404 = vector.broadcast %403 : vector<6x1xf32> to vector<6x128xf32>
    %405 = arith.subf %401, %404 : vector<6x128xf32>
    %406 = math.exp %405 : vector<6x128xf32>
    %cst_67 = arith.constant dense<0.000000e+00> : vector<6xf32>
    %407 = vector.multi_reduction <add>, %406, %cst_67 [1] : vector<6x128xf32> to vector<6xf32>
    %408 = vector.shape_cast %407 : vector<6xf32> to vector<6x1xf32>
    %409 = math.log %408 : vector<6x1xf32>
    %410 = arith.addf %403, %409 : vector<6x1xf32>
    %411 = vector.broadcast %410 : vector<6x1xf32> to vector<6x128xf32>
    %412 = arith.subf %401, %411 : vector<6x128xf32>
    %c0_68 = arith.constant 0 : index
    %c0_69 = arith.constant 0 : index
    %413 = vector.load %arg12[%c0_68, %c0_69] : memref<6x128xf32, #tpu.memory_space<vmem>>, vector<6x128xf32>
    tpu.vector_store %arg12[%c0_68, %c0_69], %412 {strides = array<i32>} : memref<6x128xf32, #tpu.memory_space<vmem>>, vector<6x128xf32>,
    return
  }
}

</mosaic_0001>

<llo_original>
// kernel: lstm_tagger_forward.1
$region0: #{lstm_tagger_forward.1}
  #allocation0 [shape = 'u32[]', space=smem, size = 0x4, offset = 0x4, fixed_abs, tag = 'smem constant byte address 0x4 - core index']
  #allocation1 [shape = 'u32[144,128]{1,0:T(1,128)}', space=vmem, size = 0x12000, scoped, tag = 'internal scratch']
  %s0 = inlined_call_operand.vmem [shape: s32[6,1], index: 0, kind: input, shape index: {}]
  %s1 = inlined_call_operand.vmem [shape: s32[48,1], index: 1, kind: input, shape index: {}]
  %s2 = inlined_call_operand.vmem [shape: s32[6,1], index: 2, kind: input, shape index: {}]
  %s3 = inlined_call_operand.vmem [shape: f32[30,64], index: 3, kind: input, shape index: {}]
  %s4 = inlined_call_operand.hbm [shape: f32[16,64], index: 4, kind: input, shape index: {}]
  %s5 = inlined_call_operand.hbm [shape: f32[1,64], index: 5, kind: input, shape index: {}]
  %s6 = inlined_call_operand.vmem [shape: f32[20,128], index: 6, kind: input, shape index: {}]
  %s7 = inlined_call_operand.hbm [shape: f32[16,128], index: 7, kind: input, shape index: {}]
  %s8 = inlined_call_operand.vmem [shape: f32[32,128], index: 8, kind: input, shape index: {}]
  %s9 = inlined_call_operand.hbm [shape: f32[1,128], index: 9, kind: input, shape index: {}]
  %s10 = inlined_call_operand.vmem [shape: f32[32,128], index: 10, kind: input, shape index: {}]
  %s11 = inlined_call_operand.hbm [shape: f32[1,128], index: 11, kind: input, shape index: {}]
  %s12 = inlined_call_operand.hbm [shape: f32[6,128], index: 12, kind: output, shape index: {}]
  %s13 = sld [smem:[#allocation0]]
  $region78: #{lstm_tagger_forward.1} parent=0
    _
  %s15 = ssub.s32 1, %s13
  %s16 = scalar_select 0, %s15, %s13
  $region1: #{lstm_tagger_forward.1} parent=0
    #allocation2 [shape = 'u8[8192]{0}', space=vmem, size = 0x2000, scoped, tag = 'input window, operand 4, single buffered']
    #allocation3 [shape = 's32[1]{0}', space=sflag, size = 0x4, scoped, tag = 'scoped memory for lstm_tagger_forward.1']
    #allocation4 [shape = 's32[1]{0}', space=sflag, size = 0x4, scoped, tag = 'scoped memory for lstm_tagger_forward.1']
    #allocation5 [shape = 'u8[512]{0}', space=vmem, size = 0x400, scoped, tag = 'input window, operand 5, single buffered']
    #allocation6 [shape = 's32[1]{0}', space=sflag, size = 0x4, scoped, tag = 'scoped memory for lstm_tagger_forward.1']
    #allocation7 [shape = 'u8[8192]{0}', space=vmem, size = 0x2000, scoped, tag = 'input window, operand 7, single buffered']
    #allocation8 [shape = 'u8[512]{0}', space=vmem, size = 0x400, scoped, tag = 'input window, operand 9, single buffered']
    #allocation9 [shape = 's32[1]{0}', space=sflag, size = 0x4, scoped, tag = 'scoped memory for lstm_tagger_forward.1']
    #allocation10 [shape = 'u8[512]{0}', space=vmem, size = 0x400, scoped, tag = 'input window, operand 11, single buffered']
    #allocation11 [shape = 'u8[4096]{0}', space=vmem, size = 0x1000, scoped, tag = 'output window, operand 0, single buffered']
    %17 = vsyncpa [#allocation3], 0
    %18 = vsyncpa [#allocation6], 0
    %19 = vsyncpa [#allocation9], 0
    %20 = vsyncpa [#allocation4], 0
    // Predicated region
    $region2: #{lstm_tagger_forward.1} parent=1 // pred_check
      _
    $region3: #{lstm_tagger_forward.1} parent=1 // pred_check_branch
      %22 = sbr.rel (0) target = $region5
    $region4: #{lstm_tagger_forward.1} parent=1 // pred_region
      _
    $region5: #{lstm_tagger_forward.1} parent=1 // pred_fallthru
      _
    // Predicated region
    $region6: #{lstm_tagger_forward.1} parent=1 // pred_check
      _
    $region7: #{lstm_tagger_forward.1} parent=1 // pred_check_branch
      %24 = sbr.rel (0) target = $region9
    $region8: #{lstm_tagger_forward.1} parent=1 // pred_region
      _
    $region9: #{lstm_tagger_forward.1} parent=1 // pred_fallthru
      _
    // Predicated region
    $region10: #{lstm_tagger_forward.1} parent=1 // pred_check
      _
    $region11: #{lstm_tagger_forward.1} parent=1 // pred_check_branch
      %26 = sbr.rel (0) target = $region13
    $region12: #{lstm_tagger_forward.1} parent=1 // pred_region
      _
    $region13: #{lstm_tagger_forward.1} parent=1 // pred_fallthru
      _
    // Predicated region
    $region14: #{lstm_tagger_forward.1} parent=1 // pred_check
      _
    $region15: #{lstm_tagger_forward.1} parent=1 // pred_check_branch
      %28 = sbr.rel (0) target = $region17
    $region16: #{lstm_tagger_forward.1} parent=1 // pred_region
      _
    $region17: #{lstm_tagger_forward.1} parent=1 // pred_fallthru
      _
    // Predicated region
    $region18: #{lstm_tagger_forward.1} parent=1 // pred_check
      _
    $region19: #{lstm_tagger_forward.1} parent=1 // pred_check_branch
      %30 = sbr.rel (0) target = $region21
    $region20: #{lstm_tagger_forward.1} parent=1 // pred_region
      %s32 = ssub.s32 256, 256
      %33 = vsyncadd [#allocation3], %s32
      %s34 = sshll.u32 [#allocation2], 4
      %s35 = int_to_ptr.vmem [resolvable:$true] %s34
      %40 = dma.hbm_to_vmem [thread:$0]  %s4, 256, %s35, [#allocation3], 128, 128, 8
    $region21: #{lstm_tagger_forward.1} parent=1 // pred_fallthru
      _
    // Predicated region
    $region22: #{lstm_tagger_forward.1} parent=1 // pred_check
      _
    $region23: #{lstm_tagger_forward.1} parent=1 // pred_check_branch
      %42 = sbr.rel (0) target = $region25
    $region24: #{lstm_tagger_forward.1} parent=1 // pred_region
      %s44 = ssub.s32 16, 16
      %45 = vsyncadd [#allocation6], %s44
      %s47 = sshll.u32 [#allocation5], 4
      %s48 = int_to_ptr.vmem [resolvable:$true] %s47
      %50 = dma.hbm_to_vmem [thread:$0]  %s5, 16, %s48, [#allocation6]
    $region25: #{lstm_tagger_forward.1} parent=1 // pred_fallthru
      _
    // Predicated region
    $region26: #{lstm_tagger_forward.1} parent=1 // pred_check
      _
    $region27: #{lstm_tagger_forward.1} parent=1 // pred_check_branch
      %52 = sbr.rel (0) target = $region29
    $region28: #{lstm_tagger_forward.1} parent=1 // pred_region
      _
    $region29: #{lstm_tagger_forward.1} parent=1 // pred_fallthru
      _
    // Predicated region
    $region30: #{lstm_tagger_forward.1} parent=1 // pred_check
      _
    $region31: #{lstm_tagger_forward.1} parent=1 // pred_check_branch
      %54 = sbr.rel (0) target = $region33
    $region32: #{lstm_tagger_forward.1} parent=1 // pred_region
      %s56 = ssub.s32 256, 256
      %57 = vsyncadd [#allocation6], %s56
      %s58 = sshll.u32 [#allocation7], 4
      %s59 = int_to_ptr.vmem [resolvable:$true] %s58
      %64 = dma.hbm_to_vmem [thread:$0]  %s7, 256, %s59, [#allocation6], 128, 128, 8
    $region33: #{lstm_tagger_forward.1} parent=1 // pred_fallthru
      _
    // Predicated region
    $region34: #{lstm_tagger_forward.1} parent=1 // pred_check
      _
    $region35: #{lstm_tagger_forward.1} parent=1 // pred_check_branch
      %66 = sbr.rel (0) target = $region37
    $region36: #{lstm_tagger_forward.1} parent=1 // pred_region
      _
    $region37: #{lstm_tagger_forward.1} parent=1 // pred_fallthru
      _
    // Predicated region
    $region38: #{lstm_tagger_forward.1} parent=1 // pred_check
      _
    $region39: #{lstm_tagger_forward.1} parent=1 // pred_check_branch
      %68 = sbr.rel (0) target = $region41
    $region40: #{lstm_tagger_forward.1} parent=1 // pred_region
      %s70 = ssub.s32 16, 16
      %71 = vsyncadd [#allocation9], %s70
      %s73 = sshll.u32 [#allocation8], 4
      %s74 = int_to_ptr.vmem [resolvable:$true] %s73
      %76 = dma.hbm_to_vmem [thread:$0]  %s9, 16, %s74, [#allocation9]
    $region41: #{lstm_tagger_forward.1} parent=1 // pred_fallthru
      _
    // Predicated region
    $region42: #{lstm_tagger_forward.1} parent=1 // pred_check
      _
    $region43: #{lstm_tagger_forward.1} parent=1 // pred_check_branch
      %78 = sbr.rel (0) target = $region45
    $region44: #{lstm_tagger_forward.1} parent=1 // pred_region
      _
    $region45: #{lstm_tagger_forward.1} parent=1 // pred_fallthru
      _
    // Predicated region
    $region46: #{lstm_tagger_forward.1} parent=1 // pred_check
      _
    $region47: #{lstm_tagger_forward.1} parent=1 // pred_check_branch
      %80 = sbr.rel (0) target = $region49
    $region48: #{lstm_tagger_forward.1} parent=1 // pred_region
      %s82 = ssub.s32 16, 16
      %83 = vsyncadd [#allocation9], %s82
      %s85 = sshll.u32 [#allocation10], 4
      %s86 = int_to_ptr.vmem [resolvable:$true] %s85
      %88 = dma.hbm_to_vmem [thread:$0]  %s11, 16, %s86, [#allocation9]
    $region49: #{lstm_tagger_forward.1} parent=1 // pred_fallthru
      _
    // Predicated region
    $region50: #{lstm_tagger_forward.1} parent=1 // pred_check
      _
    $region51: #{lstm_tagger_forward.1} parent=1 // pred_check_branch
      %90 = sbr.rel (0) target = $region53
    $region52: #{lstm_tagger_forward.1} parent=1 // pred_region
      %91 = dma.done [#allocation3], 256
    $region53: #{lstm_tagger_forward.1} parent=1 // pred_fallthru
      _
    // Predicated region
    $region54: #{lstm_tagger_forward.1} parent=1 // pred_check
      _
    $region55: #{lstm_tagger_forward.1} parent=1 // pred_check_branch
      %93 = sbr.rel (0) target = $region57
    $region56: #{lstm_tagger_forward.1} parent=1 // pred_region
      %94 = dma.done [#allocation6], 16
    $region57: #{lstm_tagger_forward.1} parent=1 // pred_fallthru
      _
    // Predicated region
    $region58: #{lstm_tagger_forward.1} parent=1 // pred_check
      _
    $region59: #{lstm_tagger_forward.1} parent=1 // pred_check_branch
      %96 = sbr.rel (0) target = $region61
    $region60: #{lstm_tagger_forward.1} parent=1 // pred_region
      %97 = dma.done [#allocation6], 256
    $region61: #{lstm_tagger_forward.1} parent=1 // pred_fallthru
      _
    // Predicated region
    $region62: #{lstm_tagger_forward.1} parent=1 // pred_check
      _
    $region63: #{lstm_tagger_forward.1} parent=1 // pred_check_branch
      %99 = sbr.rel (0) target = $region65
    $region64: #{lstm_tagger_forward.1} parent=1 // pred_region
      %100 = dma.done [#allocation9], 16
    $region65: #{lstm_tagger_forward.1} parent=1 // pred_fallthru
      _
    // Predicated region
    $region66: #{lstm_tagger_forward.1} parent=1 // pred_check
      _
    $region67: #{lstm_tagger_forward.1} parent=1 // pred_check_branch
      %102 = sbr.rel (0) target = $region69
    $region68: #{lstm_tagger_forward.1} parent=1 // pred_region
      %103 = dma.done [#allocation9], 16
    $region69: #{lstm_tagger_forward.1} parent=1 // pred_fallthru
      _
    %v104 = vld [vmem:[%s0] sm:$0x3f]
    %v105 = vld [vmem:[%s1] sm:$0xff]
    %v106 = vld [vmem:[%s1 + $0x8] sm:$0xff]
    %v107 = vld [vmem:[%s1 + $0x10] sm:$0xff]
    %v108 = vld [vmem:[%s1 + $0x18] sm:$0xff]
    %v109 = vld [vmem:[%s1 + $0x20] sm:$0xff]
    %v110 = vld [vmem:[%s1 + $0x28] sm:$0xff]
    %v111 = vld [vmem:[%s2] sm:$0x3f]
    %v112 = vld [vmem:[%s3] sm:$0xff]
    %v113 = vld [vmem:[%s3 + $0x8] sm:$0xff]
    %v114 = vld [vmem:[%s3 + $0x10] sm:$0xff]
    %v115 = vld [vmem:[%s3 + $0x18] sm:$0x3f]
    %v116 = vld [vmem:[#allocation2] sm:$0xff]
    %v117 = vld [vmem:[#allocation2 + $0x8] sm:$0xff]
    %v118 = vld [vmem:[#allocation5] sm:$0x1]
    %v119 = vld [vmem:[%s6] sm:$0xff]
    %v120 = vld [vmem:[%s6 + $0x8] sm:$0xff]
    %v121 = vld [vmem:[%s6 + $0x10] sm:$0xf]
    %v122 = vld [vmem:[#allocation7] sm:$0xff]
    %v123 = vld [vmem:[#allocation7 + $0x8] sm:$0xff]
    %v124 = vld [vmem:[%s8] sm:$0xff]
    %v125 = vld [vmem:[%s8 + $0x8] sm:$0xff]
    %v126 = vld [vmem:[%s8 + $0x10] sm:$0xff]
    %v127 = vld [vmem:[%s8 + $0x18] sm:$0xff]
    %v128 = vld [vmem:[#allocation8] sm:$0x1]
    %v129 = vld [vmem:[%s10] sm:$0xff]
    %v130 = vld [vmem:[%s10 + $0x8] sm:$0xff]
    %v131 = vld [vmem:[%s10 + $0x10] sm:$0xff]
    %v132 = vld [vmem:[%s10 + $0x18] sm:$0xff]
    %v133 = vld [vmem:[#allocation10] sm:$0x1]
    %v134 = vlaneseq
    %v135 = vand.u32 %v134, 127
    %136 = vset.pattern.permute.xlu0 0
    %137 = vperm.xlu0 %136, %v105
    %v138 = vpop.permute.xlu0 %137
    %139 = vset.pattern.permute.xlu0 0
    %140 = vperm.xlu0 %139, %v106
    %v141 = vpop.permute.xlu0 %140
    %142 = vset.pattern.permute.xlu0 0
    %143 = vperm.xlu0 %142, %v107
    %v144 = vpop.permute.xlu0 %143
    %145 = vset.pattern.permute.xlu0 0
    %146 = vperm.xlu0 %145, %v108
    %v147 = vpop.permute.xlu0 %146
    %148 = vset.pattern.permute.xlu0 0
    %149 = vperm.xlu0 %148, %v109
    %v150 = vpop.permute.xlu0 %149
    %151 = vset.pattern.permute.xlu0 0
    %152 = vperm.xlu0 %151, %v110
    %v153 = vpop.permute.xlu0 %152
    %vm154 = vcmp.eq.s32.totalorder %v138, %v135
    %vm155 = vcmp.eq.s32.totalorder %v141, %v135
    %vm156 = vcmp.eq.s32.totalorder %v144, %v135
    %vm157 = vcmp.eq.s32.totalorder %v147, %v135
    %vm158 = vcmp.eq.s32.totalorder %v150, %v135
    %vm159 = vcmp.eq.s32.totalorder %v153, %v135
    %v160 = vsel %vm154, 1, 0
    %v161 = vsel %vm155, 1, 0
    %v162 = vsel %vm156, 1, 0
    %v163 = vsel %vm157, 1, 0
    %v164 = vsel %vm158, 1, 0
    %v165 = vsel %vm159, 1, 0
    %v166 = vcvt.s32.f32 %v160
    %v167 = vcvt.s32.f32 %v161
    %v168 = vcvt.s32.f32 %v162
    %v169 = vcvt.s32.f32 %v163
    %v170 = vcvt.s32.f32 %v164
    %v171 = vcvt.s32.f32 %v165
    %v173 = vlaneseq
    %v174 = vshrl.u32 %v173, 7
    %v175 = vsub.s32 0, %v174
    %v176 = vrot.slane %v118, %v175
    %vm178 = vcmask 244736
    %v180 = vsel %vm178, %v166, 0
    %v183 = vsel %vm178, %v167, 0
    %v186 = vsel %vm178, %v168, 0
    %v189 = vsel %vm178, %v169, 0
    %v192 = vsel %vm178, %v170, 0
    %v195 = vsel %vm178, %v171, 0
    %vm197 = vcmask 1045504
    %v199 = vsel %vm197, %v115, 0
    %201 = vmatprep.subr.mxu0 0.0
    %v202 = vand.u32 %v112, 4294901760
    %203 = vmatpush1.msra.mxu0 %v202
    %204 = vmatprep.subr.mxu0 0.0
    %v205 = vand.u32 %v113, 4294901760
    %206 = vmatpush1.msra.mxu0 %v205
    %207 = vmatprep.subr.mxu0 0.0
    %v208 = vand.u32 %v114, 4294901760
    %209 = vmatpush1.msra.mxu0 %v208
    %210 = vmatprep.subr.mxu0 0.0
    %v211 = vand.u32 %v199, 4294901760
    %212 = vmatpush1.msra.mxu0 %v211
    %213 = vmatprep.subr.mxu0 0.0
    %214 = vmatpush1.msra.mxu0 0.0
    %215 = vmatprep.subr.mxu0 0.0
    %216 = vmatpush1.msra.mxu0 0.0
    %217 = vmatprep.subr.mxu0 0.0
    %218 = vmatpush1.msra.mxu0 0.0
    %219 = vmatprep.subr.mxu0 0.0
    %220 = vmatpush1.msra.mxu0 0.0
    %221 = vmatprep.subr.mxu0 0.0
    %222 = vmatpush1.msra.mxu0 0.0
    %223 = vmatprep.subr.mxu0 0.0
    %224 = vmatpush1.msra.mxu0 0.0
    %225 = vmatprep.subr.mxu0 0.0
    %226 = vmatpush1.msra.mxu0 0.0
    %227 = vmatprep.subr.mxu0 0.0
    %228 = vmatpush1.msra.mxu0 0.0
    %229 = vmatprep.subr.mxu0 0.0
    %230 = vmatpush1.msra.mxu0 0.0
    %231 = vmatprep.subr.mxu0 0.0
    %232 = vmatpush1.msra.mxu0 0.0
    %233 = vmatprep.subr.mxu0 0.0
    %234 = vmatpush1.msra.mxu0 0.0
    %235 = vmatprep.subr.mxu0 0.0
    %236 = vmatpush1.msra.mxu0 0.0
    %237 = vmatprep.subr.mxu0 0.0
    %238 = vmatpush1.msra.mxu0 0.0
    %239 = vmatprep.subr.mxu0 0.0
    %240 = vmatpush1.msra.mxu0 0.0
    %241 = vmatprep.subr.mxu0 0.0
    %242 = vmatpush1.msra.mxu0 0.0
    %243 = vmatprep.subr.mxu0 0.0
    %244 = vmatpush1.msra.mxu0 0.0
    %245 = vmatprep.subr.mxu0 0.0
    %246 = vmatpush1.msra.mxu0 0.0
    %247 = vmatprep.subr.mxu0 0.0
    %248 = vmatpush1.msra.mxu0 0.0
    %249 = vmatprep.subr.mxu0 0.0
    %250 = vmatpush1.msra.mxu0 0.0
    %251 = vmatprep.subr.mxu0 0.0
    %252 = vmatpush1.msra.mxu0 0.0
    %253 = vmatprep.subr.mxu0 0.0
    %254 = vmatpush1.msra.mxu0 0.0
    %255 = vmatprep.subr.mxu0 0.0
    %256 = vmatpush1.msra.mxu0 0.0
    %257 = vmatprep.subr.mxu0 0.0
    %258 = vmatpush1.msra.mxu0 0.0
    %259 = vmatprep.subr.mxu0 0.0
    %260 = vmatpush1.msra.mxu0 0.0
    %261 = vmatprep.subr.mxu0 0.0
    %262 = vmatpush1.msra.mxu0 0.0
    %263 = vmatprep.subr.mxu0 0.0
    %264 = vmatpush1.msra.mxu0 0.0
    %265 = vmatprep.subr.mxu0 0.0
    %266 = vmatpush1.msra.mxu0 0.0
    %267 = vmatprep.subr.mxu0 0.0
    %268 = vmatpush1.msra.mxu0 0.0
    %269 = vmatprep.mubr.f32.mxu0 0.0
    %v270 = vand.u32 %v180, 4294901760
    %v271 = vsub.f32 %v180, %v270
    %v272 = vand.u32 %v271, 4294901760
    %v273 = vsub.f32 %v271, %v272
    %v274 = vand.u32 %v273, 4294901760
    %275 = vmatmul.mubr.f32.gmra.mrb[0].mxu0 %v274
    %v276 = vpop.f32.mrb[0].mxu0
    %v277 = vadd.f32 %v176, %v276
    %v278 = vpop.f32.mrb[0].mxu0
    %279 = vmatprep.mubr.f32.mxu0 0.0
    %v280 = vand.u32 %v183, 4294901760
    %v281 = vsub.f32 %v183, %v280
    %v282 = vand.u32 %v281, 4294901760
    %v283 = vsub.f32 %v281, %v282
    %v284 = vand.u32 %v283, 4294901760
    %285 = vmatmul.mubr.f32.gmra.mrb[0].mxu0 %v284
    %v286 = vpop.f32.mrb[0].mxu0
    %v287 = vadd.f32 %v176, %v286
    %v288 = vpop.f32.mrb[0].mxu0
    %289 = vmatprep.mubr.f32.mxu0 0.0
    %v290 = vand.u32 %v186, 4294901760
    %v291 = vsub.f32 %v186, %v290
    %v292 = vand.u32 %v291, 4294901760
    %v293 = vsub.f32 %v291, %v292
    %v294 = vand.u32 %v293, 4294901760
    %295 = vmatmul.mubr.f32.gmra.mrb[0].mxu0 %v294
    %v296 = vpop.f32.mrb[0].mxu0
    %v297 = vadd.f32 %v176, %v296
    %v298 = vpop.f32.mrb[0].mxu0
    %299 = vmatprep.mubr.f32.mxu0 0.0
    %v300 = vand.u32 %v189, 4294901760
    %v301 = vsub.f32 %v189, %v300
    %v302 = vand.u32 %v301, 4294901760
    %v303 = vsub.f32 %v301, %v302
    %v304 = vand.u32 %v303, 4294901760
    %305 = vmatmul.mubr.f32.gmra.mrb[0].mxu0 %v304
    %v306 = vpop.f32.mrb[0].mxu0
    %v307 = vadd.f32 %v176, %v306
    %v308 = vpop.f32.mrb[0].mxu0
    %309 = vmatprep.mubr.f32.mxu0 0.0
    %v310 = vand.u32 %v192, 4294901760
    %v311 = vsub.f32 %v192, %v310
    %v312 = vand.u32 %v311, 4294901760
    %v313 = vsub.f32 %v311, %v312
    %v314 = vand.u32 %v313, 4294901760
    %315 = vmatmul.mubr.f32.gmra.mrb[0].mxu0 %v314
    %v316 = vpop.f32.mrb[0].mxu0
    %v317 = vadd.f32 %v176, %v316
    %v318 = vpop.f32.mrb[0].mxu0
    %319 = vmatprep.mubr.f32.mxu0 0.0
    %v320 = vand.u32 %v195, 4294901760
    %v321 = vsub.f32 %v195, %v320
    %v322 = vand.u32 %v321, 4294901760
    %v323 = vsub.f32 %v321, %v322
    %v324 = vand.u32 %v323, 4294901760
    %325 = vmatmul.mubr.f32.gmra.mrb[0].mxu0 %v324
    %v326 = vpop.f32.mrb[0].mxu0
    %v327 = vadd.f32 %v176, %v326
    %v328 = vpop.f32.mrb[0].mxu0
    %329 = vdwg.mxu0
    %330 = vmatprep.subr.mxu0 0.0
    %v331 = vand.u32 %v112, 4294901760
    %v332 = vsub.f32 %v112, %v331
    %v333 = vand.u32 %v332, 4294901760
    %v334 = vsub.f32 %v332, %v333
    %v335 = vand.u32 %v334, 4294901760
    %336 = vmatpush1.msra.mxu0 %v335
    %337 = vmatprep.subr.mxu0 0.0
    %v338 = vand.u32 %v113, 4294901760
    %v339 = vsub.f32 %v113, %v338
    %v340 = vand.u32 %v339, 4294901760
    %v341 = vsub.f32 %v339, %v340
    %v342 = vand.u32 %v341, 4294901760
    %343 = vmatpush1.msra.mxu0 %v342
    %344 = vmatprep.subr.mxu0 0.0
    %v345 = vand.u32 %v114, 4294901760
    %v346 = vsub.f32 %v114, %v345
    %v347 = vand.u32 %v346, 4294901760
    %v348 = vsub.f32 %v346, %v347
    %v349 = vand.u32 %v348, 4294901760
    %350 = vmatpush1.msra.mxu0 %v349
    %351 = vmatprep.subr.mxu0 0.0
    %v352 = vand.u32 %v199, 4294901760
    %v353 = vsub.f32 %v199, %v352
    %v354 = vand.u32 %v353, 4294901760
    %v355 = vsub.f32 %v353, %v354
    %v356 = vand.u32 %v355, 4294901760
    %357 = vmatpush1.msra.mxu0 %v356
    %358 = vmatprep.subr.mxu0 0.0
    %359 = vmatpush1.msra.mxu0 0.0
    %360 = vmatprep.subr.mxu0 0.0
    %361 = vmatpush1.msra.mxu0 0.0
    %362 = vmatprep.subr.mxu0 0.0
    %363 = vmatpush1.msra.mxu0 0.0
    %364 = vmatprep.subr.mxu0 0.0
    %365 = vmatpush1.msra.mxu0 0.0
    %366 = vmatprep.subr.mxu0 0.0
    %367 = vmatpush1.msra.mxu0 0.0
    %368 = vmatprep.subr.mxu0 0.0
    %369 = vmatpush1.msra.mxu0 0.0
    %370 = vmatprep.subr.mxu0 0.0
    %371 = vmatpush1.msra.mxu0 0.0
    %372 = vmatprep.subr.mxu0 0.0
    %373 = vmatpush1.msra.mxu0 0.0
    %374 = vmatprep.subr.mxu0 0.0
    %375 = vmatpush1.msra.mxu0 0.0
    %376 = vmatprep.subr.mxu0 0.0
    %377 = vmatpush1.msra.mxu0 0.0
    %378 = vmatprep.subr.mxu0 0.0
    %379 = vmatpush1.msra.mxu0 0.0
    %380 = vmatprep.subr.mxu0 0.0
    %381 = vmatpush1.msra.mxu0 0.0
    %382 = vmatprep.subr.mxu0 0.0
    %383 = vmatpush1.msra.mxu0 0.0
    %384 = vmatprep.subr.mxu0 0.0
    %385 = vmatpush1.msra.mxu0 0.0
    %386 = vmatprep.subr.mxu0 0.0
    %387 = vmatpush1.msra.mxu0 0.0
    %388 = vmatprep.subr.mxu0 0.0
    %389 = vmatpush1.msra.mxu0 0.0
    %390 = vmatprep.subr.mxu0 0.0
    %391 = vmatpush1.msra.mxu0 0.0
    %392 = vmatprep.subr.mxu0 0.0
    %393 = vmatpush1.msra.mxu0 0.0
    %394 = vmatprep.subr.mxu0 0.0
    %395 = vmatpush1.msra.mxu0 0.0
    %396 = vmatprep.subr.mxu0 0.0
    %397 = vmatpush1.msra.mxu0 0.0
    %398 = vmatprep.subr.mxu0 0.0
    %399 = vmatpush1.msra.mxu0 0.0
    %400 = vmatprep.subr.mxu0 0.0
    %401 = vmatpush1.msra.mxu0 0.0
    %402 = vmatprep.subr.mxu0 0.0
    %403 = vmatpush1.msra.mxu0 0.0
    %404 = vmatprep.subr.mxu0 0.0
    %405 = vmatpush1.msra.mxu0 0.0
    %406 = vmatprep.subr.mxu0 0.0
    %407 = vmatpush1.msra.mxu0 0.0
    %408 = vmatprep.subr.mxu0 0.0
    %409 = vmatpush1.msra.mxu0 0.0
    %410 = vmatprep.subr.mxu0 0.0
    %411 = vmatpush1.msra.mxu0 0.0
    %412 = vmatprep.subr.mxu0 0.0
    %413 = vmatpush1.msra.mxu0 0.0
    %414 = vmatprep.mubr.f32.mxu0 0.0
    %v415 = vand.u32 %v180, 4294901760
    %416 = vmatmul.mubr.f32.gmra.mrb[0].mxu0 %v415
    %v417 = vpop.f32.mrb[0].mxu0
    %v418 = vadd.f32 %v277, %v417
    %v419 = vpop.f32.mrb[0].mxu0
    %420 = vmatprep.mubr.f32.mxu0 0.0
    %v421 = vand.u32 %v183, 4294901760
    %422 = vmatmul.mubr.f32.gmra.mrb[0].mxu0 %v421
    %v423 = vpop.f32.mrb[0].mxu0
    %v424 = vadd.f32 %v287, %v423
    %v425 = vpop.f32.mrb[0].mxu0
    %426 = vmatprep.mubr.f32.mxu0 0.0
    %v427 = vand.u32 %v186, 4294901760
    %428 = vmatmul.mubr.f32.gmra.mrb[0].mxu0 %v427
    %v429 = vpop.f32.mrb[0].mxu0
    %v430 = vadd.f32 %v297, %v429
    %v431 = vpop.f32.mrb[0].mxu0
    %432 = vmatprep.mubr.f32.mxu0 0.0
    %v433 = vand.u32 %v189, 4294901760
    %434 = vmatmul.mubr.f32.gmra.mrb[0].mxu0 %v433
    %v435 = vpop.f32.mrb[0].mxu0
    %v436 = vadd.f32 %v307, %v435
    %v437 = vpop.f32.mrb[0].mxu0
    %438 = vmatprep.mubr.f32.mxu0 0.0
    %v439 = vand.u32 %v192, 4294901760
    %440 = vmatmul.mubr.f32.gmra.mrb[0].mxu0 %v439
    %v441 = vpop.f32.mrb[0].mxu0
    %v442 = vadd.f32 %v317, %v441
    %v443 = vpop.f32.mrb[0].mxu0
    %444 = vmatprep.mubr.f32.mxu0 0.0
    %v445 = vand.u32 %v195, 4294901760
    %446 = vmatmul.mubr.f32.gmra.mrb[0].mxu0 %v445
    %v447 = vpop.f32.mrb[0].mxu0
    %v448 = vadd.f32 %v327, %v447
    %v449 = vpop.f32.mrb[0].mxu0
    %450 = vdwg.mxu0
    %451 = vmatprep.subr.mxu0 0.0
    %v452 = vand.u32 %v112, 4294901760
    %v453 = vsub.f32 %v112, %v452
    %454 = vmatpush1.msra.mxu0 %v453
    %455 = vmatprep.subr.mxu0 0.0
    %v456 = vand.u32 %v113, 4294901760
    %v457 = vsub.f32 %v113, %v456
    %458 = vmatpush1.msra.mxu0 %v457
    %459 = vmatprep.subr.mxu0 0.0
    %v460 = vand.u32 %v114, 4294901760
    %v461 = vsub.f32 %v114, %v460
    %462 = vmatpush1.msra.mxu0 %v461
    %463 = vmatprep.subr.mxu0 0.0
    %v464 = vand.u32 %v199, 4294901760
    %v465 = vsub.f32 %v199, %v464
    %466 = vmatpush1.msra.mxu0 %v465
    %467 = vmatprep.subr.mxu0 0.0
    %468 = vmatpush1.msra.mxu0 0.0
    %469 = vmatprep.subr.mxu0 0.0
    %470 = vmatpush1.msra.mxu0 0.0
    %471 = vmatprep.subr.mxu0 0.0
    %472 = vmatpush1.msra.mxu0 0.0
    %473 = vmatprep.subr.mxu0 0.0
    %474 = vmatpush1.msra.mxu0 0.0
    %475 = vmatprep.subr.mxu0 0.0
    %476 = vmatpush1.msra.mxu0 0.0
    %477 = vmatprep.subr.mxu0 0.0
    %478 = vmatpush1.msra.mxu0 0.0
    %479 = vmatprep.subr.mxu0 0.0
    %480 = vmatpush1.msra.mxu0 0.0
    %481 = vmatprep.subr.mxu0 0.0
    %482 = vmatpush1.msra.mxu0 0.0
    %483 = vmatprep.subr.mxu0 0.0
    %484 = vmatpush1.msra.mxu0 0.0
    %485 = vmatprep.subr.mxu0 0.0
    %486 = vmatpush1.msra.mxu0 0.0
    %487 = vmatprep.subr.mxu0 0.0
    %488 = vmatpush1.msra.mxu0 0.0
    %489 = vmatprep.subr.mxu0 0.0
    %490 = vmatpush1.msra.mxu0 0.0
    %491 = vmatprep.subr.mxu0 0.0
    %492 = vmatpush1.msra.mxu0 0.0
    %493 = vmatprep.subr.mxu0 0.0
    %494 = vmatpush1.msra.mxu0 0.0
    %495 = vmatprep.subr.mxu0 0.0
    %496 = vmatpush1.msra.mxu0 0.0
    %497 = vmatprep.subr.mxu0 0.0
    %498 = vmatpush1.msra.mxu0 0.0
    %499 = vmatprep.subr.mxu0 0.0
    %500 = vmatpush1.msra.mxu0 0.0
    %501 = vmatprep.subr.mxu0 0.0
    %502 = vmatpush1.msra.mxu0 0.0
    %503 = vmatprep.subr.mxu0 0.0
    %504 = vmatpush1.msra.mxu0 0.0
    %505 = vmatprep.subr.mxu0 0.0
    %506 = vmatpush1.msra.mxu0 0.0
    %507 = vmatprep.subr.mxu0 0.0
    %508 = vmatpush1.msra.mxu0 0.0
    %509 = vmatprep.subr.mxu0 0.0
    %510 = vmatpush1.msra.mxu0 0.0
    %511 = vmatprep.subr.mxu0 0.0
    %512 = vmatpush1.msra.mxu0 0.0
    %513 = vmatprep.subr.mxu0 0.0
    %514 = vmatpush1.msra.mxu0 0.0
    %515 = vmatprep.subr.mxu0 0.0
    %516 = vmatpush1.msra.mxu0 0.0
    %517 = vmatprep.subr.mxu0 0.0
    %518 = vmatpush1.msra.mxu0 0.0
    %519 = vmatprep.subr.mxu0 0.0
    %520 = vmatpush1.msra.mxu0 0.0
    %521 = vmatprep.subr.mxu0 0.0
    %522 = vmatpush1.msra.mxu0 0.0
    %523 = vmatprep.mubr.f32.mxu0 0.0
    %v524 = vand.u32 %v180, 4294901760
    %v525 = vsub.f32 %v180, %v524
    %526 = vmatmul.mubr.f32.gmra.mrb[0].mxu0 %v525
    %v527 = vpop.f32.mrb[0].mxu0
    %v528 = vadd.f32 %v418, %v527
    %v529 = vpop.f32.mrb[0].mxu0
    %530 = vmatprep.mubr.f32.mxu0 0.0
    %v531 = vand.u32 %v183, 4294901760
    %v532 = vsub.f32 %v183, %v531
    %533 = vmatmul.mubr.f32.gmra.mrb[0].mxu0 %v532
    %v534 = vpop.f32.mrb[0].mxu0
    %v535 = vadd.f32 %v424, %v534
    %v536 = vpop.f32.mrb[0].mxu0
    %537 = vmatprep.mubr.f32.mxu0 0.0
    %v538 = vand.u32 %v186, 4294901760
    %v539 = vsub.f32 %v186, %v538
    %540 = vmatmul.mubr.f32.gmra.mrb[0].mxu0 %v539
    %v541 = vpop.f32.mrb[0].mxu0
    %v542 = vadd.f32 %v430, %v541
    %v543 = vpop.f32.mrb[0].mxu0
    %544 = vmatprep.mubr.f32.mxu0 0.0
    %v545 = vand.u32 %v189, 4294901760
    %v546 = vsub.f32 %v189, %v545
    %547 = vmatmul.mubr.f32.gmra.mrb[0].mxu0 %v546
    %v548 = vpop.f32.mrb[0].mxu0
    %v549 = vadd.f32 %v436, %v548
    %v550 = vpop.f32.mrb[0].mxu0
    %551 = vmatprep.mubr.f32.mxu0 0.0
    %v552 = vand.u32 %v192, 4294901760
    %v553 = vsub.f32 %v192, %v552
    %554 = vmatmul.mubr.f32.gmra.mrb[0].mxu0 %v553
    %v555 = vpop.f32.mrb[0].mxu0
    %v556 = vadd.f32 %v442, %v555
    %v557 = vpop.f32.mrb[0].mxu0
    %558 = vmatprep.mubr.f32.mxu0 0.0
    %v559 = vand.u32 %v195, 4294901760
    %v560 = vsub.f32 %v195, %v559
    %561 = vmatmul.mubr.f32.gmra.mrb[0].mxu0 %v560
    %v562 = vpop.f32.mrb[0].mxu0
    %v563 = vadd.f32 %v448, %v562
    %v564 = vpop.f32.mrb[0].mxu0
    %565 = vdwg.mxu0
    %566 = vmatprep.subr.mxu0 0.0
    %v567 = vand.u32 %v112, 4294901760
    %568 = vmatpush1.msra.mxu0 %v567
    %569 = vmatprep.subr.mxu0 0.0
    %v570 = vand.u32 %v113, 4294901760
    %571 = vmatpush1.msra.mxu0 %v570
    %572 = vmatprep.subr.mxu0 0.0
    %v573 = vand.u32 %v114, 4294901760
    %574 = vmatpush1.msra.mxu0 %v573
    %575 = vmatprep.subr.mxu0 0.0
    %v576 = vand.u32 %v199, 4294901760
    %577 = vmatpush1.msra.mxu0 %v576
    %578 = vmatprep.subr.mxu0 0.0
    %579 = vmatpush1.msra.mxu0 0.0
    %580 = vmatprep.subr.mxu0 0.0
    %581 = vmatpush1.msra.mxu0 0.0
    %582 = vmatprep.subr.mxu0 0.0
    %583 = vmatpush1.msra.mxu0 0.0
    %584 = vmatprep.subr.mxu0 0.0
    %585 = vmatpush1.msra.mxu0 0.0
    %586 = vmatprep.subr.mxu0 0.0
    %587 = vmatpush1.msra.mxu0 0.0
    %588 = vmatprep.subr.mxu0 0.0
    %589 = vmatpush1.msra.mxu0 0.0
    %590 = vmatprep.subr.mxu0 0.0
    %591 = vmatpush1.msra.mxu0 0.0
    %592 = vmatprep.subr.mxu0 0.0
    %593 = vmatpush1.msra.mxu0 0.0
    %594 = vmatprep.subr.mxu0 0.0
    %595 = vmatpush1.msra.mxu0 0.0
    %596 = vmatprep.subr.mxu0 0.0
    %597 = vmatpush1.msra.mxu0 0.0
    %598 = vmatprep.subr.mxu0 0.0
    %599 = vmatpush1.msra.mxu0 0.0
    %600 = vmatprep.subr.mxu0 0.0
    %601 = vmatpush1.msra.mxu0 0.0
    %602 = vmatprep.subr.mxu0 0.0
    %603 = vmatpush1.msra.mxu0 0.0
    %604 = vmatprep.subr.mxu0 0.0
    %605 = vmatpush1.msra.mxu0 0.0
    %606 = vmatprep.subr.mxu0 0.0
    %607 = vmatpush1.msra.mxu0 0.0
    %608 = vmatprep.subr.mxu0 0.0
    %609 = vmatpush1.msra.mxu0 0.0
    %610 = vmatprep.subr.mxu0 0.0
    %611 = vmatpush1.msra.mxu0 0.0
    %612 = vmatprep.subr.mxu0 0.0
    %613 = vmatpush1.msra.mxu0 0.0
    %614 = vmatprep.subr.mxu0 0.0
    %615 = vmatpush1.msra.mxu0 0.0
    %616 = vmatprep.subr.mxu0 0.0
    %617 = vmatpush1.msra.mxu0 0.0
    %618 = vmatprep.subr.mxu0 0.0
    %619 = vmatpush1.msra.mxu0 0.0
    %620 = vmatprep.subr.mxu0 0.0
    %621 = vmatpush1.msra.mxu0 0.0
    %622 = vmatprep.subr.mxu0 0.0
    %623 = vmatpush1.msra.mxu0 0.0
    %624 = vmatprep.subr.mxu0 0.0
    %625 = vmatpush1.msra.mxu0 0.0
    %626 = vmatprep.subr.mxu0 0.0
    %627 = vmatpush1.msra.mxu0 0.0
    %628 = vmatprep.subr.mxu0 0.0
    %629 = vmatpush1.msra.mxu0 0.0
    %630 = vmatprep.subr.mxu0 0.0
    %631 = vmatpush1.msra.mxu0 0.0
    %632 = vmatprep.subr.mxu0 0.0
    %633 = vmatpush1.msra.mxu0 0.0
    %634 = vmatprep.mubr.f32.mxu0 0.0
    %v635 = vand.u32 %v180, 4294901760
    %v636 = vsub.f32 %v180, %v635
    %v637 = vand.u32 %v636, 4294901760
    %638 = vmatmul.mubr.f32.gmra.mrb[0].mxu0 %v637
    %v639 = vpop.f32.mrb[0].mxu0
    %v640 = vadd.f32 %v528, %v639
    %v641 = vpop.f32.mrb[0].mxu0
    %642 = vmatprep.mubr.f32.mxu0 0.0
    %v643 = vand.u32 %v183, 4294901760
    %v644 = vsub.f32 %v183, %v643
    %v645 = vand.u32 %v644, 4294901760
    %646 = vmatmul.mubr.f32.gmra.mrb[0].mxu0 %v645
    %v647 = vpop.f32.mrb[0].mxu0
    %v648 = vadd.f32 %v535, %v647
    %v649 = vpop.f32.mrb[0].mxu0
    %650 = vmatprep.mubr.f32.mxu0 0.0
    %v651 = vand.u32 %v186, 4294901760
    %v652 = vsub.f32 %v186, %v651
    %v653 = vand.u32 %v652, 4294901760
    %654 = vmatmul.mubr.f32.gmra.mrb[0].mxu0 %v653
    %v655 = vpop.f32.mrb[0].mxu0
    %v656 = vadd.f32 %v542, %v655
    %v657 = vpop.f32.mrb[0].mxu0
    %658 = vmatprep.mubr.f32.mxu0 0.0
    %v659 = vand.u32 %v189, 4294901760
    %v660 = vsub.f32 %v189, %v659
    %v661 = vand.u32 %v660, 4294901760
    %662 = vmatmul.mubr.f32.gmra.mrb[0].mxu0 %v661
    %v663 = vpop.f32.mrb[0].mxu0
    %v664 = vadd.f32 %v549, %v663
    %v665 = vpop.f32.mrb[0].mxu0
    %666 = vmatprep.mubr.f32.mxu0 0.0
    %v667 = vand.u32 %v192, 4294901760
    %v668 = vsub.f32 %v192, %v667
    %v669 = vand.u32 %v668, 4294901760
    %670 = vmatmul.mubr.f32.gmra.mrb[0].mxu0 %v669
    %v671 = vpop.f32.mrb[0].mxu0
    %v672 = vadd.f32 %v556, %v671
    %v673 = vpop.f32.mrb[0].mxu0
    %674 = vmatprep.mubr.f32.mxu0 0.0
    %v675 = vand.u32 %v195, 4294901760
    %v676 = vsub.f32 %v195, %v675
    %v677 = vand.u32 %v676, 4294901760
    %678 = vmatmul.mubr.f32.gmra.mrb[0].mxu0 %v677
    %v679 = vpop.f32.mrb[0].mxu0
    %v680 = vadd.f32 %v563, %v679
    %v681 = vpop.f32.mrb[0].mxu0
    %682 = vdwg.mxu0
    %683 = vmatprep.subr.mxu0 0.0
    %v684 = vand.u32 %v112, 4294901760
    %v685 = vsub.f32 %v112, %v684
    %v686 = vand.u32 %v685, 4294901760
    %687 = vmatpush1.msra.mxu0 %v686
    %688 = vmatprep.subr.mxu0 0.0
    %v689 = vand.u32 %v113, 4294901760
    %v690 = vsub.f32 %v113, %v689
    %v691 = vand.u32 %v690, 4294901760
    %692 = vmatpush1.msra.mxu0 %v691
    %693 = vmatprep.subr.mxu0 0.0
    %v694 = vand.u32 %v114, 4294901760
    %v695 = vsub.f32 %v114, %v694
    %v696 = vand.u32 %v695, 4294901760
    %697 = vmatpush1.msra.mxu0 %v696
    %698 = vmatprep.subr.mxu0 0.0
    %v699 = vand.u32 %v199, 4294901760
    %v700 = vsub.f32 %v199, %v699
    %v701 = vand.u32 %v700, 4294901760
    %702 = vmatpush1.msra.mxu0 %v701
    %703 = vmatprep.subr.mxu0 0.0
    %704 = vmatpush1.msra.mxu0 0.0
    %705 = vmatprep.subr.mxu0 0.0
    %706 = vmatpush1.msra.mxu0 0.0
    %707 = vmatprep.subr.mxu0 0.0
    %708 = vmatpush1.msra.mxu0 0.0
    %709 = vmatprep.subr.mxu0 0.0
    %710 = vmatpush1.msra.mxu0 0.0
    %711 = vmatprep.subr.mxu0 0.0
    %712 = vmatpush1.msra.mxu0 0.0
    %713 = vmatprep.subr.mxu0 0.0
    %714 = vmatpush1.msra.mxu0 0.0
    %715 = vmatprep.subr.mxu0 0.0
    %716 = vmatpush1.msra.mxu0 0.0
    %717 = vmatprep.subr.mxu0 0.0
    %718 = vmatpush1.msra.mxu0 0.0
    %719 = vmatprep.subr.mxu0 0.0
    %720 = vmatpush1.msra.mxu0 0.0
    %721 = vmatprep.subr.mxu0 0.0
    %722 = vmatpush1.msra.mxu0 0.0
    %723 = vmatprep.subr.mxu0 0.0
    %724 = vmatpush1.msra.mxu0 0.0
    %725 = vmatprep.subr.mxu0 0.0
    %726 = vmatpush1.msra.mxu0 0.0
    %727 = vmatprep.subr.mxu0 0.0
    %728 = vmatpush1.msra.mxu0 0.0
    %729 = vmatprep.subr.mxu0 0.0
    %730 = vmatpush1.msra.mxu0 0.0
    %731 = vmatprep.subr.mxu0 0.0
    %732 = vmatpush1.msra.mxu0 0.0
    %733 = vmatprep.subr.mxu0 0.0
    %734 = vmatpush1.msra.mxu0 0.0
    %735 = vmatprep.subr.mxu0 0.0
    %736 = vmatpush1.msra.mxu0 0.0
    %737 = vmatprep.subr.mxu0 0.0
    %738 = vmatpush1.msra.mxu0 0.0
    %739 = vmatprep.subr.mxu0 0.0
    %740 = vmatpush1.msra.mxu0 0.0
    %741 = vmatprep.subr.mxu0 0.0
    %742 = vmatpush1.msra.mxu0 0.0
    %743 = vmatprep.subr.mxu0 0.0
    %744 = vmatpush1.msra.mxu0 0.0
    %745 = vmatprep.subr.mxu0 0.0
    %746 = vmatpush1.msra.mxu0 0.0
    %747 = vmatprep.subr.mxu0 0.0
    %748 = vmatpush1.msra.mxu0 0.0
    %749 = vmatprep.subr.mxu0 0.0
    %750 = vmatpush1.msra.mxu0 0.0
    %751 = vmatprep.subr.mxu0 0.0
    %752 = vmatpush1.msra.mxu0 0.0
    %753 = vmatprep.subr.mxu0 0.0
    %754 = vmatpush1.msra.mxu0 0.0
    %755 = vmatprep.subr.mxu0 0.0
    %756 = vmatpush1.msra.mxu0 0.0
    %757 = vmatprep.subr.mxu0 0.0
    %758 = vmatpush1.msra.mxu0 0.0
    %759 = vmatprep.mubr.f32.mxu0 0.0
    %v760 = vand.u32 %v180, 4294901760
    %761 = vmatmul.mubr.f32.gmra.mrb[0].mxu0 %v760
    %v762 = vpop.f32.mrb[0].mxu0
    %v763 = vadd.f32 %v640, %v762
    %v764 = vpop.f32.mrb[0].mxu0
    %765 = vmatprep.mubr.f32.mxu0 0.0
    %v766 = vand.u32 %v183, 4294901760
    %767 = vmatmul.mubr.f32.gmra.mrb[0].mxu0 %v766
    %v768 = vpop.f32.mrb[0].mxu0
    %v769 = vadd.f32 %v648, %v768
    %v770 = vpop.f32.mrb[0].mxu0
    %771 = vmatprep.mubr.f32.mxu0 0.0
    %v772 = vand.u32 %v186, 4294901760
    %773 = vmatmul.mubr.f32.gmra.mrb[0].mxu0 %v772
    %v774 = vpop.f32.mrb[0].mxu0
    %v775 = vadd.f32 %v656, %v774
    %v776 = vpop.f32.mrb[0].mxu0
    %777 = vmatprep.mubr.f32.mxu0 0.0
    %v778 = vand.u32 %v189, 4294901760
    %779 = vmatmul.mubr.f32.gmra.mrb[0].mxu0 %v778
    %v780 = vpop.f32.mrb[0].mxu0
    %v781 = vadd.f32 %v664, %v780
    %v782 = vpop.f32.mrb[0].mxu0
    %783 = vmatprep.mubr.f32.mxu0 0.0
    %v784 = vand.u32 %v192, 4294901760
    %785 = vmatmul.mubr.f32.gmra.mrb[0].mxu0 %v784
    %v786 = vpop.f32.mrb[0].mxu0
    %v787 = vadd.f32 %v672, %v786
    %v788 = vpop.f32.mrb[0].mxu0
    %789 = vmatprep.mubr.f32.mxu0 0.0
    %v790 = vand.u32 %v195, 4294901760
    %791 = vmatmul.mubr.f32.gmra.mrb[0].mxu0 %v790
    %v792 = vpop.f32.mrb[0].mxu0
    %v793 = vadd.f32 %v680, %v792
    %v794 = vpop.f32.mrb[0].mxu0
    %795 = vdwg.mxu0
    %796 = vmatprep.subr.mxu0 0.0
    %v797 = vand.u32 %v112, 4294901760
    %798 = vmatpush1.msra.mxu0 %v797
    %799 = vmatprep.subr.mxu0 0.0
    %v800 = vand.u32 %v113, 4294901760
    %801 = vmatpush1.msra.mxu0 %v800
    %802 = vmatprep.subr.mxu0 0.0
    %v803 = vand.u32 %v114, 4294901760
    %804 = vmatpush1.msra.mxu0 %v803
    %805 = vmatprep.subr.mxu0 0.0
    %v806 = vand.u32 %v199, 4294901760
    %807 = vmatpush1.msra.mxu0 %v806
    %808 = vmatprep.subr.mxu0 0.0
    %809 = vmatpush1.msra.mxu0 0.0
    %810 = vmatprep.subr.mxu0 0.0
    %811 = vmatpush1.msra.mxu0 0.0
    %812 = vmatprep.subr.mxu0 0.0
    %813 = vmatpush1.msra.mxu0 0.0
    %814 = vmatprep.subr.mxu0 0.0
    %815 = vmatpush1.msra.mxu0 0.0
    %816 = vmatprep.subr.mxu0 0.0
    %817 = vmatpush1.msra.mxu0 0.0
    %818 = vmatprep.subr.mxu0 0.0
    %819 = vmatpush1.msra.mxu0 0.0
    %820 = vmatprep.subr.mxu0 0.0
    %821 = vmatpush1.msra.mxu0 0.0
    %822 = vmatprep.subr.mxu0 0.0
    %823 = vmatpush1.msra.mxu0 0.0
    %824 = vmatprep.subr.mxu0 0.0
    %825 = vmatpush1.msra.mxu0 0.0
    %826 = vmatprep.subr.mxu0 0.0
    %827 = vmatpush1.msra.mxu0 0.0
    %828 = vmatprep.subr.mxu0 0.0
    %829 = vmatpush1.msra.mxu0 0.0
    %830 = vmatprep.subr.mxu0 0.0
    %831 = vmatpush1.msra.mxu0 0.0
    %832 = vmatprep.subr.mxu0 0.0
    %833 = vmatpush1.msra.mxu0 0.0
    %834 = vmatprep.subr.mxu0 0.0
    %835 = vmatpush1.msra.mxu0 0.0
    %836 = vmatprep.subr.mxu0 0.0
    %837 = vmatpush1.msra.mxu0 0.0
    %838 = vmatprep.subr.mxu0 0.0
    %839 = vmatpush1.msra.mxu0 0.0
    %840 = vmatprep.subr.mxu0 0.0
    %841 = vmatpush1.msra.mxu0 0.0
    %842 = vmatprep.subr.mxu0 0.0
    %843 = vmatpush1.msra.mxu0 0.0
    %844 = vmatprep.subr.mxu0 0.0
    %845 = vmatpush1.msra.mxu0 0.0
    %846 = vmatprep.subr.mxu0 0.0
    %847 = vmatpush1.msra.mxu0 0.0
    %848 = vmatprep.subr.mxu0 0.0
    %849 = vmatpush1.msra.mxu0 0.0
    %850 = vmatprep.subr.mxu0 0.0
    %851 = vmatpush1.msra.mxu0 0.0
    %852 = vmatprep.subr.mxu0 0.0
    %853 = vmatpush1.msra.mxu0 0.0
    %854 = vmatprep.subr.mxu0 0.0
    %855 = vmatpush1.msra.mxu0 0.0
    %856 = vmatprep.subr.mxu0 0.0
    %857 = vmatpush1.msra.mxu0 0.0
    %858 = vmatprep.subr.mxu0 0.0
    %859 = vmatpush1.msra.mxu0 0.0
    %860 = vmatprep.subr.mxu0 0.0
    %861 = vmatpush1.msra.mxu0 0.0
    %862 = vmatprep.subr.mxu0 0.0
    %863 = vmatpush1.msra.mxu0 0.0
    %864 = vmatprep.mubr.f32.mxu0 0.0
    %v865 = vand.u32 %v180, 4294901760
    %866 = vmatmul.mubr.f32.gmra.mrb[0].mxu0 %v865
    %v867 = vpop.f32.mrb[0].mxu0
    %v868 = vadd.f32 %v763, %v867
    %v869 = vpop.f32.mrb[0].mxu0
    %870 = vmatprep.mubr.f32.mxu0 0.0
    %v871 = vand.u32 %v183, 4294901760
    %872 = vmatmul.mubr.f32.gmra.mrb[0].mxu0 %v871
    %v873 = vpop.f32.mrb[0].mxu0
    %v874 = vadd.f32 %v769, %v873
    %v875 = vpop.f32.mrb[0].mxu0
    %876 = vmatprep.mubr.f32.mxu0 0.0
    %v877 = vand.u32 %v186, 4294901760
    %878 = vmatmul.mubr.f32.gmra.mrb[0].mxu0 %v877
    %v879 = vpop.f32.mrb[0].mxu0
    %v880 = vadd.f32 %v775, %v879
    %v881 = vpop.f32.mrb[0].mxu0
    %882 = vmatprep.mubr.f32.mxu0 0.0
    %v883 = vand.u32 %v189, 4294901760
    %884 = vmatmul.mubr.f32.gmra.mrb[0].mxu0 %v883
    %v885 = vpop.f32.mrb[0].mxu0
    %v886 = vadd.f32 %v781, %v885
    %v887 = vpop.f32.mrb[0].mxu0
    %888 = vmatprep.mubr.f32.mxu0 0.0
    %v889 = vand.u32 %v192, 4294901760
    %890 = vmatmul.mubr.f32.gmra.mrb[0].mxu0 %v889
    %v891 = vpop.f32.mrb[0].mxu0
    %v892 = vadd.f32 %v787, %v891
    %v893 = vpop.f32.mrb[0].mxu0
    %894 = vmatprep.mubr.f32.mxu0 0.0
    %v895 = vand.u32 %v195, 4294901760
    %896 = vmatmul.mubr.f32.gmra.mrb[0].mxu0 %v895
    %v897 = vpop.f32.mrb[0].mxu0
    %v898 = vadd.f32 %v793, %v897
    %v899 = vpop.f32.mrb[0].mxu0
    %900 = vdwg.mxu0
    %vm901 = vcmp.gt.s32.totalorder %v111, 0
    %vm902 = vcmp.gt.s32.totalorder %v111, 1
    %vm903 = vcmp.gt.s32.totalorder %v111, 2
    %vm904 = vcmp.gt.s32.totalorder %v111, 3
    %vm905 = vcmp.gt.s32.totalorder %v111, 4
    %vm906 = vcmp.gt.s32.totalorder %v111, 5
    %vm907 = vcmp.gt.s32.totalorder %v111, 6
    %vm908 = vcmp.gt.s32.totalorder %v111, 7
    %vm909 = vcmp.ge.s32.totalorder %v135, 32
    %vm910 = vcmp.lt.s32.totalorder %v135, 48
    %vm911 = vmand %vm909, %vm910
    %v912 = vsel %vm911, 2.0, 1.0
    %v913 = vsel %vm911, 1.0, 0.0
    %vm914 = vcmask 130048
    %v916 = vsel %vm914, 0.0, 0
    %918 = vmatprep.subr.mxu0 0.0
    %919 = vmatpush1.msra.mxu0 %v116
    %920 = vmatprep.subr.mxu0 0.0
    %921 = vmatpush1.msra.mxu0 %v117
    %922 = vmatprep.subr.mxu0 0.0
    %923 = vmatpush1.msra.mxu0 0.0
    %924 = vmatprep.subr.mxu0 0.0
    %925 = vmatpush1.msra.mxu0 0.0
    %926 = vmatprep.subr.mxu0 0.0
    %927 = vmatpush1.msra.mxu0 0.0
    %928 = vmatprep.subr.mxu0 0.0
    %929 = vmatpush1.msra.mxu0 0.0
    %930 = vmatprep.subr.mxu0 0.0
    %931 = vmatpush1.msra.mxu0 0.0
    %932 = vmatprep.subr.mxu0 0.0
    %933 = vmatpush1.msra.mxu0 0.0
    %934 = vmatprep.subr.mxu0 0.0
    %935 = vmatpush1.msra.mxu0 0.0
    %936 = vmatprep.subr.mxu0 0.0
    %937 = vmatpush1.msra.mxu0 0.0
    %938 = vmatprep.subr.mxu0 0.0
    %939 = vmatpush1.msra.mxu0 0.0
    %940 = vmatprep.subr.mxu0 0.0
    %941 = vmatpush1.msra.mxu0 0.0
    %942 = vmatprep.subr.mxu0 0.0
    %943 = vmatpush1.msra.mxu0 0.0
    %944 = vmatprep.subr.mxu0 0.0
    %945 = vmatpush1.msra.mxu0 0.0
    %946 = vmatprep.subr.mxu0 0.0
    %947 = vmatpush1.msra.mxu0 0.0
    %948 = vmatprep.subr.mxu0 0.0
    %949 = vmatpush1.msra.mxu0 0.0
    %950 = vmatprep.subr.mxu0 0.0
    %951 = vmatpush1.msra.mxu0 0.0
    %952 = vmatprep.subr.mxu0 0.0
    %953 = vmatpush1.msra.mxu0 0.0
    %954 = vmatprep.subr.mxu0 0.0
    %955 = vmatpush1.msra.mxu0 0.0
    %956 = vmatprep.subr.mxu0 0.0
    %957 = vmatpush1.msra.mxu0 0.0
    %958 = vmatprep.subr.mxu0 0.0
    %959 = vmatpush1.msra.mxu0 0.0
    %960 = vmatprep.subr.mxu0 0.0
    %961 = vmatpush1.msra.mxu0 0.0
    %962 = vmatprep.subr.mxu0 0.0
    %963 = vmatpush1.msra.mxu0 0.0
    %964 = vmatprep.subr.mxu0 0.0
    %965 = vmatpush1.msra.mxu0 0.0
    %966 = vmatprep.subr.mxu0 0.0
    %967 = vmatpush1.msra.mxu0 0.0
    %968 = vmatprep.subr.mxu0 0.0
    %969 = vmatpush1.msra.mxu0 0.0
    %970 = vmatprep.subr.mxu0 0.0
    %971 = vmatpush1.msra.mxu0 0.0
    %972 = vmatprep.subr.mxu0 0.0
    %973 = vmatpush1.msra.mxu0 0.0
    %974 = vmatprep.subr.mxu0 0.0
    %975 = vmatpush1.msra.mxu0 0.0
    %976 = vmatprep.subr.mxu0 0.0
    %977 = vmatpush1.msra.mxu0 0.0
    %978 = vmatprep.subr.mxu0 0.0
    %979 = vmatpush1.msra.mxu0 0.0
    %980 = vmatprep.subr.mxu0 0.0
    %981 = vmatpush1.msra.mxu0 0.0
    %982 = vmatprep.mubr.f32.mxu0 0.0
    %983 = vmatmul.mubr.f32.gmra.mrb[0].mxu0 %v916
    %v984 = vpop.f32.mrb[0].mxu0
    %v985 = vadd.f32 %v868, %v984
    %v986 = vpop.f32.mrb[0].mxu0
    %987 = vdwg.mxu0
    %v988 = vxor.u32 %v985, 2147483648
    %v989 = vmul.f32 %v988, 1.442695
    %v990 = vpow.pop %v989
    %v991 = vadd.f32 %v990, 1.0
    %v992 = vrcp.pop %v991
    %v993 = vmul.f32 1.0, %v992
    %v994 = vmul.f32 %v993, %v912
    %v995 = vsub.f32 %v994, %v913
    %v996 = vmul.f32 %v995, 0.0
    %998 = vrot.lane.b32.xlu0 %v995, 96
    %v999 = vpop.permute.xlu0 %998
    %v1001 = vmul.f32 %v995, %v999
    %1003 = vrot.lane.b32.xlu0 %v1001, 16
    %v1004 = vpop.permute.xlu0 %1003
    %v1006 = vadd.f32 %v996, %v1004
    %v1007 = vtanh.pop %v1006
    %1009 = vrot.lane.b32.xlu0 %v1007, 32
    %v1010 = vpop.permute.xlu0 %1009
    %v1012 = vmul.f32 %v995, %v1010
    %v1013 = vsel %vm901, 1, 0
    %1014 = vset.pattern.permute.xlu0 0
    %1015 = vperm.xlu0 %1014, %v1013
    %v1016 = vpop.permute.xlu0 %1015
    %vm1017 = vcmp.eq.s32.totalorder %v1016, 1
    %v1018 = vsel %vm1017, %v1012, 0.0
    %v1019 = vsel %vm1017, %v1006, 0.0
    %1021 = vrot.lane.b32.xlu0 %v1018, 80
    %v1022 = vpop.permute.xlu0 %1021
    %vm1025 = vcmask 1041408
    %v1026 = vrot.slane %v868, 6
    %v1027 = vrot.slane %v874, 6
    %v1028 = vsel %vm1025, %v1026, %v1027
    %v1030 = vsel %vm914, %v1022, 0
    %1032 = vmatprep.subr.mxu0 0.0
    %1033 = vmatpush1.msra.mxu0 %v116
    %1034 = vmatprep.subr.mxu0 0.0
    %1035 = vmatpush1.msra.mxu0 %v117
    %1036 = vmatprep.subr.mxu0 0.0
    %1037 = vmatpush1.msra.mxu0 0.0
    %1038 = vmatprep.subr.mxu0 0.0
    %1039 = vmatpush1.msra.mxu0 0.0
    %1040 = vmatprep.subr.mxu0 0.0
    %1041 = vmatpush1.msra.mxu0 0.0
    %1042 = vmatprep.subr.mxu0 0.0
    %1043 = vmatpush1.msra.mxu0 0.0
    %1044 = vmatprep.subr.mxu0 0.0
    %1045 = vmatpush1.msra.mxu0 0.0
    %1046 = vmatprep.subr.mxu0 0.0
    %1047 = vmatpush1.msra.mxu0 0.0
    %1048 = vmatprep.subr.mxu0 0.0
    %1049 = vmatpush1.msra.mxu0 0.0
    %1050 = vmatprep.subr.mxu0 0.0
    %1051 = vmatpush1.msra.mxu0 0.0
    %1052 = vmatprep.subr.mxu0 0.0
    %1053 = vmatpush1.msra.mxu0 0.0
    %1054 = vmatprep.subr.mxu0 0.0
    %1055 = vmatpush1.msra.mxu0 0.0
    %1056 = vmatprep.subr.mxu0 0.0
    %1057 = vmatpush1.msra.mxu0 0.0
    %1058 = vmatprep.subr.mxu0 0.0
    %1059 = vmatpush1.msra.mxu0 0.0
    %1060 = vmatprep.subr.mxu0 0.0
    %1061 = vmatpush1.msra.mxu0 0.0
    %1062 = vmatprep.subr.mxu0 0.0
    %1063 = vmatpush1.msra.mxu0 0.0
    %1064 = vmatprep.subr.mxu0 0.0
    %1065 = vmatpush1.msra.mxu0 0.0
    %1066 = vmatprep.subr.mxu0 0.0
    %1067 = vmatpush1.msra.mxu0 0.0
    %1068 = vmatprep.subr.mxu0 0.0
    %1069 = vmatpush1.msra.mxu0 0.0
    %1070 = vmatprep.subr.mxu0 0.0
    %1071 = vmatpush1.msra.mxu0 0.0
    %1072 = vmatprep.subr.mxu0 0.0
    %1073 = vmatpush1.msra.mxu0 0.0
    %1074 = vmatprep.subr.mxu0 0.0
    %1075 = vmatpush1.msra.mxu0 0.0
    %1076 = vmatprep.subr.mxu0 0.0
    %1077 = vmatpush1.msra.mxu0 0.0
    %1078 = vmatprep.subr.mxu0 0.0
    %1079 = vmatpush1.msra.mxu0 0.0
    %1080 = vmatprep.subr.mxu0 0.0
    %1081 = vmatpush1.msra.mxu0 0.0
    %1082 = vmatprep.subr.mxu0 0.0
    %1083 = vmatpush1.msra.mxu0 0.0
    %1084 = vmatprep.subr.mxu0 0.0
    %1085 = vmatpush1.msra.mxu0 0.0
    %1086 = vmatprep.subr.mxu0 0.0
    %1087 = vmatpush1.msra.mxu0 0.0
    %1088 = vmatprep.subr.mxu0 0.0
    %1089 = vmatpush1.msra.mxu0 0.0
    %1090 = vmatprep.subr.mxu0 0.0
    %1091 = vmatpush1.msra.mxu0 0.0
    %1092 = vmatprep.subr.mxu0 0.0
    %1093 = vmatpush1.msra.mxu0 0.0
    %1094 = vmatprep.subr.mxu0 0.0
    %1095 = vmatpush1.msra.mxu0 0.0
    %1096 = vmatprep.mubr.f32.mxu0 0.0
    %1097 = vmatmul.mubr.f32.gmra.mrb[0].mxu0 %v1030
    %v1098 = vpop.f32.mrb[0].mxu0
    %v1099 = vadd.f32 %v1028, %v1098
    %v1100 = vpop.f32.mrb[0].mxu0
    %1101 = vdwg.mxu0
    %v1102 = vxor.u32 %v1099, 2147483648
    %v1103 = vmul.f32 %v1102, 1.442695
    %v1104 = vpow.pop %v1103
    %v1105 = vadd.f32 %v1104, 1.0
    %v1106 = vrcp.pop %v1105
    %v1107 = vmul.f32 1.0, %v1106
    %v1108 = vmul.f32 %v1107, %v912
    %v1109 = vsub.f32 %v1108, %v913
    %v1110 = vmul.f32 %v1109, %v1019
    %1112 = vrot.lane.b32.xlu0 %v1109, 96
    %v1113 = vpop.permute.xlu0 %1112
    %v1115 = vmul.f32 %v1109, %v1113
    %1117 = vrot.lane.b32.xlu0 %v1115, 16
    %v1118 = vpop.permute.xlu0 %1117
    %v1120 = vadd.f32 %v1110, %v1118
    %v1121 = vtanh.pop %v1120
    %1123 = vrot.lane.b32.xlu0 %v1121, 32
    %v1124 = vpop.permute.xlu0 %1123
    %v1126 = vmul.f32 %v1109, %v1124
    %v1127 = vsel %vm902, 1, 0
    %1128 = vset.pattern.permute.xlu0 0
    %1129 = vperm.xlu0 %1128, %v1127
    %v1130 = vpop.permute.xlu0 %1129
    %vm1131 = vcmp.eq.s32.totalorder %v1130, 1
    %v1132 = vsel %vm1131, %v1126, %v1018
    %v1133 = vsel %vm1131, %v1120, %v1019
    %1135 = vrot.lane.b32.xlu0 %v1132, 80
    %v1136 = vpop.permute.xlu0 %1135
    %vm1138 = vcmask 1043456
    %v1139 = vrot.slane %v874, 4
    %v1140 = vrot.slane %v880, 4
    %v1141 = vsel %vm1138, %v1139, %v1140
    %v1143 = vsel %vm914, %v1136, 0
    %1145 = vmatprep.subr.mxu0 0.0
    %1146 = vmatpush1.msra.mxu0 %v116
    %1147 = vmatprep.subr.mxu0 0.0
    %1148 = vmatpush1.msra.mxu0 %v117
    %1149 = vmatprep.subr.mxu0 0.0
    %1150 = vmatpush1.msra.mxu0 0.0
    %1151 = vmatprep.subr.mxu0 0.0
    %1152 = vmatpush1.msra.mxu0 0.0
    %1153 = vmatprep.subr.mxu0 0.0
    %1154 = vmatpush1.msra.mxu0 0.0
    %1155 = vmatprep.subr.mxu0 0.0
    %1156 = vmatpush1.msra.mxu0 0.0
    %1157 = vmatprep.subr.mxu0 0.0
    %1158 = vmatpush1.msra.mxu0 0.0
    %1159 = vmatprep.subr.mxu0 0.0
    %1160 = vmatpush1.msra.mxu0 0.0
    %1161 = vmatprep.subr.mxu0 0.0
    %1162 = vmatpush1.msra.mxu0 0.0
    %1163 = vmatprep.subr.mxu0 0.0
    %1164 = vmatpush1.msra.mxu0 0.0
    %1165 = vmatprep.subr.mxu0 0.0
    %1166 = vmatpush1.msra.mxu0 0.0
    %1167 = vmatprep.subr.mxu0 0.0
    %1168 = vmatpush1.msra.mxu0 0.0
    %1169 = vmatprep.subr.mxu0 0.0
    %1170 = vmatpush1.msra.mxu0 0.0
    %1171 = vmatprep.subr.mxu0 0.0
    %1172 = vmatpush1.msra.mxu0 0.0
    %1173 = vmatprep.subr.mxu0 0.0
    %1174 = vmatpush1.msra.mxu0 0.0
    %1175 = vmatprep.subr.mxu0 0.0
    %1176 = vmatpush1.msra.mxu0 0.0
    %1177 = vmatprep.subr.mxu0 0.0
    %1178 = vmatpush1.msra.mxu0 0.0
    %1179 = vmatprep.subr.mxu0 0.0
    %1180 = vmatpush1.msra.mxu0 0.0
    %1181 = vmatprep.subr.mxu0 0.0
    %1182 = vmatpush1.msra.mxu0 0.0
    %1183 = vmatprep.subr.mxu0 0.0
    %1184 = vmatpush1.msra.mxu0 0.0
    %1185 = vmatprep.subr.mxu0 0.0
    %1186 = vmatpush1.msra.mxu0 0.0
    %1187 = vmatprep.subr.mxu0 0.0
    %1188 = vmatpush1.msra.mxu0 0.0
    %1189 = vmatprep.subr.mxu0 0.0
    %1190 = vmatpush1.msra.mxu0 0.0
    %1191 = vmatprep.subr.mxu0 0.0
    %1192 = vmatpush1.msra.mxu0 0.0
    %1193 = vmatprep.subr.mxu0 0.0
    %1194 = vmatpush1.msra.mxu0 0.0
    %1195 = vmatprep.subr.mxu0 0.0
    %1196 = vmatpush1.msra.mxu0 0.0
    %1197 = vmatprep.subr.mxu0 0.0
    %1198 = vmatpush1.msra.mxu0 0.0
    %1199 = vmatprep.subr.mxu0 0.0
    %1200 = vmatpush1.msra.mxu0 0.0
    %1201 = vmatprep.subr.mxu0 0.0
    %1202 = vmatpush1.msra.mxu0 0.0
    %1203 = vmatprep.subr.mxu0 0.0
    %1204 = vmatpush1.msra.mxu0 0.0
    %1205 = vmatprep.subr.mxu0 0.0
    %1206 = vmatpush1.msra.mxu0 0.0
    %1207 = vmatprep.subr.mxu0 0.0
    %1208 = vmatpush1.msra.mxu0 0.0
    %1209 = vmatprep.mubr.f32.mxu0 0.0
    %1210 = vmatmul.mubr.f32.gmra.mrb[0].mxu0 %v1143
    %v1211 = vpop.f32.mrb[0].mxu0
    %v1212 = vadd.f32 %v1141, %v1211
    %v1213 = vpop.f32.mrb[0].mxu0
    %1214 = vdwg.mxu0
    %v1215 = vxor.u32 %v1212, 2147483648
    %v1216 = vmul.f32 %v1215, 1.442695
    %v1217 = vpow.pop %v1216
    %v1218 = vadd.f32 %v1217, 1.0
    %v1219 = vrcp.pop %v1218
    %v1220 = vmul.f32 1.0, %v1219
    %v1221 = vmul.f32 %v1220, %v912
    %v1222 = vsub.f32 %v1221, %v913
    %v1223 = vmul.f32 %v1222, %v1133
    %1225 = vrot.lane.b32.xlu0 %v1222, 96
    %v1226 = vpop.permute.xlu0 %1225
    %v1228 = vmul.f32 %v1222, %v1226
    %1230 = vrot.lane.b32.xlu0 %v1228, 16
    %v1231 = vpop.permute.xlu0 %1230
    %v1233 = vadd.f32 %v1223, %v1231
    %v1234 = vtanh.pop %v1233
    %1236 = vrot.lane.b32.xlu0 %v1234, 32
    %v1237 = vpop.permute.xlu0 %1236
    %v1239 = vmul.f32 %v1222, %v1237
    %v1240 = vsel %vm903, 1, 0
    %1241 = vset.pattern.permute.xlu0 0
    %1242 = vperm.xlu0 %1241, %v1240
    %v1243 = vpop.permute.xlu0 %1242
    %vm1244 = vcmp.eq.s32.totalorder %v1243, 1
    %v1245 = vsel %vm1244, %v1239, %v1132
    %v1246 = vsel %vm1244, %v1233, %v1133
    %1248 = vrot.lane.b32.xlu0 %v1245, 80
    %v1249 = vpop.permute.xlu0 %1248
    %v1250 = vrot.slane %v880, 2
    %v1252 = vsel %vm914, %v1249, 0
    %1254 = vmatprep.subr.mxu0 0.0
    %1255 = vmatpush1.msra.mxu0 %v116
    %1256 = vmatprep.subr.mxu0 0.0
    %1257 = vmatpush1.msra.mxu0 %v117
    %1258 = vmatprep.subr.mxu0 0.0
    %1259 = vmatpush1.msra.mxu0 0.0
    %1260 = vmatprep.subr.mxu0 0.0
    %1261 = vmatpush1.msra.mxu0 0.0
    %1262 = vmatprep.subr.mxu0 0.0
    %1263 = vmatpush1.msra.mxu0 0.0
    %1264 = vmatprep.subr.mxu0 0.0
    %1265 = vmatpush1.msra.mxu0 0.0
    %1266 = vmatprep.subr.mxu0 0.0
    %1267 = vmatpush1.msra.mxu0 0.0
    %1268 = vmatprep.subr.mxu0 0.0
    %1269 = vmatpush1.msra.mxu0 0.0
    %1270 = vmatprep.subr.mxu0 0.0
    %1271 = vmatpush1.msra.mxu0 0.0
    %1272 = vmatprep.subr.mxu0 0.0
    %1273 = vmatpush1.msra.mxu0 0.0
    %1274 = vmatprep.subr.mxu0 0.0
    %1275 = vmatpush1.msra.mxu0 0.0
    %1276 = vmatprep.subr.mxu0 0.0
    %1277 = vmatpush1.msra.mxu0 0.0
    %1278 = vmatprep.subr.mxu0 0.0
    %1279 = vmatpush1.msra.mxu0 0.0
    %1280 = vmatprep.subr.mxu0 0.0
    %1281 = vmatpush1.msra.mxu0 0.0
    %1282 = vmatprep.subr.mxu0 0.0
    %1283 = vmatpush1.msra.mxu0 0.0
    %1284 = vmatprep.subr.mxu0 0.0
    %1285 = vmatpush1.msra.mxu0 0.0
    %1286 = vmatprep.subr.mxu0 0.0
    %1287 = vmatpush1.msra.mxu0 0.0
    %1288 = vmatprep.subr.mxu0 0.0
    %1289 = vmatpush1.msra.mxu0 0.0
    %1290 = vmatprep.subr.mxu0 0.0
    %1291 = vmatpush1.msra.mxu0 0.0
    %1292 = vmatprep.subr.mxu0 0.0
    %1293 = vmatpush1.msra.mxu0 0.0
    %1294 = vmatprep.subr.mxu0 0.0
    %1295 = vmatpush1.msra.mxu0 0.0
    %1296 = vmatprep.subr.mxu0 0.0
    %1297 = vmatpush1.msra.mxu0 0.0
    %1298 = vmatprep.subr.mxu0 0.0
    %1299 = vmatpush1.msra.mxu0 0.0
    %1300 = vmatprep.subr.mxu0 0.0
    %1301 = vmatpush1.msra.mxu0 0.0
    %1302 = vmatprep.subr.mxu0 0.0
    %1303 = vmatpush1.msra.mxu0 0.0
    %1304 = vmatprep.subr.mxu0 0.0
    %1305 = vmatpush1.msra.mxu0 0.0
    %1306 = vmatprep.subr.mxu0 0.0
    %1307 = vmatpush1.msra.mxu0 0.0
    %1308 = vmatprep.subr.mxu0 0.0
    %1309 = vmatpush1.msra.mxu0 0.0
    %1310 = vmatprep.subr.mxu0 0.0
    %1311 = vmatpush1.msra.mxu0 0.0
    %1312 = vmatprep.subr.mxu0 0.0
    %1313 = vmatpush1.msra.mxu0 0.0
    %1314 = vmatprep.subr.mxu0 0.0
    %1315 = vmatpush1.msra.mxu0 0.0
    %1316 = vmatprep.subr.mxu0 0.0
    %1317 = vmatpush1.msra.mxu0 0.0
    %1318 = vmatprep.mubr.f32.mxu0 0.0
    %1319 = vmatmul.mubr.f32.gmra.mrb[0].mxu0 %v1252
    %v1320 = vpop.f32.mrb[0].mxu0
    %v1321 = vadd.f32 %v1250, %v1320
    %v1322 = vpop.f32.mrb[0].mxu0
    %1323 = vdwg.mxu0
    %v1324 = vxor.u32 %v1321, 2147483648
    %v1325 = vmul.f32 %v1324, 1.442695
    %v1326 = vpow.pop %v1325
    %v1327 = vadd.f32 %v1326, 1.0
    %v1328 = vrcp.pop %v1327
    %v1329 = vmul.f32 1.0, %v1328
    %v1330 = vmul.f32 %v1329, %v912
    %v1331 = vsub.f32 %v1330, %v913
    %v1332 = vmul.f32 %v1331, %v1246
    %1334 = vrot.lane.b32.xlu0 %v1331, 96
    %v1335 = vpop.permute.xlu0 %1334
    %v1337 = vmul.f32 %v1331, %v1335
    %1339 = vrot.lane.b32.xlu0 %v1337, 16
    %v1340 = vpop.permute.xlu0 %1339
    %v1342 = vadd.f32 %v1332, %v1340
    %v1343 = vtanh.pop %v1342
    %1345 = vrot.lane.b32.xlu0 %v1343, 32
    %v1346 = vpop.permute.xlu0 %1345
    %v1348 = vmul.f32 %v1331, %v1346
    %v1349 = vsel %vm904, 1, 0
    %1350 = vset.pattern.permute.xlu0 0
    %1351 = vperm.xlu0 %1350, %v1349
    %v1352 = vpop.permute.xlu0 %1351
    %vm1353 = vcmp.eq.s32.totalorder %v1352, 1
    %v1354 = vsel %vm1353, %v1348, %v1245
    %v1355 = vsel %vm1353, %v1342, %v1246
    %1357 = vrot.lane.b32.xlu0 %v1354, 80
    %v1358 = vpop.permute.xlu0 %1357
    %v1359 = vsel %vm914, %v1358, 0
    %1361 = vmatprep.subr.mxu0 0.0
    %1362 = vmatpush1.msra.mxu0 %v116
    %1363 = vmatprep.subr.mxu0 0.0
    %1364 = vmatpush1.msra.mxu0 %v117
    %1365 = vmatprep.subr.mxu0 0.0
    %1366 = vmatpush1.msra.mxu0 0.0
    %1367 = vmatprep.subr.mxu0 0.0
    %1368 = vmatpush1.msra.mxu0 0.0
    %1369 = vmatprep.subr.mxu0 0.0
    %1370 = vmatpush1.msra.mxu0 0.0
    %1371 = vmatprep.subr.mxu0 0.0
    %1372 = vmatpush1.msra.mxu0 0.0
    %1373 = vmatprep.subr.mxu0 0.0
    %1374 = vmatpush1.msra.mxu0 0.0
    %1375 = vmatprep.subr.mxu0 0.0
    %1376 = vmatpush1.msra.mxu0 0.0
    %1377 = vmatprep.subr.mxu0 0.0
    %1378 = vmatpush1.msra.mxu0 0.0
    %1379 = vmatprep.subr.mxu0 0.0
    %1380 = vmatpush1.msra.mxu0 0.0
    %1381 = vmatprep.subr.mxu0 0.0
    %1382 = vmatpush1.msra.mxu0 0.0
    %1383 = vmatprep.subr.mxu0 0.0
    %1384 = vmatpush1.msra.mxu0 0.0
    %1385 = vmatprep.subr.mxu0 0.0
    %1386 = vmatpush1.msra.mxu0 0.0
    %1387 = vmatprep.subr.mxu0 0.0
    %1388 = vmatpush1.msra.mxu0 0.0
    %1389 = vmatprep.subr.mxu0 0.0
    %1390 = vmatpush1.msra.mxu0 0.0
    %1391 = vmatprep.subr.mxu0 0.0
    %1392 = vmatpush1.msra.mxu0 0.0
    %1393 = vmatprep.subr.mxu0 0.0
    %1394 = vmatpush1.msra.mxu0 0.0
    %1395 = vmatprep.subr.mxu0 0.0
    %1396 = vmatpush1.msra.mxu0 0.0
    %1397 = vmatprep.subr.mxu0 0.0
    %1398 = vmatpush1.msra.mxu0 0.0
    %1399 = vmatprep.subr.mxu0 0.0
    %1400 = vmatpush1.msra.mxu0 0.0
    %1401 = vmatprep.subr.mxu0 0.0
    %1402 = vmatpush1.msra.mxu0 0.0
    %1403 = vmatprep.subr.mxu0 0.0
    %1404 = vmatpush1.msra.mxu0 0.0
    %1405 = vmatprep.subr.mxu0 0.0
    %1406 = vmatpush1.msra.mxu0 0.0
    %1407 = vmatprep.subr.mxu0 0.0
    %1408 = vmatpush1.msra.mxu0 0.0
    %1409 = vmatprep.subr.mxu0 0.0
    %1410 = vmatpush1.msra.mxu0 0.0
    %1411 = vmatprep.subr.mxu0 0.0
    %1412 = vmatpush1.msra.mxu0 0.0
    %1413 = vmatprep.subr.mxu0 0.0
    %1414 = vmatpush1.msra.mxu0 0.0
    %1415 = vmatprep.subr.mxu0 0.0
    %1416 = vmatpush1.msra.mxu0 0.0
    %1417 = vmatprep.subr.mxu0 0.0
    %1418 = vmatpush1.msra.mxu0 0.0
    %1419 = vmatprep.subr.mxu0 0.0
    %1420 = vmatpush1.msra.mxu0 0.0
    %1421 = vmatprep.subr.mxu0 0.0
    %1422 = vmatpush1.msra.mxu0 0.0
    %1423 = vmatprep.subr.mxu0 0.0
    %1424 = vmatpush1.msra.mxu0 0.0
    %1425 = vmatprep.mubr.f32.mxu0 0.0
    %1426 = vmatmul.mubr.f32.gmra.mrb[0].mxu0 %v1359
    %v1427 = vpop.f32.mrb[0].mxu0
    %v1428 = vadd.f32 %v886, %v1427
    %v1429 = vpop.f32.mrb[0].mxu0
    %1430 = vdwg.mxu0
    %v1431 = vxor.u32 %v1428, 2147483648
    %v1432 = vmul.f32 %v1431, 1.442695
    %v1433 = vpow.pop %v1432
    %v1434 = vadd.f32 %v1433, 1.0
    %v1435 = vrcp.pop %v1434
    %v1436 = vmul.f32 1.0, %v1435
    %v1437 = vmul.f32 %v1436, %v912
    %v1438 = vsub.f32 %v1437, %v913
    %v1439 = vmul.f32 %v1438, %v1355
    %1441 = vrot.lane.b32.xlu0 %v1438, 96
    %v1442 = vpop.permute.xlu0 %1441
    %v1444 = vmul.f32 %v1438, %v1442
    %1446 = vrot.lane.b32.xlu0 %v1444, 16
    %v1447 = vpop.permute.xlu0 %1446
    %v1449 = vadd.f32 %v1439, %v1447
    %v1450 = vtanh.pop %v1449
    %1452 = vrot.lane.b32.xlu0 %v1450, 32
    %v1453 = vpop.permute.xlu0 %1452
    %v1455 = vmul.f32 %v1438, %v1453
    %v1456 = vsel %vm905, 1, 0
    %1457 = vset.pattern.permute.xlu0 0
    %1458 = vperm.xlu0 %1457, %v1456
    %v1459 = vpop.permute.xlu0 %1458
    %vm1460 = vcmp.eq.s32.totalorder %v1459, 1
    %v1461 = vsel %vm1460, %v1455, %v1354
    %v1462 = vsel %vm1460, %v1449, %v1355
    %1464 = vrot.lane.b32.xlu0 %v1461, 80
    %v1465 = vpop.permute.xlu0 %1464
    %v1468 = vrot.slane %v886, 6
    %v1469 = vrot.slane %v892, 6
    %v1470 = vsel %vm1025, %v1468, %v1469
    %v1472 = vsel %vm914, %v1465, 0
    %1474 = vmatprep.subr.mxu0 0.0
    %1475 = vmatpush1.msra.mxu0 %v116
    %1476 = vmatprep.subr.mxu0 0.0
    %1477 = vmatpush1.msra.mxu0 %v117
    %1478 = vmatprep.subr.mxu0 0.0
    %1479 = vmatpush1.msra.mxu0 0.0
    %1480 = vmatprep.subr.mxu0 0.0
    %1481 = vmatpush1.msra.mxu0 0.0
    %1482 = vmatprep.subr.mxu0 0.0
    %1483 = vmatpush1.msra.mxu0 0.0
    %1484 = vmatprep.subr.mxu0 0.0
    %1485 = vmatpush1.msra.mxu0 0.0
    %1486 = vmatprep.subr.mxu0 0.0
    %1487 = vmatpush1.msra.mxu0 0.0
    %1488 = vmatprep.subr.mxu0 0.0
    %1489 = vmatpush1.msra.mxu0 0.0
    %1490 = vmatprep.subr.mxu0 0.0
    %1491 = vmatpush1.msra.mxu0 0.0
    %1492 = vmatprep.subr.mxu0 0.0
    %1493 = vmatpush1.msra.mxu0 0.0
    %1494 = vmatprep.subr.mxu0 0.0
    %1495 = vmatpush1.msra.mxu0 0.0
    %1496 = vmatprep.subr.mxu0 0.0
    %1497 = vmatpush1.msra.mxu0 0.0
    %1498 = vmatprep.subr.mxu0 0.0
    %1499 = vmatpush1.msra.mxu0 0.0
    %1500 = vmatprep.subr.mxu0 0.0
    %1501 = vmatpush1.msra.mxu0 0.0
    %1502 = vmatprep.subr.mxu0 0.0
    %1503 = vmatpush1.msra.mxu0 0.0
    %1504 = vmatprep.subr.mxu0 0.0
    %1505 = vmatpush1.msra.mxu0 0.0
    %1506 = vmatprep.subr.mxu0 0.0
    %1507 = vmatpush1.msra.mxu0 0.0
    %1508 = vmatprep.subr.mxu0 0.0
    %1509 = vmatpush1.msra.mxu0 0.0
    %1510 = vmatprep.subr.mxu0 0.0
    %1511 = vmatpush1.msra.mxu0 0.0
    %1512 = vmatprep.subr.mxu0 0.0
    %1513 = vmatpush1.msra.mxu0 0.0
    %1514 = vmatprep.subr.mxu0 0.0
    %1515 = vmatpush1.msra.mxu0 0.0
    %1516 = vmatprep.subr.mxu0 0.0
    %1517 = vmatpush1.msra.mxu0 0.0
    %1518 = vmatprep.subr.mxu0 0.0
    %1519 = vmatpush1.msra.mxu0 0.0
    %1520 = vmatprep.subr.mxu0 0.0
    %1521 = vmatpush1.msra.mxu0 0.0
    %1522 = vmatprep.subr.mxu0 0.0
    %1523 = vmatpush1.msra.mxu0 0.0
    %1524 = vmatprep.subr.mxu0 0.0
    %1525 = vmatpush1.msra.mxu0 0.0
    %1526 = vmatprep.subr.mxu0 0.0
    %1527 = vmatpush1.msra.mxu0 0.0
    %1528 = vmatprep.subr.mxu0 0.0
    %1529 = vmatpush1.msra.mxu0 0.0
    %1530 = vmatprep.subr.mxu0 0.0
    %1531 = vmatpush1.msra.mxu0 0.0
    %1532 = vmatprep.subr.mxu0 0.0
    %1533 = vmatpush1.msra.mxu0 0.0
    %1534 = vmatprep.subr.mxu0 0.0
    %1535 = vmatpush1.msra.mxu0 0.0
    %1536 = vmatprep.subr.mxu0 0.0
    %1537 = vmatpush1.msra.mxu0 0.0
    %1538 = vmatprep.mubr.f32.mxu0 0.0
    %1539 = vmatmul.mubr.f32.gmra.mrb[0].mxu0 %v1472
    %v1540 = vpop.f32.mrb[0].mxu0
    %v1541 = vadd.f32 %v1470, %v1540
    %v1542 = vpop.f32.mrb[0].mxu0
    %1543 = vdwg.mxu0
    %v1544 = vxor.u32 %v1541, 2147483648
    %v1545 = vmul.f32 %v1544, 1.442695
    %v1546 = vpow.pop %v1545
    %v1547 = vadd.f32 %v1546, 1.0
    %v1548 = vrcp.pop %v1547
    %v1549 = vmul.f32 1.0, %v1548
    %v1550 = vmul.f32 %v1549, %v912
    %v1551 = vsub.f32 %v1550, %v913
    %v1552 = vmul.f32 %v1551, %v1462
    %1554 = vrot.lane.b32.xlu0 %v1551, 96
    %v1555 = vpop.permute.xlu0 %1554
    %v1557 = vmul.f32 %v1551, %v1555
    %1559 = vrot.lane.b32.xlu0 %v1557, 16
    %v1560 = vpop.permute.xlu0 %1559
    %v1562 = vadd.f32 %v1552, %v1560
    %v1563 = vtanh.pop %v1562
    %1565 = vrot.lane.b32.xlu0 %v1563, 32
    %v1566 = vpop.permute.xlu0 %1565
    %v1568 = vmul.f32 %v1551, %v1566
    %v1569 = vsel %vm906, 1, 0
    %1570 = vset.pattern.permute.xlu0 0
    %1571 = vperm.xlu0 %1570, %v1569
    %v1572 = vpop.permute.xlu0 %1571
    %vm1573 = vcmp.eq.s32.totalorder %v1572, 1
    %v1574 = vsel %vm1573, %v1568, %v1461
    %v1575 = vsel %vm1573, %v1562, %v1462
    %1577 = vrot.lane.b32.xlu0 %v1574, 80
    %v1578 = vpop.permute.xlu0 %1577
    %v1580 = vrot.slane %v892, 4
    %v1581 = vrot.slane %v898, 4
    %v1582 = vsel %vm1138, %v1580, %v1581
    %v1584 = vsel %vm914, %v1578, 0
    %1586 = vmatprep.subr.mxu0 0.0
    %1587 = vmatpush1.msra.mxu0 %v116
    %1588 = vmatprep.subr.mxu0 0.0
    %1589 = vmatpush1.msra.mxu0 %v117
    %1590 = vmatprep.subr.mxu0 0.0
    %1591 = vmatpush1.msra.mxu0 0.0
    %1592 = vmatprep.subr.mxu0 0.0
    %1593 = vmatpush1.msra.mxu0 0.0
    %1594 = vmatprep.subr.mxu0 0.0
    %1595 = vmatpush1.msra.mxu0 0.0
    %1596 = vmatprep.subr.mxu0 0.0
    %1597 = vmatpush1.msra.mxu0 0.0
    %1598 = vmatprep.subr.mxu0 0.0
    %1599 = vmatpush1.msra.mxu0 0.0
    %1600 = vmatprep.subr.mxu0 0.0
    %1601 = vmatpush1.msra.mxu0 0.0
    %1602 = vmatprep.subr.mxu0 0.0
    %1603 = vmatpush1.msra.mxu0 0.0
    %1604 = vmatprep.subr.mxu0 0.0
    %1605 = vmatpush1.msra.mxu0 0.0
    %1606 = vmatprep.subr.mxu0 0.0
    %1607 = vmatpush1.msra.mxu0 0.0
    %1608 = vmatprep.subr.mxu0 0.0
    %1609 = vmatpush1.msra.mxu0 0.0
    %1610 = vmatprep.subr.mxu0 0.0
    %1611 = vmatpush1.msra.mxu0 0.0
    %1612 = vmatprep.subr.mxu0 0.0
    %1613 = vmatpush1.msra.mxu0 0.0
    %1614 = vmatprep.subr.mxu0 0.0
    %1615 = vmatpush1.msra.mxu0 0.0
    %1616 = vmatprep.subr.mxu0 0.0
    %1617 = vmatpush1.msra.mxu0 0.0
    %1618 = vmatprep.subr.mxu0 0.0
    %1619 = vmatpush1.msra.mxu0 0.0
    %1620 = vmatprep.subr.mxu0 0.0
    %1621 = vmatpush1.msra.mxu0 0.0
    %1622 = vmatprep.subr.mxu0 0.0
    %1623 = vmatpush1.msra.mxu0 0.0
    %1624 = vmatprep.subr.mxu0 0.0
    %1625 = vmatpush1.msra.mxu0 0.0
    %1626 = vmatprep.subr.mxu0 0.0
    %1627 = vmatpush1.msra.mxu0 0.0
    %1628 = vmatprep.subr.mxu0 0.0
    %1629 = vmatpush1.msra.mxu0 0.0
    %1630 = vmatprep.subr.mxu0 0.0
    %1631 = vmatpush1.msra.mxu0 0.0
    %1632 = vmatprep.subr.mxu0 0.0
    %1633 = vmatpush1.msra.mxu0 0.0
    %1634 = vmatprep.subr.mxu0 0.0
    %1635 = vmatpush1.msra.mxu0 0.0
    %1636 = vmatprep.subr.mxu0 0.0
    %1637 = vmatpush1.msra.mxu0 0.0
    %1638 = vmatprep.subr.mxu0 0.0
    %1639 = vmatpush1.msra.mxu0 0.0
    %1640 = vmatprep.subr.mxu0 0.0
    %1641 = vmatpush1.msra.mxu0 0.0
    %1642 = vmatprep.subr.mxu0 0.0
    %1643 = vmatpush1.msra.mxu0 0.0
    %1644 = vmatprep.subr.mxu0 0.0
    %1645 = vmatpush1.msra.mxu0 0.0
    %1646 = vmatprep.subr.mxu0 0.0
    %1647 = vmatpush1.msra.mxu0 0.0
    %1648 = vmatprep.subr.mxu0 0.0
    %1649 = vmatpush1.msra.mxu0 0.0
    %1650 = vmatprep.mubr.f32.mxu0 0.0
    %1651 = vmatmul.mubr.f32.gmra.mrb[0].mxu0 %v1584
    %v1652 = vpop.f32.mrb[0].mxu0
    %v1653 = vadd.f32 %v1582, %v1652
    %v1654 = vpop.f32.mrb[0].mxu0
    %1655 = vdwg.mxu0
    %v1656 = vxor.u32 %v1653, 2147483648
    %v1657 = vmul.f32 %v1656, 1.442695
    %v1658 = vpow.pop %v1657
    %v1659 = vadd.f32 %v1658, 1.0
    %v1660 = vrcp.pop %v1659
    %v1661 = vmul.f32 1.0, %v1660
    %v1662 = vmul.f32 %v1661, %v912
    %v1663 = vsub.f32 %v1662, %v913
    %v1664 = vmul.f32 %v1663, %v1575
    %1666 = vrot.lane.b32.xlu0 %v1663, 96
    %v1667 = vpop.permute.xlu0 %1666
    %v1669 = vmul.f32 %v1663, %v1667
    %1671 = vrot.lane.b32.xlu0 %v1669, 16
    %v1672 = vpop.permute.xlu0 %1671
    %v1674 = vadd.f32 %v1664, %v1672
    %v1675 = vtanh.pop %v1674
    %1677 = vrot.lane.b32.xlu0 %v1675, 32
    %v1678 = vpop.permute.xlu0 %1677
    %v1680 = vmul.f32 %v1663, %v1678
    %v1681 = vsel %vm907, 1, 0
    %1682 = vset.pattern.permute.xlu0 0
    %1683 = vperm.xlu0 %1682, %v1681
    %v1684 = vpop.permute.xlu0 %1683
    %vm1685 = vcmp.eq.s32.totalorder %v1684, 1
    %v1686 = vsel %vm1685, %v1680, %v1574
    %v1687 = vsel %vm1685, %v1674, %v1575
    %1689 = vrot.lane.b32.xlu0 %v1686, 80
    %v1690 = vpop.permute.xlu0 %1689
    %v1691 = vrot.slane %v898, 2
    %v1693 = vsel %vm914, %v1690, 0
    %1695 = vmatprep.subr.mxu0 0.0
    %1696 = vmatpush1.msra.mxu0 %v116
    %1697 = vmatprep.subr.mxu0 0.0
    %1698 = vmatpush1.msra.mxu0 %v117
    %1699 = vmatprep.subr.mxu0 0.0
    %1700 = vmatpush1.msra.mxu0 0.0
    %1701 = vmatprep.subr.mxu0 0.0
    %1702 = vmatpush1.msra.mxu0 0.0
    %1703 = vmatprep.subr.mxu0 0.0
    %1704 = vmatpush1.msra.mxu0 0.0
    %1705 = vmatprep.subr.mxu0 0.0
    %1706 = vmatpush1.msra.mxu0 0.0
    %1707 = vmatprep.subr.mxu0 0.0
    %1708 = vmatpush1.msra.mxu0 0.0
    %1709 = vmatprep.subr.mxu0 0.0
    %1710 = vmatpush1.msra.mxu0 0.0
    %1711 = vmatprep.subr.mxu0 0.0
    %1712 = vmatpush1.msra.mxu0 0.0
    %1713 = vmatprep.subr.mxu0 0.0
    %1714 = vmatpush1.msra.mxu0 0.0
    %1715 = vmatprep.subr.mxu0 0.0
    %1716 = vmatpush1.msra.mxu0 0.0
    %1717 = vmatprep.subr.mxu0 0.0
    %1718 = vmatpush1.msra.mxu0 0.0
    %1719 = vmatprep.subr.mxu0 0.0
    %1720 = vmatpush1.msra.mxu0 0.0
    %1721 = vmatprep.subr.mxu0 0.0
    %1722 = vmatpush1.msra.mxu0 0.0
    %1723 = vmatprep.subr.mxu0 0.0
    %1724 = vmatpush1.msra.mxu0 0.0
    %1725 = vmatprep.subr.mxu0 0.0
    %1726 = vmatpush1.msra.mxu0 0.0
    %1727 = vmatprep.subr.mxu0 0.0
    %1728 = vmatpush1.msra.mxu0 0.0
    %1729 = vmatprep.subr.mxu0 0.0
    %1730 = vmatpush1.msra.mxu0 0.0
    %1731 = vmatprep.subr.mxu0 0.0
    %1732 = vmatpush1.msra.mxu0 0.0
    %1733 = vmatprep.subr.mxu0 0.0
    %1734 = vmatpush1.msra.mxu0 0.0
    %1735 = vmatprep.subr.mxu0 0.0
    %1736 = vmatpush1.msra.mxu0 0.0
    %1737 = vmatprep.subr.mxu0 0.0
    %1738 = vmatpush1.msra.mxu0 0.0
    %1739 = vmatprep.subr.mxu0 0.0
    %1740 = vmatpush1.msra.mxu0 0.0
    %1741 = vmatprep.subr.mxu0 0.0
    %1742 = vmatpush1.msra.mxu0 0.0
    %1743 = vmatprep.subr.mxu0 0.0
    %1744 = vmatpush1.msra.mxu0 0.0
    %1745 = vmatprep.subr.mxu0 0.0
    %1746 = vmatpush1.msra.mxu0 0.0
    %1747 = vmatprep.subr.mxu0 0.0
    %1748 = vmatpush1.msra.mxu0 0.0
    %1749 = vmatprep.subr.mxu0 0.0
    %1750 = vmatpush1.msra.mxu0 0.0
    %1751 = vmatprep.subr.mxu0 0.0
    %1752 = vmatpush1.msra.mxu0 0.0
    %1753 = vmatprep.subr.mxu0 0.0
    %1754 = vmatpush1.msra.mxu0 0.0
    %1755 = vmatprep.subr.mxu0 0.0
    %1756 = vmatpush1.msra.mxu0 0.0
    %1757 = vmatprep.subr.mxu0 0.0
    %1758 = vmatpush1.msra.mxu0 0.0
    %1759 = vmatprep.mubr.f32.mxu0 0.0
    %1760 = vmatmul.mubr.f32.gmra.mrb[0].mxu0 %v1693
    %v1761 = vpop.f32.mrb[0].mxu0
    %v1762 = vadd.f32 %v1691, %v1761
    %v1763 = vpop.f32.mrb[0].mxu0
    %1764 = vdwg.mxu0
    %v1765 = vxor.u32 %v1762, 2147483648
    %v1766 = vmul.f32 %v1765, 1.442695
    %v1767 = vpow.pop %v1766
    %v1768 = vadd.f32 %v1767, 1.0
    %v1769 = vrcp.pop %v1768
    %v1770 = vmul.f32 1.0, %v1769
    %v1771 = vmul.f32 %v1770, %v912
    %v1772 = vsub.f32 %v1771, %v913
    %v1773 = vmul.f32 %v1772, %v1687
    %1775 = vrot.lane.b32.xlu0 %v1772, 96
    %v1776 = vpop.permute.xlu0 %1775
    %v1778 = vmul.f32 %v1772, %v1776
    %1780 = vrot.lane.b32.xlu0 %v1778, 16
    %v1781 = vpop.permute.xlu0 %1780
    %v1783 = vadd.f32 %v1773, %v1781
    %v1784 = vsel %vm908, 1, 0
    %1785 = vset.pattern.permute.xlu0 0
    %1786 = vperm.xlu0 %1785, %v1784
    %v1787 = vpop.permute.xlu0 %1786
    %vm1788 = vcmp.eq.s32.totalorder %v1787, 1
    %v1789 = vsel %vm1788, %v1783, %v1687
    %1790 = vset.pattern.permute.xlu0 0
    %1791 = vperm.xlu0 %1790, %v104
    %v1792 = vpop.permute.xlu0 %1791
    %vm1793 = vcmp.eq.s32.totalorder %v1792, %v135
    %v1794 = vsel %vm1793, 1, 0
    %v1795 = vcvt.s32.f32 %v1794
    %1797 = vrot.lane.b32.xlu0 %v1789, 112
    %v1798 = vpop.permute.xlu0 %1797
    %v1799 = vsel %vm914, %v1798, 0
    %1801 = vmatprep.subr.mxu0 0.0
    %1802 = vmatpush1.msra.mxu0 %v122
    %1803 = vmatprep.subr.mxu0 0.0
    %1804 = vmatpush1.msra.mxu0 %v123
    %1805 = vmatprep.subr.mxu0 0.0
    %1806 = vmatpush1.msra.mxu0 0.0
    %1807 = vmatprep.subr.mxu0 0.0
    %1808 = vmatpush1.msra.mxu0 0.0
    %1809 = vmatprep.subr.mxu0 0.0
    %1810 = vmatpush1.msra.mxu0 0.0
    %1811 = vmatprep.subr.mxu0 0.0
    %1812 = vmatpush1.msra.mxu0 0.0
    %1813 = vmatprep.subr.mxu0 0.0
    %1814 = vmatpush1.msra.mxu0 0.0
    %1815 = vmatprep.subr.mxu0 0.0
    %1816 = vmatpush1.msra.mxu0 0.0
    %1817 = vmatprep.subr.mxu0 0.0
    %1818 = vmatpush1.msra.mxu0 0.0
    %1819 = vmatprep.subr.mxu0 0.0
    %1820 = vmatpush1.msra.mxu0 0.0
    %1821 = vmatprep.subr.mxu0 0.0
    %1822 = vmatpush1.msra.mxu0 0.0
    %1823 = vmatprep.subr.mxu0 0.0
    %1824 = vmatpush1.msra.mxu0 0.0
    %1825 = vmatprep.subr.mxu0 0.0
    %1826 = vmatpush1.msra.mxu0 0.0
    %1827 = vmatprep.subr.mxu0 0.0
    %1828 = vmatpush1.msra.mxu0 0.0
    %1829 = vmatprep.subr.mxu0 0.0
    %1830 = vmatpush1.msra.mxu0 0.0
    %1831 = vmatprep.subr.mxu0 0.0
    %1832 = vmatpush1.msra.mxu0 0.0
    %1833 = vmatprep.subr.mxu0 0.0
    %1834 = vmatpush1.msra.mxu0 0.0
    %1835 = vmatprep.subr.mxu0 0.0
    %1836 = vmatpush1.msra.mxu0 0.0
    %1837 = vmatprep.subr.mxu0 0.0
    %1838 = vmatpush1.msra.mxu0 0.0
    %1839 = vmatprep.subr.mxu0 0.0
    %1840 = vmatpush1.msra.mxu0 0.0
    %1841 = vmatprep.subr.mxu0 0.0
    %1842 = vmatpush1.msra.mxu0 0.0
    %1843 = vmatprep.subr.mxu0 0.0
    %1844 = vmatpush1.msra.mxu0 0.0
    %1845 = vmatprep.subr.mxu0 0.0
    %1846 = vmatpush1.msra.mxu0 0.0
    %1847 = vmatprep.subr.mxu0 0.0
    %1848 = vmatpush1.msra.mxu0 0.0
    %1849 = vmatprep.subr.mxu0 0.0
    %1850 = vmatpush1.msra.mxu0 0.0
    %1851 = vmatprep.subr.mxu0 0.0
    %1852 = vmatpush1.msra.mxu0 0.0
    %1853 = vmatprep.subr.mxu0 0.0
    %1854 = vmatpush1.msra.mxu0 0.0
    %1855 = vmatprep.subr.mxu0 0.0
    %1856 = vmatpush1.msra.mxu0 0.0
    %1857 = vmatprep.subr.mxu0 0.0
    %1858 = vmatpush1.msra.mxu0 0.0
    %1859 = vmatprep.subr.mxu0 0.0
    %1860 = vmatpush1.msra.mxu0 0.0
    %1861 = vmatprep.subr.mxu0 0.0
    %1862 = vmatpush1.msra.mxu0 0.0
    %1863 = vmatprep.subr.mxu0 0.0
    %1864 = vmatpush1.msra.mxu0 0.0
    %1865 = vmatprep.mubr.f32.mxu0 0.0
    %1866 = vmatmul.mubr.f32.gmra.mrb[0].mxu0 %v1799
    %v1867 = vpop.f32.mrb[0].mxu0
    %v1868 = vadd.f32 0.0, %v1867
    %v1869 = vpop.f32.mrb[0].mxu0
    %1870 = vdwg.mxu0
    %vm1871 = vcmask 162816
    %v1873 = vsel %vm1871, %v1795, 0
    %v1876 = vsel %vm1138, %v121, 0
    %1878 = vmatprep.subr.mxu0 0.0
    %v1879 = vand.u32 %v119, 4294901760
    %1880 = vmatpush1.msra.mxu0 %v1879
    %1881 = vmatprep.subr.mxu0 0.0
    %v1882 = vand.u32 %v120, 4294901760
    %1883 = vmatpush1.msra.mxu0 %v1882
    %1884 = vmatprep.subr.mxu0 0.0
    %v1885 = vand.u32 %v1876, 4294901760
    %1886 = vmatpush1.msra.mxu0 %v1885
    %1887 = vmatprep.subr.mxu0 0.0
    %1888 = vmatpush1.msra.mxu0 0.0
    %1889 = vmatprep.subr.mxu0 0.0
    %1890 = vmatpush1.msra.mxu0 0.0
    %1891 = vmatprep.subr.mxu0 0.0
    %1892 = vmatpush1.msra.mxu0 0.0
    %1893 = vmatprep.subr.mxu0 0.0
    %1894 = vmatpush1.msra.mxu0 0.0
    %1895 = vmatprep.subr.mxu0 0.0
    %1896 = vmatpush1.msra.mxu0 0.0
    %1897 = vmatprep.subr.mxu0 0.0
    %1898 = vmatpush1.msra.mxu0 0.0
    %1899 = vmatprep.subr.mxu0 0.0
    %1900 = vmatpush1.msra.mxu0 0.0
    %1901 = vmatprep.subr.mxu0 0.0
    %1902 = vmatpush1.msra.mxu0 0.0
    %1903 = vmatprep.subr.mxu0 0.0
    %1904 = vmatpush1.msra.mxu0 0.0
    %1905 = vmatprep.subr.mxu0 0.0
    %1906 = vmatpush1.msra.mxu0 0.0
    %1907 = vmatprep.subr.mxu0 0.0
    %1908 = vmatpush1.msra.mxu0 0.0
    %1909 = vmatprep.subr.mxu0 0.0
    %1910 = vmatpush1.msra.mxu0 0.0
    %1911 = vmatprep.subr.mxu0 0.0
    %1912 = vmatpush1.msra.mxu0 0.0
    %1913 = vmatprep.subr.mxu0 0.0
    %1914 = vmatpush1.msra.mxu0 0.0
    %1915 = vmatprep.subr.mxu0 0.0
    %1916 = vmatpush1.msra.mxu0 0.0
    %1917 = vmatprep.subr.mxu0 0.0
    %1918 = vmatpush1.msra.mxu0 0.0
    %1919 = vmatprep.subr.mxu0 0.0
    %1920 = vmatpush1.msra.mxu0 0.0
    %1921 = vmatprep.subr.mxu0 0.0
    %1922 = vmatpush1.msra.mxu0 0.0
    %1923 = vmatprep.subr.mxu0 0.0
    %1924 = vmatpush1.msra.mxu0 0.0
    %1925 = vmatprep.subr.mxu0 0.0
    %1926 = vmatpush1.msra.mxu0 0.0
    %1927 = vmatprep.subr.mxu0 0.0
    %1928 = vmatpush1.msra.mxu0 0.0
    %1929 = vmatprep.subr.mxu0 0.0
    %1930 = vmatpush1.msra.mxu0 0.0
    %1931 = vmatprep.subr.mxu0 0.0
    %1932 = vmatpush1.msra.mxu0 0.0
    %1933 = vmatprep.subr.mxu0 0.0
    %1934 = vmatpush1.msra.mxu0 0.0
    %1935 = vmatprep.subr.mxu0 0.0
    %1936 = vmatpush1.msra.mxu0 0.0
    %1937 = vmatprep.subr.mxu0 0.0
    %1938 = vmatpush1.msra.mxu0 0.0
    %1939 = vmatprep.subr.mxu0 0.0
    %1940 = vmatpush1.msra.mxu0 0.0
    %1941 = vmatprep.subr.mxu0 0.0
    %1942 = vmatpush1.msra.mxu0 0.0
    %1943 = vmatprep.subr.mxu0 0.0
    %1944 = vmatpush1.msra.mxu0 0.0
    %1945 = vmatprep.mubr.f32.mxu0 0.0
    %v1946 = vand.u32 %v1873, 4294901760
    %v1947 = vsub.f32 %v1873, %v1946
    %v1948 = vand.u32 %v1947, 4294901760
    %v1949 = vsub.f32 %v1947, %v1948
    %v1950 = vand.u32 %v1949, 4294901760
    %1951 = vmatmul.mubr.f32.gmra.mrb[0].mxu0 %v1950
    %v1952 = vpop.f32.mrb[0].mxu0
    %v1953 = vadd.f32 %v1868, %v1952
    %v1954 = vpop.f32.mrb[0].mxu0
    %1955 = vdwg.mxu0
    %1956 = vmatprep.subr.mxu0 0.0
    %v1957 = vand.u32 %v119, 4294901760
    %v1958 = vsub.f32 %v119, %v1957
    %v1959 = vand.u32 %v1958, 4294901760
    %v1960 = vsub.f32 %v1958, %v1959
    %v1961 = vand.u32 %v1960, 4294901760
    %1962 = vmatpush1.msra.mxu0 %v1961
    %1963 = vmatprep.subr.mxu0 0.0
    %v1964 = vand.u32 %v120, 4294901760
    %v1965 = vsub.f32 %v120, %v1964
    %v1966 = vand.u32 %v1965, 4294901760
    %v1967 = vsub.f32 %v1965, %v1966
    %v1968 = vand.u32 %v1967, 4294901760
    %1969 = vmatpush1.msra.mxu0 %v1968
    %1970 = vmatprep.subr.mxu0 0.0
    %v1971 = vand.u32 %v1876, 4294901760
    %v1972 = vsub.f32 %v1876, %v1971
    %v1973 = vand.u32 %v1972, 4294901760
    %v1974 = vsub.f32 %v1972, %v1973
    %v1975 = vand.u32 %v1974, 4294901760
    %1976 = vmatpush1.msra.mxu0 %v1975
    %1977 = vmatprep.subr.mxu0 0.0
    %1978 = vmatpush1.msra.mxu0 0.0
    %1979 = vmatprep.subr.mxu0 0.0
    %1980 = vmatpush1.msra.mxu0 0.0
    %1981 = vmatprep.subr.mxu0 0.0
    %1982 = vmatpush1.msra.mxu0 0.0
    %1983 = vmatprep.subr.mxu0 0.0
    %1984 = vmatpush1.msra.mxu0 0.0
    %1985 = vmatprep.subr.mxu0 0.0
    %1986 = vmatpush1.msra.mxu0 0.0
    %1987 = vmatprep.subr.mxu0 0.0
    %1988 = vmatpush1.msra.mxu0 0.0
    %1989 = vmatprep.subr.mxu0 0.0
    %1990 = vmatpush1.msra.mxu0 0.0
    %1991 = vmatprep.subr.mxu0 0.0
    %1992 = vmatpush1.msra.mxu0 0.0
    %1993 = vmatprep.subr.mxu0 0.0
    %1994 = vmatpush1.msra.mxu0 0.0
    %1995 = vmatprep.subr.mxu0 0.0
    %1996 = vmatpush1.msra.mxu0 0.0
    %1997 = vmatprep.subr.mxu0 0.0
    %1998 = vmatpush1.msra.mxu0 0.0
    %1999 = vmatprep.subr.mxu0 0.0
    %2000 = vmatpush1.msra.mxu0 0.0
    %2001 = vmatprep.subr.mxu0 0.0
    %2002 = vmatpush1.msra.mxu0 0.0
    %2003 = vmatprep.subr.mxu0 0.0
    %2004 = vmatpush1.msra.mxu0 0.0
    %2005 = vmatprep.subr.mxu0 0.0
    %2006 = vmatpush1.msra.mxu0 0.0
    %2007 = vmatprep.subr.mxu0 0.0
    %2008 = vmatpush1.msra.mxu0 0.0
    %2009 = vmatprep.subr.mxu0 0.0
    %2010 = vmatpush1.msra.mxu0 0.0
    %2011 = vmatprep.subr.mxu0 0.0
    %2012 = vmatpush1.msra.mxu0 0.0
    %2013 = vmatprep.subr.mxu0 0.0
    %2014 = vmatpush1.msra.mxu0 0.0
    %2015 = vmatprep.subr.mxu0 0.0
    %2016 = vmatpush1.msra.mxu0 0.0
    %2017 = vmatprep.subr.mxu0 0.0
    %2018 = vmatpush1.msra.mxu0 0.0
    %2019 = vmatprep.subr.mxu0 0.0
    %2020 = vmatpush1.msra.mxu0 0.0
    %2021 = vmatprep.subr.mxu0 0.0
    %2022 = vmatpush1.msra.mxu0 0.0
    %2023 = vmatprep.subr.mxu0 0.0
    %2024 = vmatpush1.msra.mxu0 0.0
    %2025 = vmatprep.subr.mxu0 0.0
    %2026 = vmatpush1.msra.mxu0 0.0
    %2027 = vmatprep.subr.mxu0 0.0
    %2028 = vmatpush1.msra.mxu0 0.0
    %2029 = vmatprep.subr.mxu0 0.0
    %2030 = vmatpush1.msra.mxu0 0.0
    %2031 = vmatprep.subr.mxu0 0.0
    %2032 = vmatpush1.msra.mxu0 0.0
    %2033 = vmatprep.subr.mxu0 0.0
    %2034 = vmatpush1.msra.mxu0 0.0
    %2035 = vmatprep.mubr.f32.mxu0 0.0
    %v2036 = vand.u32 %v1873, 4294901760
    %2037 = vmatmul.mubr.f32.gmra.mrb[0].mxu0 %v2036
    %v2038 = vpop.f32.mrb[0].mxu0
    %v2039 = vadd.f32 %v1953, %v2038
    %v2040 = vpop.f32.mrb[0].mxu0
    %2041 = vdwg.mxu0
    %2042 = vmatprep.subr.mxu0 0.0
    %v2043 = vand.u32 %v119, 4294901760
    %v2044 = vsub.f32 %v119, %v2043
    %2045 = vmatpush1.msra.mxu0 %v2044
    %2046 = vmatprep.subr.mxu0 0.0
    %v2047 = vand.u32 %v120, 4294901760
    %v2048 = vsub.f32 %v120, %v2047
    %2049 = vmatpush1.msra.mxu0 %v2048
    %2050 = vmatprep.subr.mxu0 0.0
    %v2051 = vand.u32 %v1876, 4294901760
    %v2052 = vsub.f32 %v1876, %v2051
    %2053 = vmatpush1.msra.mxu0 %v2052
    %2054 = vmatprep.subr.mxu0 0.0
    %2055 = vmatpush1.msra.mxu0 0.0
    %2056 = vmatprep.subr.mxu0 0.0
    %2057 = vmatpush1.msra.mxu0 0.0
    %2058 = vmatprep.subr.mxu0 0.0
    %2059 = vmatpush1.msra.mxu0 0.0
    %2060 = vmatprep.subr.mxu0 0.0
    %2061 = vmatpush1.msra.mxu0 0.0
    %2062 = vmatprep.subr.mxu0 0.0
    %2063 = vmatpush1.msra.mxu0 0.0
    %2064 = vmatprep.subr.mxu0 0.0
    %2065 = vmatpush1.msra.mxu0 0.0
    %2066 = vmatprep.subr.mxu0 0.0
    %2067 = vmatpush1.msra.mxu0 0.0
    %2068 = vmatprep.subr.mxu0 0.0
    %2069 = vmatpush1.msra.mxu0 0.0
    %2070 = vmatprep.subr.mxu0 0.0
    %2071 = vmatpush1.msra.mxu0 0.0
    %2072 = vmatprep.subr.mxu0 0.0
    %2073 = vmatpush1.msra.mxu0 0.0
    %2074 = vmatprep.subr.mxu0 0.0
    %2075 = vmatpush1.msra.mxu0 0.0
    %2076 = vmatprep.subr.mxu0 0.0
    %2077 = vmatpush1.msra.mxu0 0.0
    %2078 = vmatprep.subr.mxu0 0.0
    %2079 = vmatpush1.msra.mxu0 0.0
    %2080 = vmatprep.subr.mxu0 0.0
    %2081 = vmatpush1.msra.mxu0 0.0
    %2082 = vmatprep.subr.mxu0 0.0
    %2083 = vmatpush1.msra.mxu0 0.0
    %2084 = vmatprep.subr.mxu0 0.0
    %2085 = vmatpush1.msra.mxu0 0.0
    %2086 = vmatprep.subr.mxu0 0.0
    %2087 = vmatpush1.msra.mxu0 0.0
    %2088 = vmatprep.subr.mxu0 0.0
    %2089 = vmatpush1.msra.mxu0 0.0
    %2090 = vmatprep.subr.mxu0 0.0
    %2091 = vmatpush1.msra.mxu0 0.0
    %2092 = vmatprep.subr.mxu0 0.0
    %2093 = vmatpush1.msra.mxu0 0.0
    %2094 = vmatprep.subr.mxu0 0.0
    %2095 = vmatpush1.msra.mxu0 0.0
    %2096 = vmatprep.subr.mxu0 0.0
    %2097 = vmatpush1.msra.mxu0 0.0
    %2098 = vmatprep.subr.mxu0 0.0
    %2099 = vmatpush1.msra.mxu0 0.0
    %2100 = vmatprep.subr.mxu0 0.0
    %2101 = vmatpush1.msra.mxu0 0.0
    %2102 = vmatprep.subr.mxu0 0.0
    %2103 = vmatpush1.msra.mxu0 0.0
    %2104 = vmatprep.subr.mxu0 0.0
    %2105 = vmatpush1.msra.mxu0 0.0
    %2106 = vmatprep.subr.mxu0 0.0
    %2107 = vmatpush1.msra.mxu0 0.0
    %2108 = vmatprep.subr.mxu0 0.0
    %2109 = vmatpush1.msra.mxu0 0.0
    %2110 = vmatprep.subr.mxu0 0.0
    %2111 = vmatpush1.msra.mxu0 0.0
    %2112 = vmatprep.mubr.f32.mxu0 0.0
    %v2113 = vand.u32 %v1873, 4294901760
    %v2114 = vsub.f32 %v1873, %v2113
    %2115 = vmatmul.mubr.f32.gmra.mrb[0].mxu0 %v2114
    %v2116 = vpop.f32.mrb[0].mxu0
    %v2117 = vadd.f32 %v2039, %v2116
    %v2118 = vpop.f32.mrb[0].mxu0
    %2119 = vdwg.mxu0
    %2120 = vmatprep.subr.mxu0 0.0
    %v2121 = vand.u32 %v119, 4294901760
    %2122 = vmatpush1.msra.mxu0 %v2121
    %2123 = vmatprep.subr.mxu0 0.0
    %v2124 = vand.u32 %v120, 4294901760
    %2125 = vmatpush1.msra.mxu0 %v2124
    %2126 = vmatprep.subr.mxu0 0.0
    %v2127 = vand.u32 %v1876, 4294901760
    %2128 = vmatpush1.msra.mxu0 %v2127
    %2129 = vmatprep.subr.mxu0 0.0
    %2130 = vmatpush1.msra.mxu0 0.0
    %2131 = vmatprep.subr.mxu0 0.0
    %2132 = vmatpush1.msra.mxu0 0.0
    %2133 = vmatprep.subr.mxu0 0.0
    %2134 = vmatpush1.msra.mxu0 0.0
    %2135 = vmatprep.subr.mxu0 0.0
    %2136 = vmatpush1.msra.mxu0 0.0
    %2137 = vmatprep.subr.mxu0 0.0
    %2138 = vmatpush1.msra.mxu0 0.0
    %2139 = vmatprep.subr.mxu0 0.0
    %2140 = vmatpush1.msra.mxu0 0.0
    %2141 = vmatprep.subr.mxu0 0.0
    %2142 = vmatpush1.msra.mxu0 0.0
    %2143 = vmatprep.subr.mxu0 0.0
    %2144 = vmatpush1.msra.mxu0 0.0
    %2145 = vmatprep.subr.mxu0 0.0
    %2146 = vmatpush1.msra.mxu0 0.0
    %2147 = vmatprep.subr.mxu0 0.0
    %2148 = vmatpush1.msra.mxu0 0.0
    %2149 = vmatprep.subr.mxu0 0.0
    %2150 = vmatpush1.msra.mxu0 0.0
    %2151 = vmatprep.subr.mxu0 0.0
    %2152 = vmatpush1.msra.mxu0 0.0
    %2153 = vmatprep.subr.mxu0 0.0
    %2154 = vmatpush1.msra.mxu0 0.0
    %2155 = vmatprep.subr.mxu0 0.0
    %2156 = vmatpush1.msra.mxu0 0.0
    %2157 = vmatprep.subr.mxu0 0.0
    %2158 = vmatpush1.msra.mxu0 0.0
    %2159 = vmatprep.subr.mxu0 0.0
    %2160 = vmatpush1.msra.mxu0 0.0
    %2161 = vmatprep.subr.mxu0 0.0
    %2162 = vmatpush1.msra.mxu0 0.0
    %2163 = vmatprep.subr.mxu0 0.0
    %2164 = vmatpush1.msra.mxu0 0.0
    %2165 = vmatprep.subr.mxu0 0.0
    %2166 = vmatpush1.msra.mxu0 0.0
    %2167 = vmatprep.subr.mxu0 0.0
    %2168 = vmatpush1.msra.mxu0 0.0
    %2169 = vmatprep.subr.mxu0 0.0
    %2170 = vmatpush1.msra.mxu0 0.0
    %2171 = vmatprep.subr.mxu0 0.0
    %2172 = vmatpush1.msra.mxu0 0.0
    %2173 = vmatprep.subr.mxu0 0.0
    %2174 = vmatpush1.msra.mxu0 0.0
    %2175 = vmatprep.subr.mxu0 0.0
    %2176 = vmatpush1.msra.mxu0 0.0
    %2177 = vmatprep.subr.mxu0 0.0
    %2178 = vmatpush1.msra.mxu0 0.0
    %2179 = vmatprep.subr.mxu0 0.0
    %2180 = vmatpush1.msra.mxu0 0.0
    %2181 = vmatprep.subr.mxu0 0.0
    %2182 = vmatpush1.msra.mxu0 0.0
    %2183 = vmatprep.subr.mxu0 0.0
    %2184 = vmatpush1.msra.mxu0 0.0
    %2185 = vmatprep.subr.mxu0 0.0
    %2186 = vmatpush1.msra.mxu0 0.0
    %2187 = vmatprep.mubr.f32.mxu0 0.0
    %v2188 = vand.u32 %v1873, 4294901760
    %v2189 = vsub.f32 %v1873, %v2188
    %v2190 = vand.u32 %v2189, 4294901760
    %2191 = vmatmul.mubr.f32.gmra.mrb[0].mxu0 %v2190
    %v2192 = vpop.f32.mrb[0].mxu0
    %v2193 = vadd.f32 %v2117, %v2192
    %v2194 = vpop.f32.mrb[0].mxu0
    %2195 = vdwg.mxu0
    %2196 = vmatprep.subr.mxu0 0.0
    %v2197 = vand.u32 %v119, 4294901760
    %v2198 = vsub.f32 %v119, %v2197
    %v2199 = vand.u32 %v2198, 4294901760
    %2200 = vmatpush1.msra.mxu0 %v2199
    %2201 = vmatprep.subr.mxu0 0.0
    %v2202 = vand.u32 %v120, 4294901760
    %v2203 = vsub.f32 %v120, %v2202
    %v2204 = vand.u32 %v2203, 4294901760
    %2205 = vmatpush1.msra.mxu0 %v2204
    %2206 = vmatprep.subr.mxu0 0.0
    %v2207 = vand.u32 %v1876, 4294901760
    %v2208 = vsub.f32 %v1876, %v2207
    %v2209 = vand.u32 %v2208, 4294901760
    %2210 = vmatpush1.msra.mxu0 %v2209
    %2211 = vmatprep.subr.mxu0 0.0
    %2212 = vmatpush1.msra.mxu0 0.0
    %2213 = vmatprep.subr.mxu0 0.0
    %2214 = vmatpush1.msra.mxu0 0.0
    %2215 = vmatprep.subr.mxu0 0.0
    %2216 = vmatpush1.msra.mxu0 0.0
    %2217 = vmatprep.subr.mxu0 0.0
    %2218 = vmatpush1.msra.mxu0 0.0
    %2219 = vmatprep.subr.mxu0 0.0
    %2220 = vmatpush1.msra.mxu0 0.0
    %2221 = vmatprep.subr.mxu0 0.0
    %2222 = vmatpush1.msra.mxu0 0.0
    %2223 = vmatprep.subr.mxu0 0.0
    %2224 = vmatpush1.msra.mxu0 0.0
    %2225 = vmatprep.subr.mxu0 0.0
    %2226 = vmatpush1.msra.mxu0 0.0
    %2227 = vmatprep.subr.mxu0 0.0
    %2228 = vmatpush1.msra.mxu0 0.0
    %2229 = vmatprep.subr.mxu0 0.0
    %2230 = vmatpush1.msra.mxu0 0.0
    %2231 = vmatprep.subr.mxu0 0.0
    %2232 = vmatpush1.msra.mxu0 0.0
    %2233 = vmatprep.subr.mxu0 0.0
    %2234 = vmatpush1.msra.mxu0 0.0
    %2235 = vmatprep.subr.mxu0 0.0
    %2236 = vmatpush1.msra.mxu0 0.0
    %2237 = vmatprep.subr.mxu0 0.0
    %2238 = vmatpush1.msra.mxu0 0.0
    %2239 = vmatprep.subr.mxu0 0.0
    %2240 = vmatpush1.msra.mxu0 0.0
    %2241 = vmatprep.subr.mxu0 0.0
    %2242 = vmatpush1.msra.mxu0 0.0
    %2243 = vmatprep.subr.mxu0 0.0
    %2244 = vmatpush1.msra.mxu0 0.0
    %2245 = vmatprep.subr.mxu0 0.0
    %2246 = vmatpush1.msra.mxu0 0.0
    %2247 = vmatprep.subr.mxu0 0.0
    %2248 = vmatpush1.msra.mxu0 0.0
    %2249 = vmatprep.subr.mxu0 0.0
    %2250 = vmatpush1.msra.mxu0 0.0
    %2251 = vmatprep.subr.mxu0 0.0
    %2252 = vmatpush1.msra.mxu0 0.0
    %2253 = vmatprep.subr.mxu0 0.0
    %2254 = vmatpush1.msra.mxu0 0.0
    %2255 = vmatprep.subr.mxu0 0.0
    %2256 = vmatpush1.msra.mxu0 0.0
    %2257 = vmatprep.subr.mxu0 0.0
    %2258 = vmatpush1.msra.mxu0 0.0
    %2259 = vmatprep.subr.mxu0 0.0
    %2260 = vmatpush1.msra.mxu0 0.0
    %2261 = vmatprep.subr.mxu0 0.0
    %2262 = vmatpush1.msra.mxu0 0.0
    %2263 = vmatprep.subr.mxu0 0.0
    %2264 = vmatpush1.msra.mxu0 0.0
    %2265 = vmatprep.subr.mxu0 0.0
    %2266 = vmatpush1.msra.mxu0 0.0
    %2267 = vmatprep.subr.mxu0 0.0
    %2268 = vmatpush1.msra.mxu0 0.0
    %2269 = vmatprep.mubr.f32.mxu0 0.0
    %v2270 = vand.u32 %v1873, 4294901760
    %2271 = vmatmul.mubr.f32.gmra.mrb[0].mxu0 %v2270
    %v2272 = vpop.f32.mrb[0].mxu0
    %v2273 = vadd.f32 %v2193, %v2272
    %v2274 = vpop.f32.mrb[0].mxu0
    %2275 = vdwg.mxu0
    %2276 = vmatprep.subr.mxu0 0.0
    %v2277 = vand.u32 %v119, 4294901760
    %2278 = vmatpush1.msra.mxu0 %v2277
    %2279 = vmatprep.subr.mxu0 0.0
    %v2280 = vand.u32 %v120, 4294901760
    %2281 = vmatpush1.msra.mxu0 %v2280
    %2282 = vmatprep.subr.mxu0 0.0
    %v2283 = vand.u32 %v1876, 4294901760
    %2284 = vmatpush1.msra.mxu0 %v2283
    %2285 = vmatprep.subr.mxu0 0.0
    %2286 = vmatpush1.msra.mxu0 0.0
    %2287 = vmatprep.subr.mxu0 0.0
    %2288 = vmatpush1.msra.mxu0 0.0
    %2289 = vmatprep.subr.mxu0 0.0
    %2290 = vmatpush1.msra.mxu0 0.0
    %2291 = vmatprep.subr.mxu0 0.0
    %2292 = vmatpush1.msra.mxu0 0.0
    %2293 = vmatprep.subr.mxu0 0.0
    %2294 = vmatpush1.msra.mxu0 0.0
    %2295 = vmatprep.subr.mxu0 0.0
    %2296 = vmatpush1.msra.mxu0 0.0
    %2297 = vmatprep.subr.mxu0 0.0
    %2298 = vmatpush1.msra.mxu0 0.0
    %2299 = vmatprep.subr.mxu0 0.0
    %2300 = vmatpush1.msra.mxu0 0.0
    %2301 = vmatprep.subr.mxu0 0.0
    %2302 = vmatpush1.msra.mxu0 0.0
    %2303 = vmatprep.subr.mxu0 0.0
    %2304 = vmatpush1.msra.mxu0 0.0
    %2305 = vmatprep.subr.mxu0 0.0
    %2306 = vmatpush1.msra.mxu0 0.0
    %2307 = vmatprep.subr.mxu0 0.0
    %2308 = vmatpush1.msra.mxu0 0.0
    %2309 = vmatprep.subr.mxu0 0.0
    %2310 = vmatpush1.msra.mxu0 0.0
    %2311 = vmatprep.subr.mxu0 0.0
    %2312 = vmatpush1.msra.mxu0 0.0
    %2313 = vmatprep.subr.mxu0 0.0
    %2314 = vmatpush1.msra.mxu0 0.0
    %2315 = vmatprep.subr.mxu0 0.0
    %2316 = vmatpush1.msra.mxu0 0.0
    %2317 = vmatprep.subr.mxu0 0.0
    %2318 = vmatpush1.msra.mxu0 0.0
    %2319 = vmatprep.subr.mxu0 0.0
    %2320 = vmatpush1.msra.mxu0 0.0
    %2321 = vmatprep.subr.mxu0 0.0
    %2322 = vmatpush1.msra.mxu0 0.0
    %2323 = vmatprep.subr.mxu0 0.0
    %2324 = vmatpush1.msra.mxu0 0.0
    %2325 = vmatprep.subr.mxu0 0.0
    %2326 = vmatpush1.msra.mxu0 0.0
    %2327 = vmatprep.subr.mxu0 0.0
    %2328 = vmatpush1.msra.mxu0 0.0
    %2329 = vmatprep.subr.mxu0 0.0
    %2330 = vmatpush1.msra.mxu0 0.0
    %2331 = vmatprep.subr.mxu0 0.0
    %2332 = vmatpush1.msra.mxu0 0.0
    %2333 = vmatprep.subr.mxu0 0.0
    %2334 = vmatpush1.msra.mxu0 0.0
    %2335 = vmatprep.subr.mxu0 0.0
    %2336 = vmatpush1.msra.mxu0 0.0
    %2337 = vmatprep.subr.mxu0 0.0
    %2338 = vmatpush1.msra.mxu0 0.0
    %2339 = vmatprep.subr.mxu0 0.0
    %2340 = vmatpush1.msra.mxu0 0.0
    %2341 = vmatprep.subr.mxu0 0.0
    %2342 = vmatpush1.msra.mxu0 0.0
    %2343 = vmatprep.mubr.f32.mxu0 0.0
    %v2344 = vand.u32 %v1873, 4294901760
    %2345 = vmatmul.mubr.f32.gmra.mrb[0].mxu0 %v2344
    %v2346 = vpop.f32.mrb[0].mxu0
    %v2347 = vadd.f32 %v2273, %v2346
    %v2348 = vpop.f32.mrb[0].mxu0
    %2349 = vdwg.mxu0
    %v2351 = vlaneseq
    %v2352 = vshrl.u32 %v2351, 7
    %v2353 = vsub.s32 0, %v2352
    %v2354 = vrot.slane %v128, %v2353
    %v2356 = vadd.f32 %v2347, %v2354
    %vm2357 = vcmp.ge.s32.totalorder %v135, 64
    %vm2358 = vcmp.lt.s32.totalorder %v135, 96
    %vm2359 = vmand %vm2357, %vm2358
    %v2360 = vsel %vm2359, 2.0, 1.0
    %v2361 = vsel %vm2359, 1.0, 0.0
    %vm2362 = vcmask 261120
    %v2363 = vsel %vm2362, 0.0, 0
    %2365 = vmatprep.subr.mxu0 0.0
    %2366 = vmatpush1.msra.mxu0 %v124
    %2367 = vmatprep.subr.mxu0 0.0
    %2368 = vmatpush1.msra.mxu0 %v125
    %2369 = vmatprep.subr.mxu0 0.0
    %2370 = vmatpush1.msra.mxu0 %v126
    %2371 = vmatprep.subr.mxu0 0.0
    %2372 = vmatpush1.msra.mxu0 %v127
    %2373 = vmatprep.subr.mxu0 0.0
    %2374 = vmatpush1.msra.mxu0 0.0
    %2375 = vmatprep.subr.mxu0 0.0
    %2376 = vmatpush1.msra.mxu0 0.0
    %2377 = vmatprep.subr.mxu0 0.0
    %2378 = vmatpush1.msra.mxu0 0.0
    %2379 = vmatprep.subr.mxu0 0.0
    %2380 = vmatpush1.msra.mxu0 0.0
    %2381 = vmatprep.subr.mxu0 0.0
    %2382 = vmatpush1.msra.mxu0 0.0
    %2383 = vmatprep.subr.mxu0 0.0
    %2384 = vmatpush1.msra.mxu0 0.0
    %2385 = vmatprep.subr.mxu0 0.0
    %2386 = vmatpush1.msra.mxu0 0.0
    %2387 = vmatprep.subr.mxu0 0.0
    %2388 = vmatpush1.msra.mxu0 0.0
    %2389 = vmatprep.subr.mxu0 0.0
    %2390 = vmatpush1.msra.mxu0 0.0
    %2391 = vmatprep.subr.mxu0 0.0
    %2392 = vmatpush1.msra.mxu0 0.0
    %2393 = vmatprep.subr.mxu0 0.0
    %2394 = vmatpush1.msra.mxu0 0.0
    %2395 = vmatprep.subr.mxu0 0.0
    %2396 = vmatpush1.msra.mxu0 0.0
    %2397 = vmatprep.subr.mxu0 0.0
    %2398 = vmatpush1.msra.mxu0 0.0
    %2399 = vmatprep.subr.mxu0 0.0
    %2400 = vmatpush1.msra.mxu0 0.0
    %2401 = vmatprep.subr.mxu0 0.0
    %2402 = vmatpush1.msra.mxu0 0.0
    %2403 = vmatprep.subr.mxu0 0.0
    %2404 = vmatpush1.msra.mxu0 0.0
    %2405 = vmatprep.subr.mxu0 0.0
    %2406 = vmatpush1.msra.mxu0 0.0
    %2407 = vmatprep.subr.mxu0 0.0
    %2408 = vmatpush1.msra.mxu0 0.0
    %2409 = vmatprep.subr.mxu0 0.0
    %2410 = vmatpush1.msra.mxu0 0.0
    %2411 = vmatprep.subr.mxu0 0.0
    %2412 = vmatpush1.msra.mxu0 0.0
    %2413 = vmatprep.subr.mxu0 0.0
    %2414 = vmatpush1.msra.mxu0 0.0
    %2415 = vmatprep.subr.mxu0 0.0
    %2416 = vmatpush1.msra.mxu0 0.0
    %2417 = vmatprep.subr.mxu0 0.0
    %2418 = vmatpush1.msra.mxu0 0.0
    %2419 = vmatprep.subr.mxu0 0.0
    %2420 = vmatpush1.msra.mxu0 0.0
    %2421 = vmatprep.subr.mxu0 0.0
    %2422 = vmatpush1.msra.mxu0 0.0
    %2423 = vmatprep.subr.mxu0 0.0
    %2424 = vmatpush1.msra.mxu0 0.0
    %2425 = vmatprep.subr.mxu0 0.0
    %2426 = vmatpush1.msra.mxu0 0.0
    %2427 = vmatprep.subr.mxu0 0.0
    %2428 = vmatpush1.msra.mxu0 0.0
    %2429 = vmatprep.mubr.f32.mxu0 0.0
    %2430 = vmatmul.mubr.f32.gmra.mrb[0].mxu0 %v2363
    %v2431 = vpop.f32.mrb[0].mxu0
    %v2432 = vadd.f32 %v2356, %v2431
    %v2433 = vpop.f32.mrb[0].mxu0
    %2434 = vdwg.mxu0
    %v2435 = vxor.u32 %v2432, 2147483648
    %v2436 = vmul.f32 %v2435, 1.442695
    %v2437 = vpow.pop %v2436
    %v2438 = vadd.f32 %v2437, 1.0
    %v2439 = vrcp.pop %v2438
    %v2440 = vmul.f32 1.0, %v2439
    %v2441 = vmul.f32 %v2440, %v2360
    %v2442 = vsub.f32 %v2441, %v2361
    %v2443 = vmul.f32 %v2442, 0.0
    %2445 = vrot.lane.b32.xlu0 %v2442, 64
    %v2446 = vpop.permute.xlu0 %2445
    %v2448 = vmul.f32 %v2442, %v2446
    %2450 = vrot.lane.b32.xlu0 %v2448, 32
    %v2451 = vpop.permute.xlu0 %2450
    %v2453 = vadd.f32 %v2443, %v2451
    %v2454 = vtanh.pop %v2453
    %2456 = vrot.lane.b32.xlu0 %v2454, 64
    %v2457 = vpop.permute.xlu0 %2456
    %v2459 = vmul.f32 %v2442, %v2457
    %2461 = vrot.lane.b32.xlu0 %v2459, 32
    %v2462 = vpop.permute.xlu0 %2461
    %v2464 = vrot.slane %v2356, 1
    %v2466 = vsel %vm2362, %v2462, 0
    %2468 = vmatprep.subr.mxu0 0.0
    %2469 = vmatpush1.msra.mxu0 %v124
    %2470 = vmatprep.subr.mxu0 0.0
    %2471 = vmatpush1.msra.mxu0 %v125
    %2472 = vmatprep.subr.mxu0 0.0
    %2473 = vmatpush1.msra.mxu0 %v126
    %2474 = vmatprep.subr.mxu0 0.0
    %2475 = vmatpush1.msra.mxu0 %v127
    %2476 = vmatprep.subr.mxu0 0.0
    %2477 = vmatpush1.msra.mxu0 0.0
    %2478 = vmatprep.subr.mxu0 0.0
    %2479 = vmatpush1.msra.mxu0 0.0
    %2480 = vmatprep.subr.mxu0 0.0
    %2481 = vmatpush1.msra.mxu0 0.0
    %2482 = vmatprep.subr.mxu0 0.0
    %2483 = vmatpush1.msra.mxu0 0.0
    %2484 = vmatprep.subr.mxu0 0.0
    %2485 = vmatpush1.msra.mxu0 0.0
    %2486 = vmatprep.subr.mxu0 0.0
    %2487 = vmatpush1.msra.mxu0 0.0
    %2488 = vmatprep.subr.mxu0 0.0
    %2489 = vmatpush1.msra.mxu0 0.0
    %2490 = vmatprep.subr.mxu0 0.0
    %2491 = vmatpush1.msra.mxu0 0.0
    %2492 = vmatprep.subr.mxu0 0.0
    %2493 = vmatpush1.msra.mxu0 0.0
    %2494 = vmatprep.subr.mxu0 0.0
    %2495 = vmatpush1.msra.mxu0 0.0
    %2496 = vmatprep.subr.mxu0 0.0
    %2497 = vmatpush1.msra.mxu0 0.0
    %2498 = vmatprep.subr.mxu0 0.0
    %2499 = vmatpush1.msra.mxu0 0.0
    %2500 = vmatprep.subr.mxu0 0.0
    %2501 = vmatpush1.msra.mxu0 0.0
    %2502 = vmatprep.subr.mxu0 0.0
    %2503 = vmatpush1.msra.mxu0 0.0
    %2504 = vmatprep.subr.mxu0 0.0
    %2505 = vmatpush1.msra.mxu0 0.0
    %2506 = vmatprep.subr.mxu0 0.0
    %2507 = vmatpush1.msra.mxu0 0.0
    %2508 = vmatprep.subr.mxu0 0.0
    %2509 = vmatpush1.msra.mxu0 0.0
    %2510 = vmatprep.subr.mxu0 0.0
    %2511 = vmatpush1.msra.mxu0 0.0
    %2512 = vmatprep.subr.mxu0 0.0
    %2513 = vmatpush1.msra.mxu0 0.0
    %2514 = vmatprep.subr.mxu0 0.0
    %2515 = vmatpush1.msra.mxu0 0.0
    %2516 = vmatprep.subr.mxu0 0.0
    %2517 = vmatpush1.msra.mxu0 0.0
    %2518 = vmatprep.subr.mxu0 0.0
    %2519 = vmatpush1.msra.mxu0 0.0
    %2520 = vmatprep.subr.mxu0 0.0
    %2521 = vmatpush1.msra.mxu0 0.0
    %2522 = vmatprep.subr.mxu0 0.0
    %2523 = vmatpush1.msra.mxu0 0.0
    %2524 = vmatprep.subr.mxu0 0.0
    %2525 = vmatpush1.msra.mxu0 0.0
    %2526 = vmatprep.subr.mxu0 0.0
    %2527 = vmatpush1.msra.mxu0 0.0
    %2528 = vmatprep.subr.mxu0 0.0
    %2529 = vmatpush1.msra.mxu0 0.0
    %2530 = vmatprep.subr.mxu0 0.0
    %2531 = vmatpush1.msra.mxu0 0.0
    %2532 = vmatprep.mubr.f32.mxu0 0.0
    %2533 = vmatmul.mubr.f32.gmra.mrb[0].mxu0 %v2466
    %v2534 = vpop.f32.mrb[0].mxu0
    %v2535 = vadd.f32 %v2464, %v2534
    %v2536 = vpop.f32.mrb[0].mxu0
    %2537 = vdwg.mxu0
    %v2538 = vxor.u32 %v2535, 2147483648
    %v2539 = vmul.f32 %v2538, 1.442695
    %v2540 = vpow.pop %v2539
    %v2541 = vadd.f32 %v2540, 1.0
    %v2542 = vrcp.pop %v2541
    %v2543 = vmul.f32 1.0, %v2542
    %v2544 = vmul.f32 %v2543, %v2360
    %v2545 = vsub.f32 %v2544, %v2361
    %v2546 = vmul.f32 %v2545, %v2453
    %2548 = vrot.lane.b32.xlu0 %v2545, 64
    %v2549 = vpop.permute.xlu0 %2548
    %v2551 = vmul.f32 %v2545, %v2549
    %2553 = vrot.lane.b32.xlu0 %v2551, 32
    %v2554 = vpop.permute.xlu0 %2553
    %v2556 = vadd.f32 %v2546, %v2554
    %v2557 = vtanh.pop %v2556
    %2559 = vrot.lane.b32.xlu0 %v2557, 64
    %v2560 = vpop.permute.xlu0 %2559
    %v2562 = vmul.f32 %v2545, %v2560
    %2564 = vrot.lane.b32.xlu0 %v2562, 32
    %v2565 = vpop.permute.xlu0 %2564
    %v2566 = vrot.slane %v2356, 2
    %v2568 = vsel %vm2362, %v2565, 0
    %2570 = vmatprep.subr.mxu0 0.0
    %2571 = vmatpush1.msra.mxu0 %v124
    %2572 = vmatprep.subr.mxu0 0.0
    %2573 = vmatpush1.msra.mxu0 %v125
    %2574 = vmatprep.subr.mxu0 0.0
    %2575 = vmatpush1.msra.mxu0 %v126
    %2576 = vmatprep.subr.mxu0 0.0
    %2577 = vmatpush1.msra.mxu0 %v127
    %2578 = vmatprep.subr.mxu0 0.0
    %2579 = vmatpush1.msra.mxu0 0.0
    %2580 = vmatprep.subr.mxu0 0.0
    %2581 = vmatpush1.msra.mxu0 0.0
    %2582 = vmatprep.subr.mxu0 0.0
    %2583 = vmatpush1.msra.mxu0 0.0
    %2584 = vmatprep.subr.mxu0 0.0
    %2585 = vmatpush1.msra.mxu0 0.0
    %2586 = vmatprep.subr.mxu0 0.0
    %2587 = vmatpush1.msra.mxu0 0.0
    %2588 = vmatprep.subr.mxu0 0.0
    %2589 = vmatpush1.msra.mxu0 0.0
    %2590 = vmatprep.subr.mxu0 0.0
    %2591 = vmatpush1.msra.mxu0 0.0
    %2592 = vmatprep.subr.mxu0 0.0
    %2593 = vmatpush1.msra.mxu0 0.0
    %2594 = vmatprep.subr.mxu0 0.0
    %2595 = vmatpush1.msra.mxu0 0.0
    %2596 = vmatprep.subr.mxu0 0.0
    %2597 = vmatpush1.msra.mxu0 0.0
    %2598 = vmatprep.subr.mxu0 0.0
    %2599 = vmatpush1.msra.mxu0 0.0
    %2600 = vmatprep.subr.mxu0 0.0
    %2601 = vmatpush1.msra.mxu0 0.0
    %2602 = vmatprep.subr.mxu0 0.0
    %2603 = vmatpush1.msra.mxu0 0.0
    %2604 = vmatprep.subr.mxu0 0.0
    %2605 = vmatpush1.msra.mxu0 0.0
    %2606 = vmatprep.subr.mxu0 0.0
    %2607 = vmatpush1.msra.mxu0 0.0
    %2608 = vmatprep.subr.mxu0 0.0
    %2609 = vmatpush1.msra.mxu0 0.0
    %2610 = vmatprep.subr.mxu0 0.0
    %2611 = vmatpush1.msra.mxu0 0.0
    %2612 = vmatprep.subr.mxu0 0.0
    %2613 = vmatpush1.msra.mxu0 0.0
    %2614 = vmatprep.subr.mxu0 0.0
    %2615 = vmatpush1.msra.mxu0 0.0
    %2616 = vmatprep.subr.mxu0 0.0
    %2617 = vmatpush1.msra.mxu0 0.0
    %2618 = vmatprep.subr.mxu0 0.0
    %2619 = vmatpush1.msra.mxu0 0.0
    %2620 = vmatprep.subr.mxu0 0.0
    %2621 = vmatpush1.msra.mxu0 0.0
    %2622 = vmatprep.subr.mxu0 0.0
    %2623 = vmatpush1.msra.mxu0 0.0
    %2624 = vmatprep.subr.mxu0 0.0
    %2625 = vmatpush1.msra.mxu0 0.0
    %2626 = vmatprep.subr.mxu0 0.0
    %2627 = vmatpush1.msra.mxu0 0.0
    %2628 = vmatprep.subr.mxu0 0.0
    %2629 = vmatpush1.msra.mxu0 0.0
    %2630 = vmatprep.subr.mxu0 0.0
    %2631 = vmatpush1.msra.mxu0 0.0
    %2632 = vmatprep.subr.mxu0 0.0
    %2633 = vmatpush1.msra.mxu0 0.0
    %2634 = vmatprep.mubr.f32.mxu0 0.0
    %2635 = vmatmul.mubr.f32.gmra.mrb[0].mxu0 %v2568
    %v2636 = vpop.f32.mrb[0].mxu0
    %v2637 = vadd.f32 %v2566, %v2636
    %v2638 = vpop.f32.mrb[0].mxu0
    %2639 = vdwg.mxu0
    %v2640 = vxor.u32 %v2637, 2147483648
    %v2641 = vmul.f32 %v2640, 1.442695
    %v2642 = vpow.pop %v2641
    %v2643 = vadd.f32 %v2642, 1.0
    %v2644 = vrcp.pop %v2643
    %v2645 = vmul.f32 1.0, %v2644
    %v2646 = vmul.f32 %v2645, %v2360
    %v2647 = vsub.f32 %v2646, %v2361
    %v2648 = vmul.f32 %v2647, %v2556
    %2650 = vrot.lane.b32.xlu0 %v2647, 64
    %v2651 = vpop.permute.xlu0 %2650
    %v2653 = vmul.f32 %v2647, %v2651
    %2655 = vrot.lane.b32.xlu0 %v2653, 32
    %v2656 = vpop.permute.xlu0 %2655
    %v2658 = vadd.f32 %v2648, %v2656
    %v2659 = vtanh.pop %v2658
    %2661 = vrot.lane.b32.xlu0 %v2659, 64
    %v2662 = vpop.permute.xlu0 %2661
    %v2664 = vmul.f32 %v2647, %v2662
    %2666 = vrot.lane.b32.xlu0 %v2664, 32
    %v2667 = vpop.permute.xlu0 %2666
    %v2668 = vrot.slane %v2356, 3
    %v2670 = vsel %vm2362, %v2667, 0
    %2672 = vmatprep.subr.mxu0 0.0
    %2673 = vmatpush1.msra.mxu0 %v124
    %2674 = vmatprep.subr.mxu0 0.0
    %2675 = vmatpush1.msra.mxu0 %v125
    %2676 = vmatprep.subr.mxu0 0.0
    %2677 = vmatpush1.msra.mxu0 %v126
    %2678 = vmatprep.subr.mxu0 0.0
    %2679 = vmatpush1.msra.mxu0 %v127
    %2680 = vmatprep.subr.mxu0 0.0
    %2681 = vmatpush1.msra.mxu0 0.0
    %2682 = vmatprep.subr.mxu0 0.0
    %2683 = vmatpush1.msra.mxu0 0.0
    %2684 = vmatprep.subr.mxu0 0.0
    %2685 = vmatpush1.msra.mxu0 0.0
    %2686 = vmatprep.subr.mxu0 0.0
    %2687 = vmatpush1.msra.mxu0 0.0
    %2688 = vmatprep.subr.mxu0 0.0
    %2689 = vmatpush1.msra.mxu0 0.0
    %2690 = vmatprep.subr.mxu0 0.0
    %2691 = vmatpush1.msra.mxu0 0.0
    %2692 = vmatprep.subr.mxu0 0.0
    %2693 = vmatpush1.msra.mxu0 0.0
    %2694 = vmatprep.subr.mxu0 0.0
    %2695 = vmatpush1.msra.mxu0 0.0
    %2696 = vmatprep.subr.mxu0 0.0
    %2697 = vmatpush1.msra.mxu0 0.0
    %2698 = vmatprep.subr.mxu0 0.0
    %2699 = vmatpush1.msra.mxu0 0.0
    %2700 = vmatprep.subr.mxu0 0.0
    %2701 = vmatpush1.msra.mxu0 0.0
    %2702 = vmatprep.subr.mxu0 0.0
    %2703 = vmatpush1.msra.mxu0 0.0
    %2704 = vmatprep.subr.mxu0 0.0
    %2705 = vmatpush1.msra.mxu0 0.0
    %2706 = vmatprep.subr.mxu0 0.0
    %2707 = vmatpush1.msra.mxu0 0.0
    %2708 = vmatprep.subr.mxu0 0.0
    %2709 = vmatpush1.msra.mxu0 0.0
    %2710 = vmatprep.subr.mxu0 0.0
    %2711 = vmatpush1.msra.mxu0 0.0
    %2712 = vmatprep.subr.mxu0 0.0
    %2713 = vmatpush1.msra.mxu0 0.0
    %2714 = vmatprep.subr.mxu0 0.0
    %2715 = vmatpush1.msra.mxu0 0.0
    %2716 = vmatprep.subr.mxu0 0.0
    %2717 = vmatpush1.msra.mxu0 0.0
    %2718 = vmatprep.subr.mxu0 0.0
    %2719 = vmatpush1.msra.mxu0 0.0
    %2720 = vmatprep.subr.mxu0 0.0
    %2721 = vmatpush1.msra.mxu0 0.0
    %2722 = vmatprep.subr.mxu0 0.0
    %2723 = vmatpush1.msra.mxu0 0.0
    %2724 = vmatprep.subr.mxu0 0.0
    %2725 = vmatpush1.msra.mxu0 0.0
    %2726 = vmatprep.subr.mxu0 0.0
    %2727 = vmatpush1.msra.mxu0 0.0
    %2728 = vmatprep.subr.mxu0 0.0
    %2729 = vmatpush1.msra.mxu0 0.0
    %2730 = vmatprep.subr.mxu0 0.0
    %2731 = vmatpush1.msra.mxu0 0.0
    %2732 = vmatprep.subr.mxu0 0.0
    %2733 = vmatpush1.msra.mxu0 0.0
    %2734 = vmatprep.subr.mxu0 0.0
    %2735 = vmatpush1.msra.mxu0 0.0
    %2736 = vmatprep.mubr.f32.mxu0 0.0
    %2737 = vmatmul.mubr.f32.gmra.mrb[0].mxu0 %v2670
    %v2738 = vpop.f32.mrb[0].mxu0
    %v2739 = vadd.f32 %v2668, %v2738
    %v2740 = vpop.f32.mrb[0].mxu0
    %2741 = vdwg.mxu0
    %v2742 = vxor.u32 %v2739, 2147483648
    %v2743 = vmul.f32 %v2742, 1.442695
    %v2744 = vpow.pop %v2743
    %v2745 = vadd.f32 %v2744, 1.0
    %v2746 = vrcp.pop %v2745
    %v2747 = vmul.f32 1.0, %v2746
    %v2748 = vmul.f32 %v2747, %v2360
    %v2749 = vsub.f32 %v2748, %v2361
    %v2750 = vmul.f32 %v2749, %v2658
    %2752 = vrot.lane.b32.xlu0 %v2749, 64
    %v2753 = vpop.permute.xlu0 %2752
    %v2755 = vmul.f32 %v2749, %v2753
    %2757 = vrot.lane.b32.xlu0 %v2755, 32
    %v2758 = vpop.permute.xlu0 %2757
    %v2760 = vadd.f32 %v2750, %v2758
    %v2761 = vtanh.pop %v2760
    %2763 = vrot.lane.b32.xlu0 %v2761, 64
    %v2764 = vpop.permute.xlu0 %2763
    %v2766 = vmul.f32 %v2749, %v2764
    %2768 = vrot.lane.b32.xlu0 %v2766, 32
    %v2769 = vpop.permute.xlu0 %2768
    %v2770 = vrot.slane %v2356, 4
    %v2772 = vsel %vm2362, %v2769, 0
    %2774 = vmatprep.subr.mxu0 0.0
    %2775 = vmatpush1.msra.mxu0 %v124
    %2776 = vmatprep.subr.mxu0 0.0
    %2777 = vmatpush1.msra.mxu0 %v125
    %2778 = vmatprep.subr.mxu0 0.0
    %2779 = vmatpush1.msra.mxu0 %v126
    %2780 = vmatprep.subr.mxu0 0.0
    %2781 = vmatpush1.msra.mxu0 %v127
    %2782 = vmatprep.subr.mxu0 0.0
    %2783 = vmatpush1.msra.mxu0 0.0
    %2784 = vmatprep.subr.mxu0 0.0
    %2785 = vmatpush1.msra.mxu0 0.0
    %2786 = vmatprep.subr.mxu0 0.0
    %2787 = vmatpush1.msra.mxu0 0.0
    %2788 = vmatprep.subr.mxu0 0.0
    %2789 = vmatpush1.msra.mxu0 0.0
    %2790 = vmatprep.subr.mxu0 0.0
    %2791 = vmatpush1.msra.mxu0 0.0
    %2792 = vmatprep.subr.mxu0 0.0
    %2793 = vmatpush1.msra.mxu0 0.0
    %2794 = vmatprep.subr.mxu0 0.0
    %2795 = vmatpush1.msra.mxu0 0.0
    %2796 = vmatprep.subr.mxu0 0.0
    %2797 = vmatpush1.msra.mxu0 0.0
    %2798 = vmatprep.subr.mxu0 0.0
    %2799 = vmatpush1.msra.mxu0 0.0
    %2800 = vmatprep.subr.mxu0 0.0
    %2801 = vmatpush1.msra.mxu0 0.0
    %2802 = vmatprep.subr.mxu0 0.0
    %2803 = vmatpush1.msra.mxu0 0.0
    %2804 = vmatprep.subr.mxu0 0.0
    %2805 = vmatpush1.msra.mxu0 0.0
    %2806 = vmatprep.subr.mxu0 0.0
    %2807 = vmatpush1.msra.mxu0 0.0
    %2808 = vmatprep.subr.mxu0 0.0
    %2809 = vmatpush1.msra.mxu0 0.0
    %2810 = vmatprep.subr.mxu0 0.0
    %2811 = vmatpush1.msra.mxu0 0.0
    %2812 = vmatprep.subr.mxu0 0.0
    %2813 = vmatpush1.msra.mxu0 0.0
    %2814 = vmatprep.subr.mxu0 0.0
    %2815 = vmatpush1.msra.mxu0 0.0
    %2816 = vmatprep.subr.mxu0 0.0
    %2817 = vmatpush1.msra.mxu0 0.0
    %2818 = vmatprep.subr.mxu0 0.0
    %2819 = vmatpush1.msra.mxu0 0.0
    %2820 = vmatprep.subr.mxu0 0.0
    %2821 = vmatpush1.msra.mxu0 0.0
    %2822 = vmatprep.subr.mxu0 0.0
    %2823 = vmatpush1.msra.mxu0 0.0
    %2824 = vmatprep.subr.mxu0 0.0
    %2825 = vmatpush1.msra.mxu0 0.0
    %2826 = vmatprep.subr.mxu0 0.0
    %2827 = vmatpush1.msra.mxu0 0.0
    %2828 = vmatprep.subr.mxu0 0.0
    %2829 = vmatpush1.msra.mxu0 0.0
    %2830 = vmatprep.subr.mxu0 0.0
    %2831 = vmatpush1.msra.mxu0 0.0
    %2832 = vmatprep.subr.mxu0 0.0
    %2833 = vmatpush1.msra.mxu0 0.0
    %2834 = vmatprep.subr.mxu0 0.0
    %2835 = vmatpush1.msra.mxu0 0.0
    %2836 = vmatprep.subr.mxu0 0.0
    %2837 = vmatpush1.msra.mxu0 0.0
    %2838 = vmatprep.mubr.f32.mxu0 0.0
    %2839 = vmatmul.mubr.f32.gmra.mrb[0].mxu0 %v2772
    %v2840 = vpop.f32.mrb[0].mxu0
    %v2841 = vadd.f32 %v2770, %v2840
    %v2842 = vpop.f32.mrb[0].mxu0
    %2843 = vdwg.mxu0
    %v2844 = vxor.u32 %v2841, 2147483648
    %v2845 = vmul.f32 %v2844, 1.442695
    %v2846 = vpow.pop %v2845
    %v2847 = vadd.f32 %v2846, 1.0
    %v2848 = vrcp.pop %v2847
    %v2849 = vmul.f32 1.0, %v2848
    %v2850 = vmul.f32 %v2849, %v2360
    %v2851 = vsub.f32 %v2850, %v2361
    %v2852 = vmul.f32 %v2851, %v2760
    %2854 = vrot.lane.b32.xlu0 %v2851, 64
    %v2855 = vpop.permute.xlu0 %2854
    %v2857 = vmul.f32 %v2851, %v2855
    %2859 = vrot.lane.b32.xlu0 %v2857, 32
    %v2860 = vpop.permute.xlu0 %2859
    %v2862 = vadd.f32 %v2852, %v2860
    %v2863 = vtanh.pop %v2862
    %2865 = vrot.lane.b32.xlu0 %v2863, 64
    %v2866 = vpop.permute.xlu0 %2865
    %v2868 = vmul.f32 %v2851, %v2866
    %2870 = vrot.lane.b32.xlu0 %v2868, 32
    %v2871 = vpop.permute.xlu0 %2870
    %v2872 = vrot.slane %v2356, 5
    %v2874 = vsel %vm2362, %v2871, 0
    %2876 = vmatprep.subr.mxu0 0.0
    %2877 = vmatpush1.msra.mxu0 %v124
    %2878 = vmatprep.subr.mxu0 0.0
    %2879 = vmatpush1.msra.mxu0 %v125
    %2880 = vmatprep.subr.mxu0 0.0
    %2881 = vmatpush1.msra.mxu0 %v126
    %2882 = vmatprep.subr.mxu0 0.0
    %2883 = vmatpush1.msra.mxu0 %v127
    %2884 = vmatprep.subr.mxu0 0.0
    %2885 = vmatpush1.msra.mxu0 0.0
    %2886 = vmatprep.subr.mxu0 0.0
    %2887 = vmatpush1.msra.mxu0 0.0
    %2888 = vmatprep.subr.mxu0 0.0
    %2889 = vmatpush1.msra.mxu0 0.0
    %2890 = vmatprep.subr.mxu0 0.0
    %2891 = vmatpush1.msra.mxu0 0.0
    %2892 = vmatprep.subr.mxu0 0.0
    %2893 = vmatpush1.msra.mxu0 0.0
    %2894 = vmatprep.subr.mxu0 0.0
    %2895 = vmatpush1.msra.mxu0 0.0
    %2896 = vmatprep.subr.mxu0 0.0
    %2897 = vmatpush1.msra.mxu0 0.0
    %2898 = vmatprep.subr.mxu0 0.0
    %2899 = vmatpush1.msra.mxu0 0.0
    %2900 = vmatprep.subr.mxu0 0.0
    %2901 = vmatpush1.msra.mxu0 0.0
    %2902 = vmatprep.subr.mxu0 0.0
    %2903 = vmatpush1.msra.mxu0 0.0
    %2904 = vmatprep.subr.mxu0 0.0
    %2905 = vmatpush1.msra.mxu0 0.0
    %2906 = vmatprep.subr.mxu0 0.0
    %2907 = vmatpush1.msra.mxu0 0.0
    %2908 = vmatprep.subr.mxu0 0.0
    %2909 = vmatpush1.msra.mxu0 0.0
    %2910 = vmatprep.subr.mxu0 0.0
    %2911 = vmatpush1.msra.mxu0 0.0
    %2912 = vmatprep.subr.mxu0 0.0
    %2913 = vmatpush1.msra.mxu0 0.0
    %2914 = vmatprep.subr.mxu0 0.0
    %2915 = vmatpush1.msra.mxu0 0.0
    %2916 = vmatprep.subr.mxu0 0.0
    %2917 = vmatpush1.msra.mxu0 0.0
    %2918 = vmatprep.subr.mxu0 0.0
    %2919 = vmatpush1.msra.mxu0 0.0
    %2920 = vmatprep.subr.mxu0 0.0
    %2921 = vmatpush1.msra.mxu0 0.0
    %2922 = vmatprep.subr.mxu0 0.0
    %2923 = vmatpush1.msra.mxu0 0.0
    %2924 = vmatprep.subr.mxu0 0.0
    %2925 = vmatpush1.msra.mxu0 0.0
    %2926 = vmatprep.subr.mxu0 0.0
    %2927 = vmatpush1.msra.mxu0 0.0
    %2928 = vmatprep.subr.mxu0 0.0
    %2929 = vmatpush1.msra.mxu0 0.0
    %2930 = vmatprep.subr.mxu0 0.0
    %2931 = vmatpush1.msra.mxu0 0.0
    %2932 = vmatprep.subr.mxu0 0.0
    %2933 = vmatpush1.msra.mxu0 0.0
    %2934 = vmatprep.subr.mxu0 0.0
    %2935 = vmatpush1.msra.mxu0 0.0
    %2936 = vmatprep.subr.mxu0 0.0
    %2937 = vmatpush1.msra.mxu0 0.0
    %2938 = vmatprep.subr.mxu0 0.0
    %2939 = vmatpush1.msra.mxu0 0.0
    %2940 = vmatprep.mubr.f32.mxu0 0.0
    %2941 = vmatmul.mubr.f32.gmra.mrb[0].mxu0 %v2874
    %v2942 = vpop.f32.mrb[0].mxu0
    %v2943 = vadd.f32 %v2872, %v2942
    %v2944 = vpop.f32.mrb[0].mxu0
    %2945 = vdwg.mxu0
    %v2946 = vxor.u32 %v2943, 2147483648
    %v2947 = vmul.f32 %v2946, 1.442695
    %v2948 = vpow.pop %v2947
    %v2949 = vadd.f32 %v2948, 1.0
    %v2950 = vrcp.pop %v2949
    %v2951 = vmul.f32 1.0, %v2950
    %v2952 = vmul.f32 %v2951, %v2360
    %v2953 = vsub.f32 %v2952, %v2361
    %v2954 = vmul.f32 %v2953, %v2862
    %2956 = vrot.lane.b32.xlu0 %v2953, 64
    %v2957 = vpop.permute.xlu0 %2956
    %v2959 = vmul.f32 %v2953, %v2957
    %2961 = vrot.lane.b32.xlu0 %v2959, 32
    %v2962 = vpop.permute.xlu0 %2961
    %v2964 = vadd.f32 %v2954, %v2962
    %v2965 = vtanh.pop %v2964
    %2967 = vrot.lane.b32.xlu0 %v2965, 64
    %v2968 = vpop.permute.xlu0 %2967
    %v2970 = vmul.f32 %v2953, %v2968
    %v2971 = vrot.slane %v2562, 7
    %v2973 = vrot.slane %v2664, 6
    %v2975 = vrot.slane %v2766, 5
    %v2977 = vrot.slane %v2868, 4
    %v2980 = vrot.slane %v2970, 3
    %vm2982 = vcmask 1040384
    %v2983 = vsel %vm2982, %v2459, %v2971
    %v2984 = vsel %vm1025, %v2983, %v2973
    %vm2985 = vcmask 1042432
    %v2986 = vsel %vm2985, %v2984, %v2975
    %v2987 = vsel %vm1138, %v2986, %v2977
    %vm2988 = vcmask 1044480
    %v2989 = vsel %vm2988, %v2987, %v2980
    %v2991 = vlaneseq
    %v2992 = vshrl.u32 %v2991, 7
    %v2993 = vsub.s32 0, %v2992
    %v2994 = vrot.slane %v133, %v2993
    %2997 = vrot.lane.b32.xlu0 %v2989, 32
    %v2998 = vpop.permute.xlu0 %2997
    %v2999 = vsel %vm2362, %v2998, 0
    %3001 = vmatprep.subr.mxu0 0.0
    %3002 = vmatpush1.msra.mxu0 %v129
    %3003 = vmatprep.subr.mxu0 0.0
    %3004 = vmatpush1.msra.mxu0 %v130
    %3005 = vmatprep.subr.mxu0 0.0
    %3006 = vmatpush1.msra.mxu0 %v131
    %3007 = vmatprep.subr.mxu0 0.0
    %3008 = vmatpush1.msra.mxu0 %v132
    %3009 = vmatprep.subr.mxu0 0.0
    %3010 = vmatpush1.msra.mxu0 0.0
    %3011 = vmatprep.subr.mxu0 0.0
    %3012 = vmatpush1.msra.mxu0 0.0
    %3013 = vmatprep.subr.mxu0 0.0
    %3014 = vmatpush1.msra.mxu0 0.0
    %3015 = vmatprep.subr.mxu0 0.0
    %3016 = vmatpush1.msra.mxu0 0.0
    %3017 = vmatprep.subr.mxu0 0.0
    %3018 = vmatpush1.msra.mxu0 0.0
    %3019 = vmatprep.subr.mxu0 0.0
    %3020 = vmatpush1.msra.mxu0 0.0
    %3021 = vmatprep.subr.mxu0 0.0
    %3022 = vmatpush1.msra.mxu0 0.0
    %3023 = vmatprep.subr.mxu0 0.0
    %3024 = vmatpush1.msra.mxu0 0.0
    %3025 = vmatprep.subr.mxu0 0.0
    %3026 = vmatpush1.msra.mxu0 0.0
    %3027 = vmatprep.subr.mxu0 0.0
    %3028 = vmatpush1.msra.mxu0 0.0
    %3029 = vmatprep.subr.mxu0 0.0
    %3030 = vmatpush1.msra.mxu0 0.0
    %3031 = vmatprep.subr.mxu0 0.0
    %3032 = vmatpush1.msra.mxu0 0.0
    %3033 = vmatprep.subr.mxu0 0.0
    %3034 = vmatpush1.msra.mxu0 0.0
    %3035 = vmatprep.subr.mxu0 0.0
    %3036 = vmatpush1.msra.mxu0 0.0
    %3037 = vmatprep.subr.mxu0 0.0
    %3038 = vmatpush1.msra.mxu0 0.0
    %3039 = vmatprep.subr.mxu0 0.0
    %3040 = vmatpush1.msra.mxu0 0.0
    %3041 = vmatprep.subr.mxu0 0.0
    %3042 = vmatpush1.msra.mxu0 0.0
    %3043 = vmatprep.subr.mxu0 0.0
    %3044 = vmatpush1.msra.mxu0 0.0
    %3045 = vmatprep.subr.mxu0 0.0
    %3046 = vmatpush1.msra.mxu0 0.0
    %3047 = vmatprep.subr.mxu0 0.0
    %3048 = vmatpush1.msra.mxu0 0.0
    %3049 = vmatprep.subr.mxu0 0.0
    %3050 = vmatpush1.msra.mxu0 0.0
    %3051 = vmatprep.subr.mxu0 0.0
    %3052 = vmatpush1.msra.mxu0 0.0
    %3053 = vmatprep.subr.mxu0 0.0
    %3054 = vmatpush1.msra.mxu0 0.0
    %3055 = vmatprep.subr.mxu0 0.0
    %3056 = vmatpush1.msra.mxu0 0.0
    %3057 = vmatprep.subr.mxu0 0.0
    %3058 = vmatpush1.msra.mxu0 0.0
    %3059 = vmatprep.subr.mxu0 0.0
    %3060 = vmatpush1.msra.mxu0 0.0
    %3061 = vmatprep.subr.mxu0 0.0
    %3062 = vmatpush1.msra.mxu0 0.0
    %3063 = vmatprep.subr.mxu0 0.0
    %3064 = vmatpush1.msra.mxu0 0.0
    %3065 = vmatprep.mubr.f32.mxu0 0.0
    %3066 = vmatmul.mubr.f32.gmra.mrb[0].mxu0 %v2999
    %v3067 = vpop.f32.mrb[0].mxu0
    %v3068 = vadd.f32 %v2994, %v3067
    %v3069 = vpop.f32.mrb[0].mxu0
    %3070 = vdwg.mxu0
    %v3071 = vsel %vm197, %v3068, -inf
    %3072 = vmax.xlane.f32.xlu0 %v3071
    %v3073 = vpop.xlane.xlu0 %3072
    %v3074 = vsub.f32 %v3068, %v3073
    %v3075 = vmul.f32 %v3074, 1.442695
    %v3076 = vpow.pop %v3075
    %v3077 = vsel %vm197, %v3076, 0.0
    %3078 = vadd.xlane.f32.xlu0 %v3077
    %v3079 = vpop.xlane.xlu0 %3078
    %v3080 = vlog2.pop %v3079
    %v3081 = vmul.f32 %v3080, 0.6931472
    %v3082 = vadd.f32 %v3073, %v3081
    %v3083 = vsub.f32 %v3068, %v3082
    %3084 = vst [vmem:[#allocation11] sm:$0x3f] %v3083
    // Predicated region
    $region70: #{lstm_tagger_forward.1} parent=1 // pred_check
      _
    $region71: #{lstm_tagger_forward.1} parent=1 // pred_check_branch
      %3086 = sbr.rel (0) target = $region73
    $region72: #{lstm_tagger_forward.1} parent=1 // pred_region
      %s3088 = ssub.s32 128, 128
      %3089 = vsyncadd [#allocation4], %s3088
      %s3091 = sshll.u32 [#allocation11], 4
      %s3092 = int_to_ptr.vmem [resolvable:$true] %s3091
      %3094 = dma.vmem_to_hbm [thread:$0]  %s3092, 128, %s12, [#allocation4]
    $region73: #{lstm_tagger_forward.1} parent=1 // pred_fallthru
      _
    // Predicated region
    $region74: #{lstm_tagger_forward.1} parent=1 // pred_check
      _
    $region75: #{lstm_tagger_forward.1} parent=1 // pred_check_branch
      %3096 = sbr.rel (0) target = $region77
    $region76: #{lstm_tagger_forward.1} parent=1 // pred_region
      %3097 = dma.done [#allocation4], 128
    $region77: #{lstm_tagger_forward.1} parent=1 // pred_fallthru
      _
    %3098 = vsyncpa [#allocation3], 1
    %3099 = vsyncpa [#allocation6], 1
    %3100 = vsyncpa [#allocation9], 1
    %3101 = vsyncpa [#allocation4], 1

</llo_original>
